<compile_context>
chip_gen: v5e
topology: v5e:2x2
jax: 0.10.0
libtpu: 0.0.40
codegen_flags: <defaults>
</compile_context>

<pallas_src>
import math

import jax
import jax.numpy as jnp
import numpy as np
from jax.experimental import pallas as pl
from jax.experimental.pallas import tpu as pltpu

B = 8            # true batch size per forward pass (BatchNorm statistics)
D_IN = 640       # input feature dim
D_H = 128        # hidden dim
D_Z = 10         # latent dim
D_PAD = 128      # lane-padded latent dim
BN_EPS = 1e-5    # nn.BatchNorm1d default eps
DELTA = 1e-8     # delta used in the PyTorch module


# -----------------------------------------------------------------------------
# Pallas kernel: one independent VAE forward (batch of 8) per grid point.
# -----------------------------------------------------------------------------
def vae_kernel(
    x_ref, eps_ref,
    # encoder
    ew1, eb1, g0, be0,
    ew2, eb2, g1, be1,
    ew3, eb3, g2, be2,
    ew4, eb4, g3, be3,
    wmv, bmv,                      # fused mean|logvar head (lane-padded)
    # decoder
    dw1, db1,                      # dw1 zero-padded (10 -> 128 rows)
    dw2, db2, g4, be4,
    dw3, db3, g5, be5,
    dw4, db4, g6, be6,
    dw5, db5,
    # outputs
    stats_ref, z_ref, y_ref,
):
    x = x_ref[...]                  # (B, 640) f32
    eps = eps_ref[...]              # (B, 128) f32, lanes >= D_Z are zero

    def lin(h, w_r, b_r):
        # bf16 MXU matmul, f32 accumulation, f32 bias add.
        return jnp.dot(h.astype(jnp.bfloat16), w_r[...],
                       preferred_element_type=jnp.float32) + b_r[...]

    def bn_relu(h, g_r, b_r):
        # Training-mode BatchNorm1d (biased variance), one-pass stats folded
        # into a single scale/shift, all f32.
        s1 = jnp.sum(h, axis=0, keepdims=True)
        s2 = jnp.sum(h * h, axis=0, keepdims=True)
        mu = s1 * (1.0 / B)
        var = s2 * (1.0 / B) - mu * mu
        scale = g_r[...] * jax.lax.rsqrt(var + BN_EPS)
        shift = b_r[...] - mu * scale
        return jnp.maximum(h * scale + shift, 0.0)

    # ---- encoder ----
    h = bn_relu(lin(x, ew1, eb1), g0, be0)
    h = bn_relu(lin(h, ew2, eb2), g1, be1)
    h = bn_relu(lin(h, ew3, eb3), g2, be2)
    h = bn_relu(lin(h, ew4, eb4), g3, be3)

    # ---- fused mean / logvar head: one (8,128) x (128,256) matmul ----
    hm = lin(h, wmv, bmv)           # (B, 256) f32
    mean_p = hm[:, :D_PAD]          # lanes 0..9 real, rest exactly 0
    logv_p = hm[:, D_PAD:]          # lanes 0..9 real, rest exactly 0

    lane = jax.lax.broadcasted_iota(jnp.int32, (B, D_PAD), 1)
    zmask = lane < D_Z

    # ---- KL term (only the D_Z real lanes contribute) ----
    kl_terms = 1.0 + logv_p - mean_p * mean_p - jnp.exp(logv_p + DELTA)
    kl = 0.5 * jnp.sum(jnp.where(zmask, kl_terms, 0.0))

    # ---- reparameterization (padded lanes stay exactly zero) ----
    z_p = mean_p + eps * jnp.exp(0.5 * logv_p + DELTA)
    z_p = jnp.where(zmask, z_p, 0.0)

    # ---- decoder ----
    y = jnp.maximum(lin(z_p, dw1, db1), 0.0)   # padded rows of dw1 are zero
    y = bn_relu(lin(y, dw2, db2), g4, be4)
    y = bn_relu(lin(y, dw3, db3), g5, be5)
    y = bn_relu(lin(y, dw4, db4), g6, be6)
    y = lin(y, dw5, db5)

    # ---- losses ----
    rec = jnp.mean((y - x) ** 2)
    loss = rec - kl

    # ---- lane-dense outputs ----
    y_ref[...] = y
    z_ref[...] = z_p

    row = jax.lax.broadcasted_iota(jnp.int32, (8, D_PAD), 0)
    col = jax.lax.broadcasted_iota(jnp.int32, (8, D_PAD), 1)
    stats = jnp.where((row == 0) & (col == 0), loss,
             jnp.where((row == 0) & (col == 1), kl,
              jnp.where((row == 0) & (col == 2), rec, 0.0)))
    stats_ref[...] = stats.astype(jnp.float32)


# -----------------------------------------------------------------------------
# Parameter init (deterministic, PyTorch-Linear-style uniform), f32, (in,out).
# -----------------------------------------------------------------------------
def _linear_params(key, fan_in, fan_out):
    bound = 1.0 / math.sqrt(fan_in)
    kw, kb = jax.random.split(key)
    w = jax.random.uniform(kw, (fan_in, fan_out), jnp.float32, -bound, bound)
    b = jax.random.uniform(kb, (1, fan_out), jnp.float32, -bound, bound)
    return w, b


def _bn_params():
    return jnp.ones((1, D_H), jnp.float32), jnp.zeros((1, D_H), jnp.float32)


def init_params(key):
    keys = jax.random.split(key, 11)
    ew1, eb1 = _linear_params(keys[0], D_IN, D_H)
    ew2, eb2 = _linear_params(keys[1], D_H, D_H)
    ew3, eb3 = _linear_params(keys[2], D_H, D_H)
    ew4, eb4 = _linear_params(keys[3], D_H, D_H)
    wm, bm = _linear_params(keys[4], D_H, D_Z)
    wv, bv = _linear_params(keys[5], D_H, D_Z)
    dw1, db1 = _linear_params(keys[6], D_Z, D_H)
    dw2, db2 = _linear_params(keys[7], D_H, D_H)
    dw3, db3 = _linear_params(keys[8], D_H, D_H)
    dw4, db4 = _linear_params(keys[9], D_H, D_H)
    dw5, db5 = _linear_params(keys[10], D_H, D_IN)
    bns = [_bn_params() for _ in range(7)]
    (g0, be0), (g1, be1), (g2, be2), (g3, be3), (g4, be4), (g5, be5), (g6, be6) = bns
    return (
        ew1, eb1, g0, be0, ew2, eb2, g1, be1, ew3, eb3, g2, be2, ew4, eb4, g3, be3,
        wm, bm, wv, bv, dw1, db1, dw2, db2, g4, be4, dw3, db3, g5, be5,
        dw4, db4, g6, be6, dw5, db5,
    )


# -----------------------------------------------------------------------------
# Kernel-ready parameters: bf16 weights, fused/padded head, padded dfc1.
# -----------------------------------------------------------------------------
def prepare_kernel_params(p):
    (ew1, eb1, g0, be0, ew2, eb2, g1, be1, ew3, eb3, g2, be2, ew4, eb4, g3, be3,
     wm, bm, wv, bv, dw1, db1, dw2, db2, g4, be4, dw3, db3, g5, be5,
     dw4, db4, g6, be6, dw5, db5) = p

    def w16(w):
        return w.astype(jnp.bfloat16)

    # fused, lane-padded mean|logvar head: cols [0:10]=mean, [128:138]=logvar
    wmv = jnp.zeros((D_H, 2 * D_PAD), jnp.float32)
    wmv = wmv.at[:, :D_Z].set(wm).at[:, D_PAD:D_PAD + D_Z].set(wv)
    bmv = jnp.zeros((1, 2 * D_PAD), jnp.float32)
    bmv = bmv.at[:, :D_Z].set(bm).at[:, D_PAD:D_PAD + D_Z].set(bv)

    # decoder input weight, zero-padded (10,128) -> (128,128)
    dw1p = jnp.zeros((D_PAD, D_H), jnp.float32).at[:D_Z, :].set(dw1)

    return (
        w16(ew1), eb1, g0, be0,
        w16(ew2), eb2, g1, be1,
        w16(ew3), eb3, g2, be2,
        w16(ew4), eb4, g3, be3,
        w16(wmv), bmv,
        w16(dw1p), db1,
        w16(dw2), db2, g4, be4,
        w16(dw3), db3, g5, be5,
        w16(dw4), db4, g6, be6,
        w16(dw5), db5,
    )


# -----------------------------------------------------------------------------
# Wrapper: x (N, B, 640), epsilon (N, B, 10) -> per-chunk loss/KL/rec/z/y.
# -----------------------------------------------------------------------------
@jax.jit
def vae_forward(x, epsilon, params):
    n_chunks = x.shape[0]
    kparams = prepare_kernel_params(params)

    eps_pad = jnp.pad(epsilon, ((0, 0), (0, 0), (0, D_PAD - D_Z)))

    chunk_map = lambda n: (n, 0, 0)
    in_specs = [
        pl.BlockSpec((None, B, D_IN), chunk_map),    # x (pipelined)
        pl.BlockSpec((None, B, D_PAD), chunk_map),   # eps (pipelined)
    ] + [
        # weights / biases / BN params: constant block index -> resident
        pl.BlockSpec(p.shape, lambda n: (0, 0)) for p in kparams
    ]
    out_specs = (
        pl.BlockSpec((None, 8, D_PAD), chunk_map),   # packed scalar stats
        pl.BlockSpec((None, B, D_PAD), chunk_map),   # z (lane-padded)
        pl.BlockSpec((None, B, D_IN), chunk_map),    # y
    )
    out_shape = (
        jax.ShapeDtypeStruct((n_chunks, 8, D_PAD), jnp.float32),
        jax.ShapeDtypeStruct((n_chunks, B, D_PAD), jnp.float32),
        jax.ShapeDtypeStruct((n_chunks, B, D_IN), jnp.float32),
    )

    # advisory cost estimate for XLA's scheduler
    mm_terms = (D_IN * D_H + 3 * D_H * D_H + D_H * 2 * D_PAD
                + D_PAD * D_H + 3 * D_H * D_H + D_H * D_IN)
    flops = int(2 * B * mm_terms * n_chunks)
    transcendentals = int((2 * B * D_PAD + 7 * D_H) * n_chunks)
    w_bytes = sum(int(np.prod(p.shape)) * p.dtype.itemsize for p in kparams)
    io_bytes = int(n_chunks * (B * D_IN * 4 * 2 + B * D_PAD * 4 * 2 + 8 * D_PAD * 4))
    cost = pl.CostEstimate(flops=flops, transcendentals=transcendentals,
                           bytes_accessed=w_bytes + io_bytes)

    f = pl.pallas_call(
        vae_kernel,
        grid=(n_chunks,),
        in_specs=in_specs,
        out_specs=out_specs,
        out_shape=out_shape,
        compiler_params=pltpu.CompilerParams(
            dimension_semantics=("parallel",)),
        cost_estimate=cost,
    )
    stats, z_pad, y = f(x, eps_pad, *kparams)

    loss = stats[:, 0, 0]
    kl = stats[:, 0, 1]
    rec = stats[:, 0, 2]
    z = z_pad[..., :D_Z]
    return loss, (kl, rec), z, y


# -----------------------------------------------------------------------------
# Pure-JAX reference (mirrors kernel numerics: bf16 matmuls, f32 elsewhere).
# -----------------------------------------------------------------------------
def vae_reference_chunk(x, eps, params):
    (ew1, eb1, g0, be0, ew2, eb2, g1, be1, ew3, eb3, g2, be2, ew4, eb4, g3, be3,
     wm, bm, wv, bv, dw1, db1, dw2, db2, g4, be4, dw3, db3, g5, be5,
     dw4, db4, g6, be6, dw5, db5) = params

    def lin(h, w, b):
        return jnp.dot(h.astype(jnp.bfloat16), w.astype(jnp.bfloat16),
                       preferred_element_type=jnp.float32) + b

    def bn_relu(h, g, b):
        mu = jnp.mean(h, axis=0, keepdims=True)
        var = jnp.mean(h * h, axis=0, keepdims=True) - mu * mu
        scale = g * jax.lax.rsqrt(var + BN_EPS)
        return jnp.maximum(h * scale + (b - mu * scale), 0.0)

    h = bn_relu(lin(x, ew1, eb1), g0, be0)
    h = bn_relu(lin(h, ew2, eb2), g1, be1)
    h = bn_relu(lin(h, ew3, eb3), g2, be2)
    h = bn_relu(lin(h, ew4, eb4), g3, be3)
    mean = lin(h, wm, bm)
    logv = lin(h, wv, bv)
    kl = 0.5 * jnp.sum(1.0 + logv - mean * mean - jnp.exp(logv + DELTA))
    z = mean + eps * jnp.exp(0.5 * logv + DELTA)
    y = jnp.maximum(lin(z, dw1, db1), 0.0)
    y = bn_relu(lin(y, dw2, db2), g4, be4)
    y = bn_relu(lin(y, dw3, db3), g5, be5)
    y = bn_relu(lin(y, dw4, db4), g6, be6)
    y = lin(y, dw5, db5)
    rec = jnp.mean((y - x) ** 2)
    return rec - kl, kl, rec, z, y


if __name__ == "__main__":
    key = jax.random.PRNGKey(0)
    k_x, k_eps, k_par = jax.random.split(key, 3)

    N_CHUNKS = 4  # 4 independent forward passes (batch 8 each) per kernel call
    x = jax.random.normal(k_x, (N_CHUNKS, B, D_IN), jnp.float32)
    # epsilon ~ N(0,1): randomness is sampled outside the kernel and passed in
    epsilon = jax.random.normal(k_eps, (N_CHUNKS, B, D_Z), jnp.float32)
    params = init_params(k_par)

    loss, (kl, rec), z, y = vae_forward(x, epsilon, params)
    jax.block_until_ready((loss, kl, rec, z, y))

    # sanity check against the pure-JAX reference (vmapped over chunks)
    loss_r, kl_r, rec_r, z_r, y_r = jax.vmap(
        lambda xx, ee: vae_reference_chunk(xx, ee, params))(x, epsilon)

    np.testing.assert_allclose(np.asarray(loss), np.asarray(loss_r), rtol=2e-2, atol=2e-2)
    np.testing.assert_allclose(np.asarray(kl), np.asarray(kl_r), rtol=2e-2, atol=2e-2)
    np.testing.assert_allclose(np.asarray(rec), np.asarray(rec_r), rtol=2e-2, atol=2e-2)
    np.testing.assert_allclose(np.asarray(z), np.asarray(z_r), rtol=2e-2, atol=2e-2)
    np.testing.assert_allclose(np.asarray(y), np.asarray(y_r), rtol=2e-2, atol=2e-2)

    print("KERNEL_OK")
</pallas_src>

<mosaic_0001>
module attributes {stable_mosaic.version = 11 : i64} {
  func.func @vae_kernel(%arg0: i32, %arg1: memref<1x8x640xf32, #tpu.memory_space<vmem>>, %arg2: memref<1x8x128xf32, #tpu.memory_space<vmem>>, %arg3: memref<640x128xbf16, #tpu.memory_space<vmem>>, %arg4: memref<1x128xf32, #tpu.memory_space<vmem>>, %arg5: memref<1x128xf32, #tpu.memory_space<vmem>>, %arg6: memref<1x128xf32, #tpu.memory_space<vmem>>, %arg7: memref<128x128xbf16, #tpu.memory_space<vmem>>, %arg8: memref<1x128xf32, #tpu.memory_space<vmem>>, %arg9: memref<1x128xf32, #tpu.memory_space<vmem>>, %arg10: memref<1x128xf32, #tpu.memory_space<vmem>>, %arg11: memref<128x128xbf16, #tpu.memory_space<vmem>>, %arg12: memref<1x128xf32, #tpu.memory_space<vmem>>, %arg13: memref<1x128xf32, #tpu.memory_space<vmem>>, %arg14: memref<1x128xf32, #tpu.memory_space<vmem>>, %arg15: memref<128x128xbf16, #tpu.memory_space<vmem>>, %arg16: memref<1x128xf32, #tpu.memory_space<vmem>>, %arg17: memref<1x128xf32, #tpu.memory_space<vmem>>, %arg18: memref<1x128xf32, #tpu.memory_space<vmem>>, %arg19: memref<128x256xbf16, #tpu.memory_space<vmem>>, %arg20: memref<1x256xf32, #tpu.memory_space<vmem>>, %arg21: memref<128x128xbf16, #tpu.memory_space<vmem>>, %arg22: memref<1x128xf32, #tpu.memory_space<vmem>>, %arg23: memref<128x128xbf16, #tpu.memory_space<vmem>>, %arg24: memref<1x128xf32, #tpu.memory_space<vmem>>, %arg25: memref<1x128xf32, #tpu.memory_space<vmem>>, %arg26: memref<1x128xf32, #tpu.memory_space<vmem>>, %arg27: memref<128x128xbf16, #tpu.memory_space<vmem>>, %arg28: memref<1x128xf32, #tpu.memory_space<vmem>>, %arg29: memref<1x128xf32, #tpu.memory_space<vmem>>, %arg30: memref<1x128xf32, #tpu.memory_space<vmem>>, %arg31: memref<128x128xbf16, #tpu.memory_space<vmem>>, %arg32: memref<1x128xf32, #tpu.memory_space<vmem>>, %arg33: memref<1x128xf32, #tpu.memory_space<vmem>>, %arg34: memref<1x128xf32, #tpu.memory_space<vmem>>, %arg35: memref<128x640xbf16, #tpu.memory_space<vmem>>, %arg36: memref<1x640xf32, #tpu.memory_space<vmem>>, %arg37: memref<1x8x128xf32, #tpu.memory_space<vmem>>, %arg38: memref<1x8x128xf32, #tpu.memory_space<vmem>>, %arg39: memref<1x8x640xf32, #tpu.memory_space<vmem>>) attributes {dimension_semantics = [#tpu.dimension_semantics<parallel>], iteration_bounds = array<i64: 4>, scalar_prefetch = 0 : i64, scratch_operands = 0 : i64, tpu.core_type = #tpu.core_type<tc>, window_params = [{transform_indices = @transform_0, window_bounds = array<i64: 1, 8, 640>}, {transform_indices = @transform_1, window_bounds = array<i64: 1, 8, 128>}, {pipeline_mode = #tpu.pipeline_mode<synchronous>, transform_indices = @transform_2, window_bounds = array<i64: 640, 128>}, {pipeline_mode = #tpu.pipeline_mode<synchronous>, transform_indices = @transform_3, window_bounds = array<i64: 1, 128>}, {pipeline_mode = #tpu.pipeline_mode<synchronous>, transform_indices = @transform_4, window_bounds = array<i64: 1, 128>}, {pipeline_mode = #tpu.pipeline_mode<synchronous>, transform_indices = @transform_5, window_bounds = array<i64: 1, 128>}, {pipeline_mode = #tpu.pipeline_mode<synchronous>, transform_indices = @transform_6, window_bounds = array<i64: 128, 128>}, {pipeline_mode = #tpu.pipeline_mode<synchronous>, transform_indices = @transform_7, window_bounds = array<i64: 1, 128>}, {pipeline_mode = #tpu.pipeline_mode<synchronous>, transform_indices = @transform_8, window_bounds = array<i64: 1, 128>}, {pipeline_mode = #tpu.pipeline_mode<synchronous>, transform_indices = @transform_9, window_bounds = array<i64: 1, 128>}, {pipeline_mode = #tpu.pipeline_mode<synchronous>, transform_indices = @transform_10, window_bounds = array<i64: 128, 128>}, {pipeline_mode = #tpu.pipeline_mode<synchronous>, transform_indices = @transform_11, window_bounds = array<i64: 1, 128>}, {pipeline_mode = #tpu.pipeline_mode<synchronous>, transform_indices = @transform_12, window_bounds = array<i64: 1, 128>}, {pipeline_mode = #tpu.pipeline_mode<synchronous>, transform_indices = @transform_13, window_bounds = array<i64: 1, 128>}, {pipeline_mode = #tpu.pipeline_mode<synchronous>, transform_indices = @transform_14, window_bounds = array<i64: 128, 128>}, {pipeline_mode = #tpu.pipeline_mode<synchronous>, transform_indices = @transform_15, window_bounds = array<i64: 1, 128>}, {pipeline_mode = #tpu.pipeline_mode<synchronous>, transform_indices = @transform_16, window_bounds = array<i64: 1, 128>}, {pipeline_mode = #tpu.pipeline_mode<synchronous>, transform_indices = @transform_17, window_bounds = array<i64: 1, 128>}, {pipeline_mode = #tpu.pipeline_mode<synchronous>, transform_indices = @transform_18, window_bounds = array<i64: 128, 256>}, {pipeline_mode = #tpu.pipeline_mode<synchronous>, transform_indices = @transform_19, window_bounds = array<i64: 1, 256>}, {pipeline_mode = #tpu.pipeline_mode<synchronous>, transform_indices = @transform_20, window_bounds = array<i64: 128, 128>}, {pipeline_mode = #tpu.pipeline_mode<synchronous>, transform_indices = @transform_21, window_bounds = array<i64: 1, 128>}, {pipeline_mode = #tpu.pipeline_mode<synchronous>, transform_indices = @transform_22, window_bounds = array<i64: 128, 128>}, {pipeline_mode = #tpu.pipeline_mode<synchronous>, transform_indices = @transform_23, window_bounds = array<i64: 1, 128>}, {pipeline_mode = #tpu.pipeline_mode<synchronous>, transform_indices = @transform_24, window_bounds = array<i64: 1, 128>}, {pipeline_mode = #tpu.pipeline_mode<synchronous>, transform_indices = @transform_25, window_bounds = array<i64: 1, 128>}, {pipeline_mode = #tpu.pipeline_mode<synchronous>, transform_indices = @transform_26, window_bounds = array<i64: 128, 128>}, {pipeline_mode = #tpu.pipeline_mode<synchronous>, transform_indices = @transform_27, window_bounds = array<i64: 1, 128>}, {pipeline_mode = #tpu.pipeline_mode<synchronous>, transform_indices = @transform_28, window_bounds = array<i64: 1, 128>}, {pipeline_mode = #tpu.pipeline_mode<synchronous>, transform_indices = @transform_29, window_bounds = array<i64: 1, 128>}, {pipeline_mode = #tpu.pipeline_mode<synchronous>, transform_indices = @transform_30, window_bounds = array<i64: 128, 128>}, {pipeline_mode = #tpu.pipeline_mode<synchronous>, transform_indices = @transform_31, window_bounds = array<i64: 1, 128>}, {pipeline_mode = #tpu.pipeline_mode<synchronous>, transform_indices = @transform_32, window_bounds = array<i64: 1, 128>}, {pipeline_mode = #tpu.pipeline_mode<synchronous>, transform_indices = @transform_33, window_bounds = array<i64: 1, 128>}, {pipeline_mode = #tpu.pipeline_mode<synchronous>, transform_indices = @transform_34, window_bounds = array<i64: 128, 640>}, {pipeline_mode = #tpu.pipeline_mode<synchronous>, transform_indices = @transform_35, window_bounds = array<i64: 1, 640>}, {transform_indices = @transform_36, window_bounds = array<i64: 1, 8, 128>}, {transform_indices = @transform_37, window_bounds = array<i64: 1, 8, 128>}, {transform_indices = @transform_38, window_bounds = array<i64: 1, 8, 640>}]} {
    %c0 = arith.constant 0 : index
    %c0_0 = arith.constant 0 : index
    %c0_1 = arith.constant 0 : index
    %0 = vector.load %arg1[%c0, %c0_0, %c0_1] : memref<1x8x640xf32, #tpu.memory_space<vmem>>, vector<1x8x640xf32>
    %1 = vector.shape_cast %0 : vector<1x8x640xf32> to vector<8x640xf32>
    %c0_2 = arith.constant 0 : index
    %c0_3 = arith.constant 0 : index
    %c0_4 = arith.constant 0 : index
    %2 = vector.load %arg2[%c0_2, %c0_3, %c0_4] : memref<1x8x128xf32, #tpu.memory_space<vmem>>, vector<1x8x128xf32>
    %3 = vector.shape_cast %2 : vector<1x8x128xf32> to vector<8x128xf32>
    %4 = arith.truncf %1 : vector<8x640xf32> to vector<8x640xbf16>
    %c0_5 = arith.constant 0 : index
    %c0_6 = arith.constant 0 : index
    %5 = vector.load %arg3[%c0_5, %c0_6] : memref<640x128xbf16, #tpu.memory_space<vmem>>, vector<640x128xbf16>
    %cst = arith.constant dense<0.000000e+00> : vector<8x128xf32>
    %6 = tpu.matmul %4, %5, %cst {dimension_numbers = #tpu.dot_dimension_numbers<[1], [0], [0], [1], [0, 0, 1, 1], [], []>} : vector<8x640xbf16>, vector<640x128xbf16>, vector<8x128xf32> -> vector<8x128xf32>
    %c0_7 = arith.constant 0 : index
    %c0_8 = arith.constant 0 : index
    %7 = vector.load %arg4[%c0_7, %c0_8] : memref<1x128xf32, #tpu.memory_space<vmem>>, vector<1x128xf32>
    %8 = vector.broadcast %7 : vector<1x128xf32> to vector<8x128xf32>
    %9 = arith.addf %6, %8 : vector<8x128xf32>
    %cst_9 = arith.constant dense<0.000000e+00> : vector<128xf32>
    %10 = vector.multi_reduction <add>, %9, %cst_9 [0] : vector<8x128xf32> to vector<128xf32>
    %11 = vector.shape_cast %10 : vector<128xf32> to vector<1x128xf32>
    %12 = arith.mulf %9, %9 : vector<8x128xf32>
    %cst_10 = arith.constant dense<0.000000e+00> : vector<128xf32>
    %13 = vector.multi_reduction <add>, %12, %cst_10 [0] : vector<8x128xf32> to vector<128xf32>
    %14 = vector.shape_cast %13 : vector<128xf32> to vector<1x128xf32>
    %cst_11 = arith.constant 1.250000e-01 : f32
    %15 = vector.broadcast %cst_11 : f32 to vector<1x128xf32>
    %16 = arith.mulf %11, %15 : vector<1x128xf32>
    %cst_12 = arith.constant 1.250000e-01 : f32
    %17 = vector.broadcast %cst_12 : f32 to vector<1x128xf32>
    %18 = arith.mulf %14, %17 : vector<1x128xf32>
    %19 = arith.mulf %16, %16 : vector<1x128xf32>
    %20 = arith.subf %18, %19 : vector<1x128xf32>
    %c0_13 = arith.constant 0 : index
    %c0_14 = arith.constant 0 : index
    %21 = vector.load %arg5[%c0_13, %c0_14] : memref<1x128xf32, #tpu.memory_space<vmem>>, vector<1x128xf32>
    %cst_15 = arith.constant 9.99999974E-6 : f32
    %22 = vector.broadcast %cst_15 : f32 to vector<1x128xf32>
    %23 = arith.addf %20, %22 : vector<1x128xf32>
    %24 = math.rsqrt %23 : vector<1x128xf32>
    %25 = arith.mulf %21, %24 : vector<1x128xf32>
    %c0_16 = arith.constant 0 : index
    %c0_17 = arith.constant 0 : index
    %26 = vector.load %arg6[%c0_16, %c0_17] : memref<1x128xf32, #tpu.memory_space<vmem>>, vector<1x128xf32>
    %27 = arith.mulf %16, %25 : vector<1x128xf32>
    %28 = arith.subf %26, %27 : vector<1x128xf32>
    %29 = vector.broadcast %25 : vector<1x128xf32> to vector<8x128xf32>
    %30 = arith.mulf %9, %29 : vector<8x128xf32>
    %31 = vector.broadcast %28 : vector<1x128xf32> to vector<8x128xf32>
    %32 = arith.addf %30, %31 : vector<8x128xf32>
    %cst_18 = arith.constant 0.000000e+00 : f32
    %33 = vector.broadcast %cst_18 : f32 to vector<8x128xf32>
    %34 = arith.maximumf %32, %33 : vector<8x128xf32>
    %35 = arith.truncf %34 : vector<8x128xf32> to vector<8x128xbf16>
    %c0_19 = arith.constant 0 : index
    %c0_20 = arith.constant 0 : index
    %36 = vector.load %arg7[%c0_19, %c0_20] : memref<128x128xbf16, #tpu.memory_space<vmem>>, vector<128x128xbf16>
    %cst_21 = arith.constant dense<0.000000e+00> : vector<8x128xf32>
    %37 = tpu.matmul %35, %36, %cst_21 {dimension_numbers = #tpu.dot_dimension_numbers<[1], [0], [0], [1], [0, 0, 1, 1], [], []>} : vector<8x128xbf16>, vector<128x128xbf16>, vector<8x128xf32> -> vector<8x128xf32>
    %c0_22 = arith.constant 0 : index
    %c0_23 = arith.constant 0 : index
    %38 = vector.load %arg8[%c0_22, %c0_23] : memref<1x128xf32, #tpu.memory_space<vmem>>, vector<1x128xf32>
    %39 = vector.broadcast %38 : vector<1x128xf32> to vector<8x128xf32>
    %40 = arith.addf %37, %39 : vector<8x128xf32>
    %cst_24 = arith.constant dense<0.000000e+00> : vector<128xf32>
    %41 = vector.multi_reduction <add>, %40, %cst_24 [0] : vector<8x128xf32> to vector<128xf32>
    %42 = vector.shape_cast %41 : vector<128xf32> to vector<1x128xf32>
    %43 = arith.mulf %40, %40 : vector<8x128xf32>
    %cst_25 = arith.constant dense<0.000000e+00> : vector<128xf32>
    %44 = vector.multi_reduction <add>, %43, %cst_25 [0] : vector<8x128xf32> to vector<128xf32>
    %45 = vector.shape_cast %44 : vector<128xf32> to vector<1x128xf32>
    %cst_26 = arith.constant 1.250000e-01 : f32
    %46 = vector.broadcast %cst_26 : f32 to vector<1x128xf32>
    %47 = arith.mulf %42, %46 : vector<1x128xf32>
    %cst_27 = arith.constant 1.250000e-01 : f32
    %48 = vector.broadcast %cst_27 : f32 to vector<1x128xf32>
    %49 = arith.mulf %45, %48 : vector<1x128xf32>
    %50 = arith.mulf %47, %47 : vector<1x128xf32>
    %51 = arith.subf %49, %50 : vector<1x128xf32>
    %c0_28 = arith.constant 0 : index
    %c0_29 = arith.constant 0 : index
    %52 = vector.load %arg9[%c0_28, %c0_29] : memref<1x128xf32, #tpu.memory_space<vmem>>, vector<1x128xf32>
    %cst_30 = arith.constant 9.99999974E-6 : f32
    %53 = vector.broadcast %cst_30 : f32 to vector<1x128xf32>
    %54 = arith.addf %51, %53 : vector<1x128xf32>
    %55 = math.rsqrt %54 : vector<1x128xf32>
    %56 = arith.mulf %52, %55 : vector<1x128xf32>
    %c0_31 = arith.constant 0 : index
    %c0_32 = arith.constant 0 : index
    %57 = vector.load %arg10[%c0_31, %c0_32] : memref<1x128xf32, #tpu.memory_space<vmem>>, vector<1x128xf32>
    %58 = arith.mulf %47, %56 : vector<1x128xf32>
    %59 = arith.subf %57, %58 : vector<1x128xf32>
    %60 = vector.broadcast %56 : vector<1x128xf32> to vector<8x128xf32>
    %61 = arith.mulf %40, %60 : vector<8x128xf32>
    %62 = vector.broadcast %59 : vector<1x128xf32> to vector<8x128xf32>
    %63 = arith.addf %61, %62 : vector<8x128xf32>
    %cst_33 = arith.constant 0.000000e+00 : f32
    %64 = vector.broadcast %cst_33 : f32 to vector<8x128xf32>
    %65 = arith.maximumf %63, %64 : vector<8x128xf32>
    %66 = arith.truncf %65 : vector<8x128xf32> to vector<8x128xbf16>
    %c0_34 = arith.constant 0 : index
    %c0_35 = arith.constant 0 : index
    %67 = vector.load %arg11[%c0_34, %c0_35] : memref<128x128xbf16, #tpu.memory_space<vmem>>, vector<128x128xbf16>
    %cst_36 = arith.constant dense<0.000000e+00> : vector<8x128xf32>
    %68 = tpu.matmul %66, %67, %cst_36 {dimension_numbers = #tpu.dot_dimension_numbers<[1], [0], [0], [1], [0, 0, 1, 1], [], []>} : vector<8x128xbf16>, vector<128x128xbf16>, vector<8x128xf32> -> vector<8x128xf32>
    %c0_37 = arith.constant 0 : index
    %c0_38 = arith.constant 0 : index
    %69 = vector.load %arg12[%c0_37, %c0_38] : memref<1x128xf32, #tpu.memory_space<vmem>>, vector<1x128xf32>
    %70 = vector.broadcast %69 : vector<1x128xf32> to vector<8x128xf32>
    %71 = arith.addf %68, %70 : vector<8x128xf32>
    %cst_39 = arith.constant dense<0.000000e+00> : vector<128xf32>
    %72 = vector.multi_reduction <add>, %71, %cst_39 [0] : vector<8x128xf32> to vector<128xf32>
    %73 = vector.shape_cast %72 : vector<128xf32> to vector<1x128xf32>
    %74 = arith.mulf %71, %71 : vector<8x128xf32>
    %cst_40 = arith.constant dense<0.000000e+00> : vector<128xf32>
    %75 = vector.multi_reduction <add>, %74, %cst_40 [0] : vector<8x128xf32> to vector<128xf32>
    %76 = vector.shape_cast %75 : vector<128xf32> to vector<1x128xf32>
    %cst_41 = arith.constant 1.250000e-01 : f32
    %77 = vector.broadcast %cst_41 : f32 to vector<1x128xf32>
    %78 = arith.mulf %73, %77 : vector<1x128xf32>
    %cst_42 = arith.constant 1.250000e-01 : f32
    %79 = vector.broadcast %cst_42 : f32 to vector<1x128xf32>
    %80 = arith.mulf %76, %79 : vector<1x128xf32>
    %81 = arith.mulf %78, %78 : vector<1x128xf32>
    %82 = arith.subf %80, %81 : vector<1x128xf32>
    %c0_43 = arith.constant 0 : index
    %c0_44 = arith.constant 0 : index
    %83 = vector.load %arg13[%c0_43, %c0_44] : memref<1x128xf32, #tpu.memory_space<vmem>>, vector<1x128xf32>
    %cst_45 = arith.constant 9.99999974E-6 : f32
    %84 = vector.broadcast %cst_45 : f32 to vector<1x128xf32>
    %85 = arith.addf %82, %84 : vector<1x128xf32>
    %86 = math.rsqrt %85 : vector<1x128xf32>
    %87 = arith.mulf %83, %86 : vector<1x128xf32>
    %c0_46 = arith.constant 0 : index
    %c0_47 = arith.constant 0 : index
    %88 = vector.load %arg14[%c0_46, %c0_47] : memref<1x128xf32, #tpu.memory_space<vmem>>, vector<1x128xf32>
    %89 = arith.mulf %78, %87 : vector<1x128xf32>
    %90 = arith.subf %88, %89 : vector<1x128xf32>
    %91 = vector.broadcast %87 : vector<1x128xf32> to vector<8x128xf32>
    %92 = arith.mulf %71, %91 : vector<8x128xf32>
    %93 = vector.broadcast %90 : vector<1x128xf32> to vector<8x128xf32>
    %94 = arith.addf %92, %93 : vector<8x128xf32>
    %cst_48 = arith.constant 0.000000e+00 : f32
    %95 = vector.broadcast %cst_48 : f32 to vector<8x128xf32>
    %96 = arith.maximumf %94, %95 : vector<8x128xf32>
    %97 = arith.truncf %96 : vector<8x128xf32> to vector<8x128xbf16>
    %c0_49 = arith.constant 0 : index
    %c0_50 = arith.constant 0 : index
    %98 = vector.load %arg15[%c0_49, %c0_50] : memref<128x128xbf16, #tpu.memory_space<vmem>>, vector<128x128xbf16>
    %cst_51 = arith.constant dense<0.000000e+00> : vector<8x128xf32>
    %99 = tpu.matmul %97, %98, %cst_51 {dimension_numbers = #tpu.dot_dimension_numbers<[1], [0], [0], [1], [0, 0, 1, 1], [], []>} : vector<8x128xbf16>, vector<128x128xbf16>, vector<8x128xf32> -> vector<8x128xf32>
    %c0_52 = arith.constant 0 : index
    %c0_53 = arith.constant 0 : index
    %100 = vector.load %arg16[%c0_52, %c0_53] : memref<1x128xf32, #tpu.memory_space<vmem>>, vector<1x128xf32>
    %101 = vector.broadcast %100 : vector<1x128xf32> to vector<8x128xf32>
    %102 = arith.addf %99, %101 : vector<8x128xf32>
    %cst_54 = arith.constant dense<0.000000e+00> : vector<128xf32>
    %103 = vector.multi_reduction <add>, %102, %cst_54 [0] : vector<8x128xf32> to vector<128xf32>
    %104 = vector.shape_cast %103 : vector<128xf32> to vector<1x128xf32>
    %105 = arith.mulf %102, %102 : vector<8x128xf32>
    %cst_55 = arith.constant dense<0.000000e+00> : vector<128xf32>
    %106 = vector.multi_reduction <add>, %105, %cst_55 [0] : vector<8x128xf32> to vector<128xf32>
    %107 = vector.shape_cast %106 : vector<128xf32> to vector<1x128xf32>
    %cst_56 = arith.constant 1.250000e-01 : f32
    %108 = vector.broadcast %cst_56 : f32 to vector<1x128xf32>
    %109 = arith.mulf %104, %108 : vector<1x128xf32>
    %cst_57 = arith.constant 1.250000e-01 : f32
    %110 = vector.broadcast %cst_57 : f32 to vector<1x128xf32>
    %111 = arith.mulf %107, %110 : vector<1x128xf32>
    %112 = arith.mulf %109, %109 : vector<1x128xf32>
    %113 = arith.subf %111, %112 : vector<1x128xf32>
    %c0_58 = arith.constant 0 : index
    %c0_59 = arith.constant 0 : index
    %114 = vector.load %arg17[%c0_58, %c0_59] : memref<1x128xf32, #tpu.memory_space<vmem>>, vector<1x128xf32>
    %cst_60 = arith.constant 9.99999974E-6 : f32
    %115 = vector.broadcast %cst_60 : f32 to vector<1x128xf32>
    %116 = arith.addf %113, %115 : vector<1x128xf32>
    %117 = math.rsqrt %116 : vector<1x128xf32>
    %118 = arith.mulf %114, %117 : vector<1x128xf32>
    %c0_61 = arith.constant 0 : index
    %c0_62 = arith.constant 0 : index
    %119 = vector.load %arg18[%c0_61, %c0_62] : memref<1x128xf32, #tpu.memory_space<vmem>>, vector<1x128xf32>
    %120 = arith.mulf %109, %118 : vector<1x128xf32>
    %121 = arith.subf %119, %120 : vector<1x128xf32>
    %122 = vector.broadcast %118 : vector<1x128xf32> to vector<8x128xf32>
    %123 = arith.mulf %102, %122 : vector<8x128xf32>
    %124 = vector.broadcast %121 : vector<1x128xf32> to vector<8x128xf32>
    %125 = arith.addf %123, %124 : vector<8x128xf32>
    %cst_63 = arith.constant 0.000000e+00 : f32
    %126 = vector.broadcast %cst_63 : f32 to vector<8x128xf32>
    %127 = arith.maximumf %125, %126 : vector<8x128xf32>
    %128 = arith.truncf %127 : vector<8x128xf32> to vector<8x128xbf16>
    %c0_64 = arith.constant 0 : index
    %c0_65 = arith.constant 0 : index
    %129 = vector.load %arg19[%c0_64, %c0_65] : memref<128x256xbf16, #tpu.memory_space<vmem>>, vector<128x256xbf16>
    %cst_66 = arith.constant dense<0.000000e+00> : vector<8x256xf32>
    %130 = tpu.matmul %128, %129, %cst_66 {dimension_numbers = #tpu.dot_dimension_numbers<[1], [0], [0], [1], [0, 0, 1, 1], [], []>} : vector<8x128xbf16>, vector<128x256xbf16>, vector<8x256xf32> -> vector<8x256xf32>
    %c0_67 = arith.constant 0 : index
    %c0_68 = arith.constant 0 : index
    %131 = vector.load %arg20[%c0_67, %c0_68] : memref<1x256xf32, #tpu.memory_space<vmem>>, vector<1x256xf32>
    %132 = vector.broadcast %131 : vector<1x256xf32> to vector<8x256xf32>
    %133 = arith.addf %130, %132 : vector<8x256xf32>
    %134 = vector.extract_strided_slice %133 {offsets = [0, 0], sizes = [8, 128], strides = [1, 1]} : vector<8x256xf32> to vector<8x128xf32>
    %135 = vector.extract_strided_slice %133 {offsets = [0, 128], sizes = [8, 128], strides = [1, 1]} : vector<8x256xf32> to vector<8x128xf32>
    %136 = tpu.iota {dimensions = array<i32: 1>} : vector<8x128xi32>
    %c10_i32 = arith.constant 10 : i32
    %137 = vector.broadcast %c10_i32 : i32 to vector<8x128xi32>
    %138 = arith.cmpi slt, %136, %137 : vector<8x128xi32>
    %cst_69 = arith.constant 1.000000e+00 : f32
    %139 = vector.broadcast %cst_69 : f32 to vector<8x128xf32>
    %140 = arith.addf %139, %135 : vector<8x128xf32>
    %141 = arith.mulf %134, %134 : vector<8x128xf32>
    %142 = arith.subf %140, %141 : vector<8x128xf32>
    %cst_70 = arith.constant 9.99999993E-9 : f32
    %143 = vector.broadcast %cst_70 : f32 to vector<8x128xf32>
    %144 = arith.addf %135, %143 : vector<8x128xf32>
    %145 = math.exp %144 : vector<8x128xf32>
    %146 = arith.subf %142, %145 : vector<8x128xf32>
    %cst_71 = arith.constant 0.000000e+00 : f32
    %147 = vector.broadcast %cst_71 : f32 to vector<8x128xf32>
    %148 = arith.select %138, %146, %147 : vector<8x128xi1>, vector<8x128xf32>
    %149 = vector.shape_cast %148 : vector<8x128xf32> to vector<1x8x128xf32>
    %cst_72 = arith.constant dense<0.000000e+00> : vector<1xf32>
    %150 = vector.multi_reduction <add>, %149, %cst_72 [1, 2] : vector<1x8x128xf32> to vector<1xf32>
    %151 = vector.shape_cast %150 : vector<1xf32> to vector<1x1x1xf32>
    %152 = vector.extract %151[0, 0, 0] : f32 from vector<1x1x1xf32>
    %cst_73 = arith.constant 5.000000e-01 : f32
    %153 = arith.mulf %cst_73, %152 : f32
    %cst_74 = arith.constant 5.000000e-01 : f32
    %154 = vector.broadcast %cst_74 : f32 to vector<8x128xf32>
    %155 = arith.mulf %154, %135 : vector<8x128xf32>
    %cst_75 = arith.constant 9.99999993E-9 : f32
    %156 = vector.broadcast %cst_75 : f32 to vector<8x128xf32>
    %157 = arith.addf %155, %156 : vector<8x128xf32>
    %158 = math.exp %157 : vector<8x128xf32>
    %159 = arith.mulf %3, %158 : vector<8x128xf32>
    %160 = arith.addf %134, %159 : vector<8x128xf32>
    %cst_76 = arith.constant 0.000000e+00 : f32
    %161 = vector.broadcast %cst_76 : f32 to vector<8x128xf32>
    %162 = arith.select %138, %160, %161 : vector<8x128xi1>, vector<8x128xf32>
    %163 = arith.truncf %162 : vector<8x128xf32> to vector<8x128xbf16>
    %c0_77 = arith.constant 0 : index
    %c0_78 = arith.constant 0 : index
    %164 = vector.load %arg21[%c0_77, %c0_78] : memref<128x128xbf16, #tpu.memory_space<vmem>>, vector<128x128xbf16>
    %cst_79 = arith.constant dense<0.000000e+00> : vector<8x128xf32>
    %165 = tpu.matmul %163, %164, %cst_79 {dimension_numbers = #tpu.dot_dimension_numbers<[1], [0], [0], [1], [0, 0, 1, 1], [], []>} : vector<8x128xbf16>, vector<128x128xbf16>, vector<8x128xf32> -> vector<8x128xf32>
    %c0_80 = arith.constant 0 : index
    %c0_81 = arith.constant 0 : index
    %166 = vector.load %arg22[%c0_80, %c0_81] : memref<1x128xf32, #tpu.memory_space<vmem>>, vector<1x128xf32>
    %167 = vector.broadcast %166 : vector<1x128xf32> to vector<8x128xf32>
    %168 = arith.addf %165, %167 : vector<8x128xf32>
    %cst_82 = arith.constant 0.000000e+00 : f32
    %169 = vector.broadcast %cst_82 : f32 to vector<8x128xf32>
    %170 = arith.maximumf %168, %169 : vector<8x128xf32>
    %171 = arith.truncf %170 : vector<8x128xf32> to vector<8x128xbf16>
    %c0_83 = arith.constant 0 : index
    %c0_84 = arith.constant 0 : index
    %172 = vector.load %arg23[%c0_83, %c0_84] : memref<128x128xbf16, #tpu.memory_space<vmem>>, vector<128x128xbf16>
    %cst_85 = arith.constant dense<0.000000e+00> : vector<8x128xf32>
    %173 = tpu.matmul %171, %172, %cst_85 {dimension_numbers = #tpu.dot_dimension_numbers<[1], [0], [0], [1], [0, 0, 1, 1], [], []>} : vector<8x128xbf16>, vector<128x128xbf16>, vector<8x128xf32> -> vector<8x128xf32>
    %c0_86 = arith.constant 0 : index
    %c0_87 = arith.constant 0 : index
    %174 = vector.load %arg24[%c0_86, %c0_87] : memref<1x128xf32, #tpu.memory_space<vmem>>, vector<1x128xf32>
    %175 = vector.broadcast %174 : vector<1x128xf32> to vector<8x128xf32>
    %176 = arith.addf %173, %175 : vector<8x128xf32>
    %cst_88 = arith.constant dense<0.000000e+00> : vector<128xf32>
    %177 = vector.multi_reduction <add>, %176, %cst_88 [0] : vector<8x128xf32> to vector<128xf32>
    %178 = vector.shape_cast %177 : vector<128xf32> to vector<1x128xf32>
    %179 = arith.mulf %176, %176 : vector<8x128xf32>
    %cst_89 = arith.constant dense<0.000000e+00> : vector<128xf32>
    %180 = vector.multi_reduction <add>, %179, %cst_89 [0] : vector<8x128xf32> to vector<128xf32>
    %181 = vector.shape_cast %180 : vector<128xf32> to vector<1x128xf32>
    %cst_90 = arith.constant 1.250000e-01 : f32
    %182 = vector.broadcast %cst_90 : f32 to vector<1x128xf32>
    %183 = arith.mulf %178, %182 : vector<1x128xf32>
    %cst_91 = arith.constant 1.250000e-01 : f32
    %184 = vector.broadcast %cst_91 : f32 to vector<1x128xf32>
    %185 = arith.mulf %181, %184 : vector<1x128xf32>
    %186 = arith.mulf %183, %183 : vector<1x128xf32>
    %187 = arith.subf %185, %186 : vector<1x128xf32>
    %c0_92 = arith.constant 0 : index
    %c0_93 = arith.constant 0 : index
    %188 = vector.load %arg25[%c0_92, %c0_93] : memref<1x128xf32, #tpu.memory_space<vmem>>, vector<1x128xf32>
    %cst_94 = arith.constant 9.99999974E-6 : f32
    %189 = vector.broadcast %cst_94 : f32 to vector<1x128xf32>
    %190 = arith.addf %187, %189 : vector<1x128xf32>
    %191 = math.rsqrt %190 : vector<1x128xf32>
    %192 = arith.mulf %188, %191 : vector<1x128xf32>
    %c0_95 = arith.constant 0 : index
    %c0_96 = arith.constant 0 : index
    %193 = vector.load %arg26[%c0_95, %c0_96] : memref<1x128xf32, #tpu.memory_space<vmem>>, vector<1x128xf32>
    %194 = arith.mulf %183, %192 : vector<1x128xf32>
    %195 = arith.subf %193, %194 : vector<1x128xf32>
    %196 = vector.broadcast %192 : vector<1x128xf32> to vector<8x128xf32>
    %197 = arith.mulf %176, %196 : vector<8x128xf32>
    %198 = vector.broadcast %195 : vector<1x128xf32> to vector<8x128xf32>
    %199 = arith.addf %197, %198 : vector<8x128xf32>
    %cst_97 = arith.constant 0.000000e+00 : f32
    %200 = vector.broadcast %cst_97 : f32 to vector<8x128xf32>
    %201 = arith.maximumf %199, %200 : vector<8x128xf32>
    %202 = arith.truncf %201 : vector<8x128xf32> to vector<8x128xbf16>
    %c0_98 = arith.constant 0 : index
    %c0_99 = arith.constant 0 : index
    %203 = vector.load %arg27[%c0_98, %c0_99] : memref<128x128xbf16, #tpu.memory_space<vmem>>, vector<128x128xbf16>
    %cst_100 = arith.constant dense<0.000000e+00> : vector<8x128xf32>
    %204 = tpu.matmul %202, %203, %cst_100 {dimension_numbers = #tpu.dot_dimension_numbers<[1], [0], [0], [1], [0, 0, 1, 1], [], []>} : vector<8x128xbf16>, vector<128x128xbf16>, vector<8x128xf32> -> vector<8x128xf32>
    %c0_101 = arith.constant 0 : index
    %c0_102 = arith.constant 0 : index
    %205 = vector.load %arg28[%c0_101, %c0_102] : memref<1x128xf32, #tpu.memory_space<vmem>>, vector<1x128xf32>
    %206 = vector.broadcast %205 : vector<1x128xf32> to vector<8x128xf32>
    %207 = arith.addf %204, %206 : vector<8x128xf32>
    %cst_103 = arith.constant dense<0.000000e+00> : vector<128xf32>
    %208 = vector.multi_reduction <add>, %207, %cst_103 [0] : vector<8x128xf32> to vector<128xf32>
    %209 = vector.shape_cast %208 : vector<128xf32> to vector<1x128xf32>
    %210 = arith.mulf %207, %207 : vector<8x128xf32>
    %cst_104 = arith.constant dense<0.000000e+00> : vector<128xf32>
    %211 = vector.multi_reduction <add>, %210, %cst_104 [0] : vector<8x128xf32> to vector<128xf32>
    %212 = vector.shape_cast %211 : vector<128xf32> to vector<1x128xf32>
    %cst_105 = arith.constant 1.250000e-01 : f32
    %213 = vector.broadcast %cst_105 : f32 to vector<1x128xf32>
    %214 = arith.mulf %209, %213 : vector<1x128xf32>
    %cst_106 = arith.constant 1.250000e-01 : f32
    %215 = vector.broadcast %cst_106 : f32 to vector<1x128xf32>
    %216 = arith.mulf %212, %215 : vector<1x128xf32>
    %217 = arith.mulf %214, %214 : vector<1x128xf32>
    %218 = arith.subf %216, %217 : vector<1x128xf32>
    %c0_107 = arith.constant 0 : index
    %c0_108 = arith.constant 0 : index
    %219 = vector.load %arg29[%c0_107, %c0_108] : memref<1x128xf32, #tpu.memory_space<vmem>>, vector<1x128xf32>
    %cst_109 = arith.constant 9.99999974E-6 : f32
    %220 = vector.broadcast %cst_109 : f32 to vector<1x128xf32>
    %221 = arith.addf %218, %220 : vector<1x128xf32>
    %222 = math.rsqrt %221 : vector<1x128xf32>
    %223 = arith.mulf %219, %222 : vector<1x128xf32>
    %c0_110 = arith.constant 0 : index
    %c0_111 = arith.constant 0 : index
    %224 = vector.load %arg30[%c0_110, %c0_111] : memref<1x128xf32, #tpu.memory_space<vmem>>, vector<1x128xf32>
    %225 = arith.mulf %214, %223 : vector<1x128xf32>
    %226 = arith.subf %224, %225 : vector<1x128xf32>
    %227 = vector.broadcast %223 : vector<1x128xf32> to vector<8x128xf32>
    %228 = arith.mulf %207, %227 : vector<8x128xf32>
    %229 = vector.broadcast %226 : vector<1x128xf32> to vector<8x128xf32>
    %230 = arith.addf %228, %229 : vector<8x128xf32>
    %cst_112 = arith.constant 0.000000e+00 : f32
    %231 = vector.broadcast %cst_112 : f32 to vector<8x128xf32>
    %232 = arith.maximumf %230, %231 : vector<8x128xf32>
    %233 = arith.truncf %232 : vector<8x128xf32> to vector<8x128xbf16>
    %c0_113 = arith.constant 0 : index
    %c0_114 = arith.constant 0 : index
    %234 = vector.load %arg31[%c0_113, %c0_114] : memref<128x128xbf16, #tpu.memory_space<vmem>>, vector<128x128xbf16>
    %cst_115 = arith.constant dense<0.000000e+00> : vector<8x128xf32>
    %235 = tpu.matmul %233, %234, %cst_115 {dimension_numbers = #tpu.dot_dimension_numbers<[1], [0], [0], [1], [0, 0, 1, 1], [], []>} : vector<8x128xbf16>, vector<128x128xbf16>, vector<8x128xf32> -> vector<8x128xf32>
    %c0_116 = arith.constant 0 : index
    %c0_117 = arith.constant 0 : index
    %236 = vector.load %arg32[%c0_116, %c0_117] : memref<1x128xf32, #tpu.memory_space<vmem>>, vector<1x128xf32>
    %237 = vector.broadcast %236 : vector<1x128xf32> to vector<8x128xf32>
    %238 = arith.addf %235, %237 : vector<8x128xf32>
    %cst_118 = arith.constant dense<0.000000e+00> : vector<128xf32>
    %239 = vector.multi_reduction <add>, %238, %cst_118 [0] : vector<8x128xf32> to vector<128xf32>
    %240 = vector.shape_cast %239 : vector<128xf32> to vector<1x128xf32>
    %241 = arith.mulf %238, %238 : vector<8x128xf32>
    %cst_119 = arith.constant dense<0.000000e+00> : vector<128xf32>
    %242 = vector.multi_reduction <add>, %241, %cst_119 [0] : vector<8x128xf32> to vector<128xf32>
    %243 = vector.shape_cast %242 : vector<128xf32> to vector<1x128xf32>
    %cst_120 = arith.constant 1.250000e-01 : f32
    %244 = vector.broadcast %cst_120 : f32 to vector<1x128xf32>
    %245 = arith.mulf %240, %244 : vector<1x128xf32>
    %cst_121 = arith.constant 1.250000e-01 : f32
    %246 = vector.broadcast %cst_121 : f32 to vector<1x128xf32>
    %247 = arith.mulf %243, %246 : vector<1x128xf32>
    %248 = arith.mulf %245, %245 : vector<1x128xf32>
    %249 = arith.subf %247, %248 : vector<1x128xf32>
    %c0_122 = arith.constant 0 : index
    %c0_123 = arith.constant 0 : index
    %250 = vector.load %arg33[%c0_122, %c0_123] : memref<1x128xf32, #tpu.memory_space<vmem>>, vector<1x128xf32>
    %cst_124 = arith.constant 9.99999974E-6 : f32
    %251 = vector.broadcast %cst_124 : f32 to vector<1x128xf32>
    %252 = arith.addf %249, %251 : vector<1x128xf32>
    %253 = math.rsqrt %252 : vector<1x128xf32>
    %254 = arith.mulf %250, %253 : vector<1x128xf32>
    %c0_125 = arith.constant 0 : index
    %c0_126 = arith.constant 0 : index
    %255 = vector.load %arg34[%c0_125, %c0_126] : memref<1x128xf32, #tpu.memory_space<vmem>>, vector<1x128xf32>
    %256 = arith.mulf %245, %254 : vector<1x128xf32>
    %257 = arith.subf %255, %256 : vector<1x128xf32>
    %258 = vector.broadcast %254 : vector<1x128xf32> to vector<8x128xf32>
    %259 = arith.mulf %238, %258 : vector<8x128xf32>
    %260 = vector.broadcast %257 : vector<1x128xf32> to vector<8x128xf32>
    %261 = arith.addf %259, %260 : vector<8x128xf32>
    %cst_127 = arith.constant 0.000000e+00 : f32
    %262 = vector.broadcast %cst_127 : f32 to vector<8x128xf32>
    %263 = arith.maximumf %261, %262 : vector<8x128xf32>
    %264 = arith.truncf %263 : vector<8x128xf32> to vector<8x128xbf16>
    %c0_128 = arith.constant 0 : index
    %c0_129 = arith.constant 0 : index
    %265 = vector.load %arg35[%c0_128, %c0_129] : memref<128x640xbf16, #tpu.memory_space<vmem>>, vector<128x640xbf16>
    %cst_130 = arith.constant dense<0.000000e+00> : vector<8x640xf32>
    %266 = tpu.matmul %264, %265, %cst_130 {dimension_numbers = #tpu.dot_dimension_numbers<[1], [0], [0], [1], [0, 0, 1, 1], [], []>} : vector<8x128xbf16>, vector<128x640xbf16>, vector<8x640xf32> -> vector<8x640xf32>
    %c0_131 = arith.constant 0 : index
    %c0_132 = arith.constant 0 : index
    %267 = vector.load %arg36[%c0_131, %c0_132] : memref<1x640xf32, #tpu.memory_space<vmem>>, vector<1x640xf32>
    %268 = vector.broadcast %267 : vector<1x640xf32> to vector<8x640xf32>
    %269 = arith.addf %266, %268 : vector<8x640xf32>
    %270 = arith.subf %269, %1 : vector<8x640xf32>
    %271 = arith.mulf %270, %270 : vector<8x640xf32>
    %272 = vector.shape_cast %271 : vector<8x640xf32> to vector<1x8x640xf32>
    %cst_133 = arith.constant dense<0.000000e+00> : vector<1xf32>
    %273 = vector.multi_reduction <add>, %272, %cst_133 [1, 2] : vector<1x8x640xf32> to vector<1xf32>
    %274 = vector.shape_cast %273 : vector<1xf32> to vector<1x1x1xf32>
    %275 = vector.extract %274[0, 0, 0] : f32 from vector<1x1x1xf32>
    %cst_134 = arith.constant 5.120000e+03 : f32
    %276 = arith.divf %275, %cst_134 : f32
    %277 = arith.subf %276, %153 : f32
    %c0_135 = arith.constant 0 : index
    %c0_136 = arith.constant 0 : index
    %c0_137 = arith.constant 0 : index
    %278 = vector.load %arg39[%c0_135, %c0_136, %c0_137] : memref<1x8x640xf32, #tpu.memory_space<vmem>>, vector<1x8x640xf32>
    %279 = vector.shape_cast %278 : vector<1x8x640xf32> to vector<8x640xf32>
    %280 = vector.shape_cast %269 : vector<8x640xf32> to vector<1x8x640xf32>
    tpu.vector_store %arg39[%c0_135, %c0_136, %c0_137], %280 {strides = array<i32>} : memref<1x8x640xf32, #tpu.memory_space<vmem>>, vector<1x8x640xf32>,
    %c0_138 = arith.constant 0 : index
    %c0_139 = arith.constant 0 : index
    %c0_140 = arith.constant 0 : index
    %281 = vector.load %arg38[%c0_138, %c0_139, %c0_140] : memref<1x8x128xf32, #tpu.memory_space<vmem>>, vector<1x8x128xf32>
    %282 = vector.shape_cast %281 : vector<1x8x128xf32> to vector<8x128xf32>
    %283 = vector.shape_cast %162 : vector<8x128xf32> to vector<1x8x128xf32>
    tpu.vector_store %arg38[%c0_138, %c0_139, %c0_140], %283 {strides = array<i32>} : memref<1x8x128xf32, #tpu.memory_space<vmem>>, vector<1x8x128xf32>,
    %284 = tpu.iota {dimensions = array<i32: 0>} : vector<8x128xi32>
    %285 = tpu.iota {dimensions = array<i32: 1>} : vector<8x128xi32>
    %c0_i32 = arith.constant 0 : i32
    %286 = vector.broadcast %c0_i32 : i32 to vector<8x128xi32>
    %287 = arith.cmpi eq, %284, %286 : vector<8x128xi32>
    %c0_i32_141 = arith.constant 0 : i32
    %288 = vector.broadcast %c0_i32_141 : i32 to vector<8x128xi32>
    %289 = arith.cmpi eq, %285, %288 : vector<8x128xi32>
    %290 = arith.andi %287, %289 : vector<8x128xi1>
    %c0_i32_142 = arith.constant 0 : i32
    %291 = vector.broadcast %c0_i32_142 : i32 to vector<8x128xi32>
    %292 = arith.cmpi eq, %284, %291 : vector<8x128xi32>
    %c1_i32 = arith.constant 1 : i32
    %293 = vector.broadcast %c1_i32 : i32 to vector<8x128xi32>
    %294 = arith.cmpi eq, %285, %293 : vector<8x128xi32>
    %295 = arith.andi %292, %294 : vector<8x128xi1>
    %c0_i32_143 = arith.constant 0 : i32
    %296 = vector.broadcast %c0_i32_143 : i32 to vector<8x128xi32>
    %297 = arith.cmpi eq, %284, %296 : vector<8x128xi32>
    %c2_i32 = arith.constant 2 : i32
    %298 = vector.broadcast %c2_i32 : i32 to vector<8x128xi32>
    %299 = arith.cmpi eq, %285, %298 : vector<8x128xi32>
    %300 = arith.andi %297, %299 : vector<8x128xi1>
    %cst_144 = arith.constant 0.000000e+00 : f32
    %301 = vector.broadcast %276 : f32 to vector<8x128xf32>
    %302 = vector.broadcast %cst_144 : f32 to vector<8x128xf32>
    %303 = arith.select %300, %301, %302 : vector<8x128xi1>, vector<8x128xf32>
    %304 = vector.broadcast %153 : f32 to vector<8x128xf32>
    %305 = arith.select %295, %304, %303 : vector<8x128xi1>, vector<8x128xf32>
    %306 = vector.broadcast %277 : f32 to vector<8x128xf32>
    %307 = arith.select %290, %306, %305 : vector<8x128xi1>, vector<8x128xf32>
    %c0_145 = arith.constant 0 : index
    %c0_146 = arith.constant 0 : index
    %c0_147 = arith.constant 0 : index
    %308 = vector.load %arg37[%c0_145, %c0_146, %c0_147] : memref<1x8x128xf32, #tpu.memory_space<vmem>>, vector<1x8x128xf32>
    %309 = vector.shape_cast %308 : vector<1x8x128xf32> to vector<8x128xf32>
    %310 = vector.shape_cast %307 : vector<8x128xf32> to vector<1x8x128xf32>
    tpu.vector_store %arg37[%c0_145, %c0_146, %c0_147], %310 {strides = array<i32>} : memref<1x8x128xf32, #tpu.memory_space<vmem>>, vector<1x8x128xf32>,
    return
  }
  func.func @transform_0(%arg0: i32) -> (i32, i32, i32) {
    %c0_i32 = arith.constant 0 : i32
    %c0_i32_0 = arith.constant 0 : i32
    %c0_i32_1 = arith.constant 0 : i32
    return %arg0, %c0_i32, %c0_i32_0 : i32, i32, i32
  }
  func.func @transform_1(%arg0: i32) -> (i32, i32, i32) {
    %c0_i32 = arith.constant 0 : i32
    %c0_i32_0 = arith.constant 0 : i32
    %c0_i32_1 = arith.constant 0 : i32
    return %arg0, %c0_i32, %c0_i32_0 : i32, i32, i32
  }
  func.func @transform_2(%arg0: i32) -> (i32, i32) {
    %c0_i32 = arith.constant 0 : i32
    %c0_i32_0 = arith.constant 0 : i32
    %c0_i32_1 = arith.constant 0 : i32
    return %c0_i32, %c0_i32_0 : i32, i32
  }
  func.func @transform_3(%arg0: i32) -> (i32, i32) {
    %c0_i32 = arith.constant 0 : i32
    %c0_i32_0 = arith.constant 0 : i32
    %c0_i32_1 = arith.constant 0 : i32
    return %c0_i32, %c0_i32_0 : i32, i32
  }
  func.func @transform_4(%arg0: i32) -> (i32, i32) {
    %c0_i32 = arith.constant 0 : i32
    %c0_i32_0 = arith.constant 0 : i32
    %c0_i32_1 = arith.constant 0 : i32
    return %c0_i32, %c0_i32_0 : i32, i32
  }
  func.func @transform_5(%arg0: i32) -> (i32, i32) {
    %c0_i32 = arith.constant 0 : i32
    %c0_i32_0 = arith.constant 0 : i32
    %c0_i32_1 = arith.constant 0 : i32
    return %c0_i32, %c0_i32_0 : i32, i32
  }
  func.func @transform_6(%arg0: i32) -> (i32, i32) {
    %c0_i32 = arith.constant 0 : i32
    %c0_i32_0 = arith.constant 0 : i32
    %c0_i32_1 = arith.constant 0 : i32
    return %c0_i32, %c0_i32_0 : i32, i32
  }
  func.func @transform_7(%arg0: i32) -> (i32, i32) {
    %c0_i32 = arith.constant 0 : i32
    %c0_i32_0 = arith.constant 0 : i32
    %c0_i32_1 = arith.constant 0 : i32
    return %c0_i32, %c0_i32_0 : i32, i32
  }
  func.func @transform_8(%arg0: i32) -> (i32, i32) {
    %c0_i32 = arith.constant 0 : i32
    %c0_i32_0 = arith.constant 0 : i32
    %c0_i32_1 = arith.constant 0 : i32
    return %c0_i32, %c0_i32_0 : i32, i32
  }
  func.func @transform_9(%arg0: i32) -> (i32, i32) {
    %c0_i32 = arith.constant 0 : i32
    %c0_i32_0 = arith.constant 0 : i32
    %c0_i32_1 = arith.constant 0 : i32
    return %c0_i32, %c0_i32_0 : i32, i32
  }
  func.func @transform_10(%arg0: i32) -> (i32, i32) {
    %c0_i32 = arith.constant 0 : i32
    %c0_i32_0 = arith.constant 0 : i32
    %c0_i32_1 = arith.constant 0 : i32
    return %c0_i32, %c0_i32_0 : i32, i32
  }
  func.func @transform_11(%arg0: i32) -> (i32, i32) {
    %c0_i32 = arith.constant 0 : i32
    %c0_i32_0 = arith.constant 0 : i32
    %c0_i32_1 = arith.constant 0 : i32
    return %c0_i32, %c0_i32_0 : i32, i32
  }
  func.func @transform_12(%arg0: i32) -> (i32, i32) {
    %c0_i32 = arith.constant 0 : i32
    %c0_i32_0 = arith.constant 0 : i32
    %c0_i32_1 = arith.constant 0 : i32
    return %c0_i32, %c0_i32_0 : i32, i32
  }
  func.func @transform_13(%arg0: i32) -> (i32, i32) {
    %c0_i32 = arith.constant 0 : i32
    %c0_i32_0 = arith.constant 0 : i32
    %c0_i32_1 = arith.constant 0 : i32
    return %c0_i32, %c0_i32_0 : i32, i32
  }
  func.func @transform_14(%arg0: i32) -> (i32, i32) {
    %c0_i32 = arith.constant 0 : i32
    %c0_i32_0 = arith.constant 0 : i32
    %c0_i32_1 = arith.constant 0 : i32
    return %c0_i32, %c0_i32_0 : i32, i32
  }
  func.func @transform_15(%arg0: i32) -> (i32, i32) {
    %c0_i32 = arith.constant 0 : i32
    %c0_i32_0 = arith.constant 0 : i32
    %c0_i32_1 = arith.constant 0 : i32
    return %c0_i32, %c0_i32_0 : i32, i32
  }
  func.func @transform_16(%arg0: i32) -> (i32, i32) {
    %c0_i32 = arith.constant 0 : i32
    %c0_i32_0 = arith.constant 0 : i32
    %c0_i32_1 = arith.constant 0 : i32
    return %c0_i32, %c0_i32_0 : i32, i32
  }
  func.func @transform_17(%arg0: i32) -> (i32, i32) {
    %c0_i32 = arith.constant 0 : i32
    %c0_i32_0 = arith.constant 0 : i32
    %c0_i32_1 = arith.constant 0 : i32
    return %c0_i32, %c0_i32_0 : i32, i32
  }
  func.func @transform_18(%arg0: i32) -> (i32, i32) {
    %c0_i32 = arith.constant 0 : i32
    %c0_i32_0 = arith.constant 0 : i32
    %c0_i32_1 = arith.constant 0 : i32
    return %c0_i32, %c0_i32_0 : i32, i32
  }
  func.func @transform_19(%arg0: i32) -> (i32, i32) {
    %c0_i32 = arith.constant 0 : i32
    %c0_i32_0 = arith.constant 0 : i32
    %c0_i32_1 = arith.constant 0 : i32
    return %c0_i32, %c0_i32_0 : i32, i32
  }
  func.func @transform_20(%arg0: i32) -> (i32, i32) {
    %c0_i32 = arith.constant 0 : i32
    %c0_i32_0 = arith.constant 0 : i32
    %c0_i32_1 = arith.constant 0 : i32
    return %c0_i32, %c0_i32_0 : i32, i32
  }
  func.func @transform_21(%arg0: i32) -> (i32, i32) {
    %c0_i32 = arith.constant 0 : i32
    %c0_i32_0 = arith.constant 0 : i32
    %c0_i32_1 = arith.constant 0 : i32
    return %c0_i32, %c0_i32_0 : i32, i32
  }
  func.func @transform_22(%arg0: i32) -> (i32, i32) {
    %c0_i32 = arith.constant 0 : i32
    %c0_i32_0 = arith.constant 0 : i32
    %c0_i32_1 = arith.constant 0 : i32
    return %c0_i32, %c0_i32_0 : i32, i32
  }
  func.func @transform_23(%arg0: i32) -> (i32, i32) {
    %c0_i32 = arith.constant 0 : i32
    %c0_i32_0 = arith.constant 0 : i32
    %c0_i32_1 = arith.constant 0 : i32
    return %c0_i32, %c0_i32_0 : i32, i32
  }
  func.func @transform_24(%arg0: i32) -> (i32, i32) {
    %c0_i32 = arith.constant 0 : i32
    %c0_i32_0 = arith.constant 0 : i32
    %c0_i32_1 = arith.constant 0 : i32
    return %c0_i32, %c0_i32_0 : i32, i32
  }
  func.func @transform_25(%arg0: i32) -> (i32, i32) {
    %c0_i32 = arith.constant 0 : i32
    %c0_i32_0 = arith.constant 0 : i32
    %c0_i32_1 = arith.constant 0 : i32
    return %c0_i32, %c0_i32_0 : i32, i32
  }
  func.func @transform_26(%arg0: i32) -> (i32, i32) {
    %c0_i32 = arith.constant 0 : i32
    %c0_i32_0 = arith.constant 0 : i32
    %c0_i32_1 = arith.constant 0 : i32
    return %c0_i32, %c0_i32_0 : i32, i32
  }
  func.func @transform_27(%arg0: i32) -> (i32, i32) {
    %c0_i32 = arith.constant 0 : i32
    %c0_i32_0 = arith.constant 0 : i32
    %c0_i32_1 = arith.constant 0 : i32
    return %c0_i32, %c0_i32_0 : i32, i32
  }
  func.func @transform_28(%arg0: i32) -> (i32, i32) {
    %c0_i32 = arith.constant 0 : i32
    %c0_i32_0 = arith.constant 0 : i32
    %c0_i32_1 = arith.constant 0 : i32
    return %c0_i32, %c0_i32_0 : i32, i32
  }
  func.func @transform_29(%arg0: i32) -> (i32, i32) {
    %c0_i32 = arith.constant 0 : i32
    %c0_i32_0 = arith.constant 0 : i32
    %c0_i32_1 = arith.constant 0 : i32
    return %c0_i32, %c0_i32_0 : i32, i32
  }
  func.func @transform_30(%arg0: i32) -> (i32, i32) {
    %c0_i32 = arith.constant 0 : i32
    %c0_i32_0 = arith.constant 0 : i32
    %c0_i32_1 = arith.constant 0 : i32
    return %c0_i32, %c0_i32_0 : i32, i32
  }
  func.func @transform_31(%arg0: i32) -> (i32, i32) {
    %c0_i32 = arith.constant 0 : i32
    %c0_i32_0 = arith.constant 0 : i32
    %c0_i32_1 = arith.constant 0 : i32
    return %c0_i32, %c0_i32_0 : i32, i32
  }
  func.func @transform_32(%arg0: i32) -> (i32, i32) {
    %c0_i32 = arith.constant 0 : i32
    %c0_i32_0 = arith.constant 0 : i32
    %c0_i32_1 = arith.constant 0 : i32
    return %c0_i32, %c0_i32_0 : i32, i32
  }
  func.func @transform_33(%arg0: i32) -> (i32, i32) {
    %c0_i32 = arith.constant 0 : i32
    %c0_i32_0 = arith.constant 0 : i32
    %c0_i32_1 = arith.constant 0 : i32
    return %c0_i32, %c0_i32_0 : i32, i32
  }
  func.func @transform_34(%arg0: i32) -> (i32, i32) {
    %c0_i32 = arith.constant 0 : i32
    %c0_i32_0 = arith.constant 0 : i32
    %c0_i32_1 = arith.constant 0 : i32
    return %c0_i32, %c0_i32_0 : i32, i32
  }
  func.func @transform_35(%arg0: i32) -> (i32, i32) {
    %c0_i32 = arith.constant 0 : i32
    %c0_i32_0 = arith.constant 0 : i32
    %c0_i32_1 = arith.constant 0 : i32
    return %c0_i32, %c0_i32_0 : i32, i32
  }
  func.func @transform_36(%arg0: i32) -> (i32, i32, i32) {
    %c0_i32 = arith.constant 0 : i32
    %c0_i32_0 = arith.constant 0 : i32
    %c0_i32_1 = arith.constant 0 : i32
    return %arg0, %c0_i32, %c0_i32_0 : i32, i32, i32
  }
  func.func @transform_37(%arg0: i32) -> (i32, i32, i32) {
    %c0_i32 = arith.constant 0 : i32
    %c0_i32_0 = arith.constant 0 : i32
    %c0_i32_1 = arith.constant 0 : i32
    return %arg0, %c0_i32, %c0_i32_0 : i32, i32, i32
  }
  func.func @transform_38(%arg0: i32) -> (i32, i32, i32) {
    %c0_i32 = arith.constant 0 : i32
    %c0_i32_0 = arith.constant 0 : i32
    %c0_i32_1 = arith.constant 0 : i32
    return %arg0, %c0_i32, %c0_i32_0 : i32, i32, i32
  }
}

</mosaic_0001>

<llo_original>
// kernel: vae_forward.1
$region0: #{vae_forward.1}
  #allocation0 [shape = 'u32[]', space=smem, size = 0x4, offset = 0x4, fixed_abs, tag = 'smem constant byte address 0x4 - core index']
  #allocation1 [shape = 'u32[72,128]{1,0:T(1,128)}', space=vmem, size = 0x9000, scoped, tag = 'internal scratch']
  %s0 = inlined_call_operand.smem [shape: u32[39], index: -1, kind: input, shape index: {}]
  %s1 = sld [smem:[%s0]]
  %s2 = scalar_lea.smem %s0, 1
  %s3 = sld [smem:[%s2]]
  %s4 = scalar_lea.smem %s0, 2
  %s5 = sld [smem:[%s4]]
  %s6 = scalar_lea.smem %s0, 3
  %s7 = sld [smem:[%s6]]
  %s8 = scalar_lea.smem %s0, 4
  %s9 = sld [smem:[%s8]]
  %s10 = scalar_lea.smem %s0, 5
  %s11 = sld [smem:[%s10]]
  %s12 = scalar_lea.smem %s0, 6
  %s13 = sld [smem:[%s12]]
  %s14 = scalar_lea.smem %s0, 7
  %s15 = sld [smem:[%s14]]
  %s16 = scalar_lea.smem %s0, 8
  %s17 = sld [smem:[%s16]]
  %s18 = scalar_lea.smem %s0, 9
  %s19 = sld [smem:[%s18]]
  %s20 = scalar_lea.smem %s0, 10
  %s21 = sld [smem:[%s20]]
  %s22 = scalar_lea.smem %s0, 11
  %s23 = sld [smem:[%s22]]
  %s24 = scalar_lea.smem %s0, 12
  %s25 = sld [smem:[%s24]]
  %s26 = scalar_lea.smem %s0, 13
  %s27 = sld [smem:[%s26]]
  %s28 = scalar_lea.smem %s0, 14
  %s29 = sld [smem:[%s28]]
  %s30 = scalar_lea.smem %s0, 15
  %s31 = sld [smem:[%s30]]
  %s32 = scalar_lea.smem %s0, 16
  %s33 = sld [smem:[%s32]]
  %s34 = scalar_lea.smem %s0, 17
  %s35 = sld [smem:[%s34]]
  %s36 = scalar_lea.smem %s0, 18
  %s37 = sld [smem:[%s36]]
  %s38 = scalar_lea.smem %s0, 19
  %s39 = sld [smem:[%s38]]
  %s40 = scalar_lea.smem %s0, 20
  %s41 = sld [smem:[%s40]]
  %s42 = scalar_lea.smem %s0, 21
  %s43 = sld [smem:[%s42]]
  %s44 = scalar_lea.smem %s0, 22
  %s45 = sld [smem:[%s44]]
  %s46 = scalar_lea.smem %s0, 23
  %s47 = sld [smem:[%s46]]
  %s48 = scalar_lea.smem %s0, 24
  %s49 = sld [smem:[%s48]]
  %s50 = scalar_lea.smem %s0, 25
  %s51 = sld [smem:[%s50]]
  %s52 = scalar_lea.smem %s0, 26
  %s53 = sld [smem:[%s52]]
  %s54 = scalar_lea.smem %s0, 27
  %s55 = sld [smem:[%s54]]
  %s56 = scalar_lea.smem %s0, 28
  %s57 = sld [smem:[%s56]]
  %s58 = scalar_lea.smem %s0, 29
  %s59 = sld [smem:[%s58]]
  %s60 = scalar_lea.smem %s0, 30
  %s61 = sld [smem:[%s60]]
  %s62 = scalar_lea.smem %s0, 31
  %s63 = sld [smem:[%s62]]
  %s64 = scalar_lea.smem %s0, 32
  %s65 = sld [smem:[%s64]]
  %s66 = scalar_lea.smem %s0, 33
  %s67 = sld [smem:[%s66]]
  %s68 = scalar_lea.smem %s0, 34
  %s69 = sld [smem:[%s68]]
  %s70 = scalar_lea.smem %s0, 35
  %s71 = sld [smem:[%s70]]
  %s72 = scalar_lea.smem %s0, 36
  %s73 = sld [smem:[%s72]]
  %s74 = scalar_lea.smem %s0, 37
  %s75 = sld [smem:[%s74]]
  %s76 = scalar_lea.smem %s0, 38
  %s77 = sld [smem:[%s76]]
  %78 = xla_tuple %s73, %s75, %s77
  %s79 = sld [smem:[#allocation0]]
  $region193: #{vae_forward.1} parent=0
    _
  %s81 = ssub.s32 1, %s79
  %s82 = scalar_select 0, %s81, %s79
  $region1: #{vae_forward.1} parent=0
    #allocation2 [shape = 'u8[8192]{0}', space=vmem, size = 0x2000, scoped, tag = 'output window, operand 1']
    #allocation3 [shape = 's32[2]{0}', space=sflag, size = 0x8, scoped, tag = 'scoped memory for vae_forward.1']
    #allocation4 [shape = 'u8[40960]{0}', space=vmem, size = 0xa000, scoped, tag = 'output window, operand 2']
    #allocation5 [shape = 's32[2]{0}', space=sflag, size = 0x8, scoped, tag = 'scoped memory for vae_forward.1']
    %83 = vsyncpa [#allocation3], 0
    %s84 = scalar_lea.sflag [#allocation3], 1
    %85 = vsyncpa %s84, 0
    %86 = vsyncpa [#allocation5], 0
    %s87 = scalar_lea.sflag [#allocation5], 1
    %88 = vsyncpa %s87, 0
    loop: start=0, step=1, limit=6
    $region2: #{vae_forward.1} parent=1 // loop_pre_header
      _
    $region3: #{vae_forward.1} parent=1 // loop_header
      %s90 = sphi 0, %s94
      %p91 = scmp.ge.s32.totalorder %s90, 6
      %s100 = sphi 0, %s102
      %s103 = sphi 0, %s100
      %s104 = sphi 0, %s103
      %s120 = sphi 0, %s104
      %s126 = sphi 0, %s128
      %s129 = sphi 0, %s126
      %s130 = sphi 0, %s129
      %s146 = sphi 0, %s130
      %s150 = sphi 0, %s150
      %s152 = sphi 0, %s150
      %s153 = sphi 0, %s152
      %s167 = sphi 0, %s153
      %s171 = sphi 0, %s171
      %s173 = sphi 0, %s171
      %s174 = sphi 0, %s173
      %s188 = sphi 0, %s174
      %s192 = sphi 0, %s192
      %s194 = sphi 0, %s192
      %s195 = sphi 0, %s194
      %s209 = sphi 0, %s195
      %s213 = sphi 0, %s213
      %s215 = sphi 0, %s213
      %s216 = sphi 0, %s215
      %s230 = sphi 0, %s216
      %s234 = sphi 0, %s234
      %s236 = sphi 0, %s234
      %s237 = sphi 0, %s236
      %s251 = sphi 0, %s237
      %s255 = sphi 0, %s255
      %s257 = sphi 0, %s255
      %s258 = sphi 0, %s257
      %s272 = sphi 0, %s258
      %s276 = sphi 0, %s276
      %s278 = sphi 0, %s276
      %s279 = sphi 0, %s278
      %s293 = sphi 0, %s279
      %s297 = sphi 0, %s297
      %s299 = sphi 0, %s297
      %s300 = sphi 0, %s299
      %s314 = sphi 0, %s300
      %s318 = sphi 0, %s318
      %s320 = sphi 0, %s318
      %s321 = sphi 0, %s320
      %s335 = sphi 0, %s321
      %s339 = sphi 0, %s339
      %s341 = sphi 0, %s339
      %s342 = sphi 0, %s341
      %s356 = sphi 0, %s342
      %s360 = sphi 0, %s360
      %s362 = sphi 0, %s360
      %s363 = sphi 0, %s362
      %s377 = sphi 0, %s363
      %s381 = sphi 0, %s381
      %s383 = sphi 0, %s381
      %s384 = sphi 0, %s383
      %s398 = sphi 0, %s384
      %s402 = sphi 0, %s402
      %s404 = sphi 0, %s402
      %s405 = sphi 0, %s404
      %s419 = sphi 0, %s405
      %s423 = sphi 0, %s423
      %s425 = sphi 0, %s423
      %s426 = sphi 0, %s425
      %s440 = sphi 0, %s426
      %s444 = sphi 0, %s444
      %s446 = sphi 0, %s444
      %s447 = sphi 0, %s446
      %s461 = sphi 0, %s447
      %s465 = sphi 0, %s465
      %s467 = sphi 0, %s465
      %s468 = sphi 0, %s467
      %s482 = sphi 0, %s468
      %s486 = sphi 0, %s486
      %s488 = sphi 0, %s486
      %s489 = sphi 0, %s488
      %s503 = sphi 0, %s489
      %s507 = sphi 0, %s507
      %s509 = sphi 0, %s507
      %s510 = sphi 0, %s509
      %s524 = sphi 0, %s510
      %s528 = sphi 0, %s528
      %s530 = sphi 0, %s528
      %s531 = sphi 0, %s530
      %s545 = sphi 0, %s531
      %s549 = sphi 0, %s549
      %s551 = sphi 0, %s549
      %s552 = sphi 0, %s551
      %s566 = sphi 0, %s552
      %s570 = sphi 0, %s570
      %s572 = sphi 0, %s570
      %s573 = sphi 0, %s572
      %s587 = sphi 0, %s573
      %s591 = sphi 0, %s591
      %s593 = sphi 0, %s591
      %s594 = sphi 0, %s593
      %s608 = sphi 0, %s594
      %s612 = sphi 0, %s612
      %s614 = sphi 0, %s612
      %s615 = sphi 0, %s614
      %s629 = sphi 0, %s615
      %s633 = sphi 0, %s633
      %s635 = sphi 0, %s633
      %s636 = sphi 0, %s635
      %s650 = sphi 0, %s636
      %s654 = sphi 0, %s654
      %s656 = sphi 0, %s654
      %s657 = sphi 0, %s656
      %s671 = sphi 0, %s657
      %s675 = sphi 0, %s675
      %s677 = sphi 0, %s675
      %s678 = sphi 0, %s677
      %s692 = sphi 0, %s678
      %s696 = sphi 0, %s696
      %s698 = sphi 0, %s696
      %s699 = sphi 0, %s698
      %s713 = sphi 0, %s699
      %s717 = sphi 0, %s717
      %s719 = sphi 0, %s717
      %s720 = sphi 0, %s719
      %s734 = sphi 0, %s720
      %s738 = sphi 0, %s738
      %s740 = sphi 0, %s738
      %s741 = sphi 0, %s740
      %s755 = sphi 0, %s741
      %s759 = sphi 0, %s759
      %s761 = sphi 0, %s759
      %s762 = sphi 0, %s761
      %s776 = sphi 0, %s762
      %s780 = sphi 0, %s780
      %s782 = sphi 0, %s780
      %s783 = sphi 0, %s782
      %s797 = sphi 0, %s783
      %s801 = sphi 0, %s801
      %s803 = sphi 0, %s801
      %s804 = sphi 0, %s803
      %s818 = sphi 0, %s804
      %s822 = sphi 0, %s822
      %s824 = sphi 0, %s822
      %s825 = sphi 0, %s824
      %s839 = sphi 0, %s825
      %s843 = sphi 0, %s843
      %s845 = sphi 0, %s843
      %s846 = sphi 0, %s845
      %s860 = sphi 0, %s846
      %s866 = sphi 0, %s868
      %s869 = sphi 0, %s866
      %s870 = sphi 0, %s869
      %s886 = sphi 0, %s870
      %s892 = sphi 0, %s894
      %s895 = sphi 0, %s892
      %s896 = sphi 0, %s895
      %s912 = sphi 0, %s896
      %s918 = sphi 0, %s920
      %s921 = sphi 0, %s918
      %s922 = sphi 0, %s921
      %s938 = sphi 0, %s922
    $region4: #{vae_forward.1} parent=1 // loop_header_branch
      %93 = sbr.rel (%p91) target = $region8
    $region5: #{vae_forward.1} parent=1 // loop_body
      %s95 = ssub.s32 %s90, 1
      %s96 = ssub.s32 %s90, 2
      %s97 = sadd.s32 %s90, 1
      %s98 = ssub.s32 %s90, %s97
      %p99 = scmp.eq.s32.totalorder %s98, 0
      %s101 = sadd.s32 %s100, 1
      %s102 = scalar_select %p99, %s100, %s101
      %p105 = pneg %p99
      %p106 = scmp.eq.s32.totalorder %s90, 3
      %p107 = por %p105, %p106
      %p108 = scmp.ne.s32.totalorder %s100, %s103
      %p109 = scmp.eq.s32.totalorder %s90, 0
      %p110 = por %p108, %p109
      %p111 = scmp.ne.s32.totalorder %s100, %s103
      %p112 = scmp.eq.s32.totalorder %s95, 3
      %p113 = por %p111, %p112
      %p114 = scmp.ne.s32.totalorder %s103, %s104
      %p115 = scmp.eq.s32.totalorder %s95, 0
      %p116 = por %p114, %p115
      %p117 = scmp.ne.s32.totalorder %s103, %s104
      %p118 = scmp.eq.s32.totalorder %s96, 3
      %p119 = por %p117, %p118
      %p121 = scmp.ne.s32.totalorder %s104, %s120
      %p122 = scmp.eq.s32.totalorder %s96, 0
      %p123 = por %p121, %p122
      %s124 = ssub.s32 %s90, %s97
      %p125 = scmp.eq.s32.totalorder %s124, 0
      %s127 = sadd.s32 %s126, 1
      %s128 = scalar_select %p125, %s126, %s127
      %p131 = pneg %p125
      %p132 = scmp.eq.s32.totalorder %s90, 3
      %p133 = por %p131, %p132
      %p134 = scmp.ne.s32.totalorder %s126, %s129
      %p135 = scmp.eq.s32.totalorder %s90, 0
      %p136 = por %p134, %p135
      %p137 = scmp.ne.s32.totalorder %s126, %s129
      %p138 = scmp.eq.s32.totalorder %s95, 3
      %p139 = por %p137, %p138
      %p140 = scmp.ne.s32.totalorder %s129, %s130
      %p141 = scmp.eq.s32.totalorder %s95, 0
      %p142 = por %p140, %p141
      %p143 = scmp.ne.s32.totalorder %s129, %s130
      %p144 = scmp.eq.s32.totalorder %s96, 3
      %p145 = por %p143, %p144
      %p147 = scmp.ne.s32.totalorder %s130, %s146
      %p148 = scmp.eq.s32.totalorder %s96, 0
      %p149 = por %p147, %p148
      %s151 = sadd.s32 %s150, 1
      %p154 = scmp.eq.s32.totalorder %s90, 3
      %p155 = scmp.ne.s32.totalorder %s150, %s152
      %p156 = scmp.eq.s32.totalorder %s90, 0
      %p157 = por %p155, %p156
      %p158 = scmp.ne.s32.totalorder %s150, %s152
      %p159 = scmp.eq.s32.totalorder %s95, 3
      %p160 = por %p158, %p159
      %p161 = scmp.ne.s32.totalorder %s152, %s153
      %p162 = scmp.eq.s32.totalorder %s95, 0
      %p163 = por %p161, %p162
      %p164 = scmp.ne.s32.totalorder %s152, %s153
      %p165 = scmp.eq.s32.totalorder %s96, 3
      %p166 = por %p164, %p165
      %p168 = scmp.ne.s32.totalorder %s153, %s167
      %p169 = scmp.eq.s32.totalorder %s96, 0
      %p170 = por %p168, %p169
      %s172 = sadd.s32 %s171, 1
      %p175 = scmp.eq.s32.totalorder %s90, 3
      %p176 = scmp.ne.s32.totalorder %s171, %s173
      %p177 = scmp.eq.s32.totalorder %s90, 0
      %p178 = por %p176, %p177
      %p179 = scmp.ne.s32.totalorder %s171, %s173
      %p180 = scmp.eq.s32.totalorder %s95, 3
      %p181 = por %p179, %p180
      %p182 = scmp.ne.s32.totalorder %s173, %s174
      %p183 = scmp.eq.s32.totalorder %s95, 0
      %p184 = por %p182, %p183
      %p185 = scmp.ne.s32.totalorder %s173, %s174
      %p186 = scmp.eq.s32.totalorder %s96, 3
      %p187 = por %p185, %p186
      %p189 = scmp.ne.s32.totalorder %s174, %s188
      %p190 = scmp.eq.s32.totalorder %s96, 0
      %p191 = por %p189, %p190
      %s193 = sadd.s32 %s192, 1
      %p196 = scmp.eq.s32.totalorder %s90, 3
      %p197 = scmp.ne.s32.totalorder %s192, %s194
      %p198 = scmp.eq.s32.totalorder %s90, 0
      %p199 = por %p197, %p198
      %p200 = scmp.ne.s32.totalorder %s192, %s194
      %p201 = scmp.eq.s32.totalorder %s95, 3
      %p202 = por %p200, %p201
      %p203 = scmp.ne.s32.totalorder %s194, %s195
      %p204 = scmp.eq.s32.totalorder %s95, 0
      %p205 = por %p203, %p204
      %p206 = scmp.ne.s32.totalorder %s194, %s195
      %p207 = scmp.eq.s32.totalorder %s96, 3
      %p208 = por %p206, %p207
      %p210 = scmp.ne.s32.totalorder %s195, %s209
      %p211 = scmp.eq.s32.totalorder %s96, 0
      %p212 = por %p210, %p211
      %s214 = sadd.s32 %s213, 1
      %p217 = scmp.eq.s32.totalorder %s90, 3
      %p218 = scmp.ne.s32.totalorder %s213, %s215
      %p219 = scmp.eq.s32.totalorder %s90, 0
      %p220 = por %p218, %p219
      %p221 = scmp.ne.s32.totalorder %s213, %s215
      %p222 = scmp.eq.s32.totalorder %s95, 3
      %p223 = por %p221, %p222
      %p224 = scmp.ne.s32.totalorder %s215, %s216
      %p225 = scmp.eq.s32.totalorder %s95, 0
      %p226 = por %p224, %p225
      %p227 = scmp.ne.s32.totalorder %s215, %s216
      %p228 = scmp.eq.s32.totalorder %s96, 3
      %p229 = por %p227, %p228
      %p231 = scmp.ne.s32.totalorder %s216, %s230
      %p232 = scmp.eq.s32.totalorder %s96, 0
      %p233 = por %p231, %p232
      %s235 = sadd.s32 %s234, 1
      %p238 = scmp.eq.s32.totalorder %s90, 3
      %p239 = scmp.ne.s32.totalorder %s234, %s236
      %p240 = scmp.eq.s32.totalorder %s90, 0
      %p241 = por %p239, %p240
      %p242 = scmp.ne.s32.totalorder %s234, %s236
      %p243 = scmp.eq.s32.totalorder %s95, 3
      %p244 = por %p242, %p243
      %p245 = scmp.ne.s32.totalorder %s236, %s237
      %p246 = scmp.eq.s32.totalorder %s95, 0
      %p247 = por %p245, %p246
      %p248 = scmp.ne.s32.totalorder %s236, %s237
      %p249 = scmp.eq.s32.totalorder %s96, 3
      %p250 = por %p248, %p249
      %p252 = scmp.ne.s32.totalorder %s237, %s251
      %p253 = scmp.eq.s32.totalorder %s96, 0
      %p254 = por %p252, %p253
      %s256 = sadd.s32 %s255, 1
      %p259 = scmp.eq.s32.totalorder %s90, 3
      %p260 = scmp.ne.s32.totalorder %s255, %s257
      %p261 = scmp.eq.s32.totalorder %s90, 0
      %p262 = por %p260, %p261
      %p263 = scmp.ne.s32.totalorder %s255, %s257
      %p264 = scmp.eq.s32.totalorder %s95, 3
      %p265 = por %p263, %p264
      %p266 = scmp.ne.s32.totalorder %s257, %s258
      %p267 = scmp.eq.s32.totalorder %s95, 0
      %p268 = por %p266, %p267
      %p269 = scmp.ne.s32.totalorder %s257, %s258
      %p270 = scmp.eq.s32.totalorder %s96, 3
      %p271 = por %p269, %p270
      %p273 = scmp.ne.s32.totalorder %s258, %s272
      %p274 = scmp.eq.s32.totalorder %s96, 0
      %p275 = por %p273, %p274
      %s277 = sadd.s32 %s276, 1
      %p280 = scmp.eq.s32.totalorder %s90, 3
      %p281 = scmp.ne.s32.totalorder %s276, %s278
      %p282 = scmp.eq.s32.totalorder %s90, 0
      %p283 = por %p281, %p282
      %p284 = scmp.ne.s32.totalorder %s276, %s278
      %p285 = scmp.eq.s32.totalorder %s95, 3
      %p286 = por %p284, %p285
      %p287 = scmp.ne.s32.totalorder %s278, %s279
      %p288 = scmp.eq.s32.totalorder %s95, 0
      %p289 = por %p287, %p288
      %p290 = scmp.ne.s32.totalorder %s278, %s279
      %p291 = scmp.eq.s32.totalorder %s96, 3
      %p292 = por %p290, %p291
      %p294 = scmp.ne.s32.totalorder %s279, %s293
      %p295 = scmp.eq.s32.totalorder %s96, 0
      %p296 = por %p294, %p295
      %s298 = sadd.s32 %s297, 1
      %p301 = scmp.eq.s32.totalorder %s90, 3
      %p302 = scmp.ne.s32.totalorder %s297, %s299
      %p303 = scmp.eq.s32.totalorder %s90, 0
      %p304 = por %p302, %p303
      %p305 = scmp.ne.s32.totalorder %s297, %s299
      %p306 = scmp.eq.s32.totalorder %s95, 3
      %p307 = por %p305, %p306
      %p308 = scmp.ne.s32.totalorder %s299, %s300
      %p309 = scmp.eq.s32.totalorder %s95, 0
      %p310 = por %p308, %p309
      %p311 = scmp.ne.s32.totalorder %s299, %s300
      %p312 = scmp.eq.s32.totalorder %s96, 3
      %p313 = por %p311, %p312
      %p315 = scmp.ne.s32.totalorder %s300, %s314
      %p316 = scmp.eq.s32.totalorder %s96, 0
      %p317 = por %p315, %p316
      %s319 = sadd.s32 %s318, 1
      %p322 = scmp.eq.s32.totalorder %s90, 3
      %p323 = scmp.ne.s32.totalorder %s318, %s320
      %p324 = scmp.eq.s32.totalorder %s90, 0
      %p325 = por %p323, %p324
      %p326 = scmp.ne.s32.totalorder %s318, %s320
      %p327 = scmp.eq.s32.totalorder %s95, 3
      %p328 = por %p326, %p327
      %p329 = scmp.ne.s32.totalorder %s320, %s321
      %p330 = scmp.eq.s32.totalorder %s95, 0
      %p331 = por %p329, %p330
      %p332 = scmp.ne.s32.totalorder %s320, %s321
      %p333 = scmp.eq.s32.totalorder %s96, 3
      %p334 = por %p332, %p333
      %p336 = scmp.ne.s32.totalorder %s321, %s335
      %p337 = scmp.eq.s32.totalorder %s96, 0
      %p338 = por %p336, %p337
      %s340 = sadd.s32 %s339, 1
      %p343 = scmp.eq.s32.totalorder %s90, 3
      %p344 = scmp.ne.s32.totalorder %s339, %s341
      %p345 = scmp.eq.s32.totalorder %s90, 0
      %p346 = por %p344, %p345
      %p347 = scmp.ne.s32.totalorder %s339, %s341
      %p348 = scmp.eq.s32.totalorder %s95, 3
      %p349 = por %p347, %p348
      %p350 = scmp.ne.s32.totalorder %s341, %s342
      %p351 = scmp.eq.s32.totalorder %s95, 0
      %p352 = por %p350, %p351
      %p353 = scmp.ne.s32.totalorder %s341, %s342
      %p354 = scmp.eq.s32.totalorder %s96, 3
      %p355 = por %p353, %p354
      %p357 = scmp.ne.s32.totalorder %s342, %s356
      %p358 = scmp.eq.s32.totalorder %s96, 0
      %p359 = por %p357, %p358
      %s361 = sadd.s32 %s360, 1
      %p364 = scmp.eq.s32.totalorder %s90, 3
      %p365 = scmp.ne.s32.totalorder %s360, %s362
      %p366 = scmp.eq.s32.totalorder %s90, 0
      %p367 = por %p365, %p366
      %p368 = scmp.ne.s32.totalorder %s360, %s362
      %p369 = scmp.eq.s32.totalorder %s95, 3
      %p370 = por %p368, %p369
      %p371 = scmp.ne.s32.totalorder %s362, %s363
      %p372 = scmp.eq.s32.totalorder %s95, 0
      %p373 = por %p371, %p372
      %p374 = scmp.ne.s32.totalorder %s362, %s363
      %p375 = scmp.eq.s32.totalorder %s96, 3
      %p376 = por %p374, %p375
      %p378 = scmp.ne.s32.totalorder %s363, %s377
      %p379 = scmp.eq.s32.totalorder %s96, 0
      %p380 = por %p378, %p379
      %s382 = sadd.s32 %s381, 1
      %p385 = scmp.eq.s32.totalorder %s90, 3
      %p386 = scmp.ne.s32.totalorder %s381, %s383
      %p387 = scmp.eq.s32.totalorder %s90, 0
      %p388 = por %p386, %p387
      %p389 = scmp.ne.s32.totalorder %s381, %s383
      %p390 = scmp.eq.s32.totalorder %s95, 3
      %p391 = por %p389, %p390
      %p392 = scmp.ne.s32.totalorder %s383, %s384
      %p393 = scmp.eq.s32.totalorder %s95, 0
      %p394 = por %p392, %p393
      %p395 = scmp.ne.s32.totalorder %s383, %s384
      %p396 = scmp.eq.s32.totalorder %s96, 3
      %p397 = por %p395, %p396
      %p399 = scmp.ne.s32.totalorder %s384, %s398
      %p400 = scmp.eq.s32.totalorder %s96, 0
      %p401 = por %p399, %p400
      %s403 = sadd.s32 %s402, 1
      %p406 = scmp.eq.s32.totalorder %s90, 3
      %p407 = scmp.ne.s32.totalorder %s402, %s404
      %p408 = scmp.eq.s32.totalorder %s90, 0
      %p409 = por %p407, %p408
      %p410 = scmp.ne.s32.totalorder %s402, %s404
      %p411 = scmp.eq.s32.totalorder %s95, 3
      %p412 = por %p410, %p411
      %p413 = scmp.ne.s32.totalorder %s404, %s405
      %p414 = scmp.eq.s32.totalorder %s95, 0
      %p415 = por %p413, %p414
      %p416 = scmp.ne.s32.totalorder %s404, %s405
      %p417 = scmp.eq.s32.totalorder %s96, 3
      %p418 = por %p416, %p417
      %p420 = scmp.ne.s32.totalorder %s405, %s419
      %p421 = scmp.eq.s32.totalorder %s96, 0
      %p422 = por %p420, %p421
      %s424 = sadd.s32 %s423, 1
      %p427 = scmp.eq.s32.totalorder %s90, 3
      %p428 = scmp.ne.s32.totalorder %s423, %s425
      %p429 = scmp.eq.s32.totalorder %s90, 0
      %p430 = por %p428, %p429
      %p431 = scmp.ne.s32.totalorder %s423, %s425
      %p432 = scmp.eq.s32.totalorder %s95, 3
      %p433 = por %p431, %p432
      %p434 = scmp.ne.s32.totalorder %s425, %s426
      %p435 = scmp.eq.s32.totalorder %s95, 0
      %p436 = por %p434, %p435
      %p437 = scmp.ne.s32.totalorder %s425, %s426
      %p438 = scmp.eq.s32.totalorder %s96, 3
      %p439 = por %p437, %p438
      %p441 = scmp.ne.s32.totalorder %s426, %s440
      %p442 = scmp.eq.s32.totalorder %s96, 0
      %p443 = por %p441, %p442
      %s445 = sadd.s32 %s444, 1
      %p448 = scmp.eq.s32.totalorder %s90, 3
      %p449 = scmp.ne.s32.totalorder %s444, %s446
      %p450 = scmp.eq.s32.totalorder %s90, 0
      %p451 = por %p449, %p450
      %p452 = scmp.ne.s32.totalorder %s444, %s446
      %p453 = scmp.eq.s32.totalorder %s95, 3
      %p454 = por %p452, %p453
      %p455 = scmp.ne.s32.totalorder %s446, %s447
      %p456 = scmp.eq.s32.totalorder %s95, 0
      %p457 = por %p455, %p456
      %p458 = scmp.ne.s32.totalorder %s446, %s447
      %p459 = scmp.eq.s32.totalorder %s96, 3
      %p460 = por %p458, %p459
      %p462 = scmp.ne.s32.totalorder %s447, %s461
      %p463 = scmp.eq.s32.totalorder %s96, 0
      %p464 = por %p462, %p463
      %s466 = sadd.s32 %s465, 1
      %p469 = scmp.eq.s32.totalorder %s90, 3
      %p470 = scmp.ne.s32.totalorder %s465, %s467
      %p471 = scmp.eq.s32.totalorder %s90, 0
      %p472 = por %p470, %p471
      %p473 = scmp.ne.s32.totalorder %s465, %s467
      %p474 = scmp.eq.s32.totalorder %s95, 3
      %p475 = por %p473, %p474
      %p476 = scmp.ne.s32.totalorder %s467, %s468
      %p477 = scmp.eq.s32.totalorder %s95, 0
      %p478 = por %p476, %p477
      %p479 = scmp.ne.s32.totalorder %s467, %s468
      %p480 = scmp.eq.s32.totalorder %s96, 3
      %p481 = por %p479, %p480
      %p483 = scmp.ne.s32.totalorder %s468, %s482
      %p484 = scmp.eq.s32.totalorder %s96, 0
      %p485 = por %p483, %p484
      %s487 = sadd.s32 %s486, 1
      %p490 = scmp.eq.s32.totalorder %s90, 3
      %p491 = scmp.ne.s32.totalorder %s486, %s488
      %p492 = scmp.eq.s32.totalorder %s90, 0
      %p493 = por %p491, %p492
      %p494 = scmp.ne.s32.totalorder %s486, %s488
      %p495 = scmp.eq.s32.totalorder %s95, 3
      %p496 = por %p494, %p495
      %p497 = scmp.ne.s32.totalorder %s488, %s489
      %p498 = scmp.eq.s32.totalorder %s95, 0
      %p499 = por %p497, %p498
      %p500 = scmp.ne.s32.totalorder %s488, %s489
      %p501 = scmp.eq.s32.totalorder %s96, 3
      %p502 = por %p500, %p501
      %p504 = scmp.ne.s32.totalorder %s489, %s503
      %p505 = scmp.eq.s32.totalorder %s96, 0
      %p506 = por %p504, %p505
      %s508 = sadd.s32 %s507, 1
      %p511 = scmp.eq.s32.totalorder %s90, 3
      %p512 = scmp.ne.s32.totalorder %s507, %s509
      %p513 = scmp.eq.s32.totalorder %s90, 0
      %p514 = por %p512, %p513
      %p515 = scmp.ne.s32.totalorder %s507, %s509
      %p516 = scmp.eq.s32.totalorder %s95, 3
      %p517 = por %p515, %p516
      %p518 = scmp.ne.s32.totalorder %s509, %s510
      %p519 = scmp.eq.s32.totalorder %s95, 0
      %p520 = por %p518, %p519
      %p521 = scmp.ne.s32.totalorder %s509, %s510
      %p522 = scmp.eq.s32.totalorder %s96, 3
      %p523 = por %p521, %p522
      %p525 = scmp.ne.s32.totalorder %s510, %s524
      %p526 = scmp.eq.s32.totalorder %s96, 0
      %p527 = por %p525, %p526
      %s529 = sadd.s32 %s528, 1
      %p532 = scmp.eq.s32.totalorder %s90, 3
      %p533 = scmp.ne.s32.totalorder %s528, %s530
      %p534 = scmp.eq.s32.totalorder %s90, 0
      %p535 = por %p533, %p534
      %p536 = scmp.ne.s32.totalorder %s528, %s530
      %p537 = scmp.eq.s32.totalorder %s95, 3
      %p538 = por %p536, %p537
      %p539 = scmp.ne.s32.totalorder %s530, %s531
      %p540 = scmp.eq.s32.totalorder %s95, 0
      %p541 = por %p539, %p540
      %p542 = scmp.ne.s32.totalorder %s530, %s531
      %p543 = scmp.eq.s32.totalorder %s96, 3
      %p544 = por %p542, %p543
      %p546 = scmp.ne.s32.totalorder %s531, %s545
      %p547 = scmp.eq.s32.totalorder %s96, 0
      %p548 = por %p546, %p547
      %s550 = sadd.s32 %s549, 1
      %p553 = scmp.eq.s32.totalorder %s90, 3
      %p554 = scmp.ne.s32.totalorder %s549, %s551
      %p555 = scmp.eq.s32.totalorder %s90, 0
      %p556 = por %p554, %p555
      %p557 = scmp.ne.s32.totalorder %s549, %s551
      %p558 = scmp.eq.s32.totalorder %s95, 3
      %p559 = por %p557, %p558
      %p560 = scmp.ne.s32.totalorder %s551, %s552
      %p561 = scmp.eq.s32.totalorder %s95, 0
      %p562 = por %p560, %p561
      %p563 = scmp.ne.s32.totalorder %s551, %s552
      %p564 = scmp.eq.s32.totalorder %s96, 3
      %p565 = por %p563, %p564
      %p567 = scmp.ne.s32.totalorder %s552, %s566
      %p568 = scmp.eq.s32.totalorder %s96, 0
      %p569 = por %p567, %p568
      %s571 = sadd.s32 %s570, 1
      %p574 = scmp.eq.s32.totalorder %s90, 3
      %p575 = scmp.ne.s32.totalorder %s570, %s572
      %p576 = scmp.eq.s32.totalorder %s90, 0
      %p577 = por %p575, %p576
      %p578 = scmp.ne.s32.totalorder %s570, %s572
      %p579 = scmp.eq.s32.totalorder %s95, 3
      %p580 = por %p578, %p579
      %p581 = scmp.ne.s32.totalorder %s572, %s573
      %p582 = scmp.eq.s32.totalorder %s95, 0
      %p583 = por %p581, %p582
      %p584 = scmp.ne.s32.totalorder %s572, %s573
      %p585 = scmp.eq.s32.totalorder %s96, 3
      %p586 = por %p584, %p585
      %p588 = scmp.ne.s32.totalorder %s573, %s587
      %p589 = scmp.eq.s32.totalorder %s96, 0
      %p590 = por %p588, %p589
      %s592 = sadd.s32 %s591, 1
      %p595 = scmp.eq.s32.totalorder %s90, 3
      %p596 = scmp.ne.s32.totalorder %s591, %s593
      %p597 = scmp.eq.s32.totalorder %s90, 0
      %p598 = por %p596, %p597
      %p599 = scmp.ne.s32.totalorder %s591, %s593
      %p600 = scmp.eq.s32.totalorder %s95, 3
      %p601 = por %p599, %p600
      %p602 = scmp.ne.s32.totalorder %s593, %s594
      %p603 = scmp.eq.s32.totalorder %s95, 0
      %p604 = por %p602, %p603
      %p605 = scmp.ne.s32.totalorder %s593, %s594
      %p606 = scmp.eq.s32.totalorder %s96, 3
      %p607 = por %p605, %p606
      %p609 = scmp.ne.s32.totalorder %s594, %s608
      %p610 = scmp.eq.s32.totalorder %s96, 0
      %p611 = por %p609, %p610
      %s613 = sadd.s32 %s612, 1
      %p616 = scmp.eq.s32.totalorder %s90, 3
      %p617 = scmp.ne.s32.totalorder %s612, %s614
      %p618 = scmp.eq.s32.totalorder %s90, 0
      %p619 = por %p617, %p618
      %p620 = scmp.ne.s32.totalorder %s612, %s614
      %p621 = scmp.eq.s32.totalorder %s95, 3
      %p622 = por %p620, %p621
      %p623 = scmp.ne.s32.totalorder %s614, %s615
      %p624 = scmp.eq.s32.totalorder %s95, 0
      %p625 = por %p623, %p624
      %p626 = scmp.ne.s32.totalorder %s614, %s615
      %p627 = scmp.eq.s32.totalorder %s96, 3
      %p628 = por %p626, %p627
      %p630 = scmp.ne.s32.totalorder %s615, %s629
      %p631 = scmp.eq.s32.totalorder %s96, 0
      %p632 = por %p630, %p631
      %s634 = sadd.s32 %s633, 1
      %p637 = scmp.eq.s32.totalorder %s90, 3
      %p638 = scmp.ne.s32.totalorder %s633, %s635
      %p639 = scmp.eq.s32.totalorder %s90, 0
      %p640 = por %p638, %p639
      %p641 = scmp.ne.s32.totalorder %s633, %s635
      %p642 = scmp.eq.s32.totalorder %s95, 3
      %p643 = por %p641, %p642
      %p644 = scmp.ne.s32.totalorder %s635, %s636
      %p645 = scmp.eq.s32.totalorder %s95, 0
      %p646 = por %p644, %p645
      %p647 = scmp.ne.s32.totalorder %s635, %s636
      %p648 = scmp.eq.s32.totalorder %s96, 3
      %p649 = por %p647, %p648
      %p651 = scmp.ne.s32.totalorder %s636, %s650
      %p652 = scmp.eq.s32.totalorder %s96, 0
      %p653 = por %p651, %p652
      %s655 = sadd.s32 %s654, 1
      %p658 = scmp.eq.s32.totalorder %s90, 3
      %p659 = scmp.ne.s32.totalorder %s654, %s656
      %p660 = scmp.eq.s32.totalorder %s90, 0
      %p661 = por %p659, %p660
      %p662 = scmp.ne.s32.totalorder %s654, %s656
      %p663 = scmp.eq.s32.totalorder %s95, 3
      %p664 = por %p662, %p663
      %p665 = scmp.ne.s32.totalorder %s656, %s657
      %p666 = scmp.eq.s32.totalorder %s95, 0
      %p667 = por %p665, %p666
      %p668 = scmp.ne.s32.totalorder %s656, %s657
      %p669 = scmp.eq.s32.totalorder %s96, 3
      %p670 = por %p668, %p669
      %p672 = scmp.ne.s32.totalorder %s657, %s671
      %p673 = scmp.eq.s32.totalorder %s96, 0
      %p674 = por %p672, %p673
      %s676 = sadd.s32 %s675, 1
      %p679 = scmp.eq.s32.totalorder %s90, 3
      %p680 = scmp.ne.s32.totalorder %s675, %s677
      %p681 = scmp.eq.s32.totalorder %s90, 0
      %p682 = por %p680, %p681
      %p683 = scmp.ne.s32.totalorder %s675, %s677
      %p684 = scmp.eq.s32.totalorder %s95, 3
      %p685 = por %p683, %p684
      %p686 = scmp.ne.s32.totalorder %s677, %s678
      %p687 = scmp.eq.s32.totalorder %s95, 0
      %p688 = por %p686, %p687
      %p689 = scmp.ne.s32.totalorder %s677, %s678
      %p690 = scmp.eq.s32.totalorder %s96, 3
      %p691 = por %p689, %p690
      %p693 = scmp.ne.s32.totalorder %s678, %s692
      %p694 = scmp.eq.s32.totalorder %s96, 0
      %p695 = por %p693, %p694
      %s697 = sadd.s32 %s696, 1
      %p700 = scmp.eq.s32.totalorder %s90, 3
      %p701 = scmp.ne.s32.totalorder %s696, %s698
      %p702 = scmp.eq.s32.totalorder %s90, 0
      %p703 = por %p701, %p702
      %p704 = scmp.ne.s32.totalorder %s696, %s698
      %p705 = scmp.eq.s32.totalorder %s95, 3
      %p706 = por %p704, %p705
      %p707 = scmp.ne.s32.totalorder %s698, %s699
      %p708 = scmp.eq.s32.totalorder %s95, 0
      %p709 = por %p707, %p708
      %p710 = scmp.ne.s32.totalorder %s698, %s699
      %p711 = scmp.eq.s32.totalorder %s96, 3
      %p712 = por %p710, %p711
      %p714 = scmp.ne.s32.totalorder %s699, %s713
      %p715 = scmp.eq.s32.totalorder %s96, 0
      %p716 = por %p714, %p715
      %s718 = sadd.s32 %s717, 1
      %p721 = scmp.eq.s32.totalorder %s90, 3
      %p722 = scmp.ne.s32.totalorder %s717, %s719
      %p723 = scmp.eq.s32.totalorder %s90, 0
      %p724 = por %p722, %p723
      %p725 = scmp.ne.s32.totalorder %s717, %s719
      %p726 = scmp.eq.s32.totalorder %s95, 3
      %p727 = por %p725, %p726
      %p728 = scmp.ne.s32.totalorder %s719, %s720
      %p729 = scmp.eq.s32.totalorder %s95, 0
      %p730 = por %p728, %p729
      %p731 = scmp.ne.s32.totalorder %s719, %s720
      %p732 = scmp.eq.s32.totalorder %s96, 3
      %p733 = por %p731, %p732
      %p735 = scmp.ne.s32.totalorder %s720, %s734
      %p736 = scmp.eq.s32.totalorder %s96, 0
      %p737 = por %p735, %p736
      %s739 = sadd.s32 %s738, 1
      %p742 = scmp.eq.s32.totalorder %s90, 3
      %p743 = scmp.ne.s32.totalorder %s738, %s740
      %p744 = scmp.eq.s32.totalorder %s90, 0
      %p745 = por %p743, %p744
      %p746 = scmp.ne.s32.totalorder %s738, %s740
      %p747 = scmp.eq.s32.totalorder %s95, 3
      %p748 = por %p746, %p747
      %p749 = scmp.ne.s32.totalorder %s740, %s741
      %p750 = scmp.eq.s32.totalorder %s95, 0
      %p751 = por %p749, %p750
      %p752 = scmp.ne.s32.totalorder %s740, %s741
      %p753 = scmp.eq.s32.totalorder %s96, 3
      %p754 = por %p752, %p753
      %p756 = scmp.ne.s32.totalorder %s741, %s755
      %p757 = scmp.eq.s32.totalorder %s96, 0
      %p758 = por %p756, %p757
      %s760 = sadd.s32 %s759, 1
      %p763 = scmp.eq.s32.totalorder %s90, 3
      %p764 = scmp.ne.s32.totalorder %s759, %s761
      %p765 = scmp.eq.s32.totalorder %s90, 0
      %p766 = por %p764, %p765
      %p767 = scmp.ne.s32.totalorder %s759, %s761
      %p768 = scmp.eq.s32.totalorder %s95, 3
      %p769 = por %p767, %p768
      %p770 = scmp.ne.s32.totalorder %s761, %s762
      %p771 = scmp.eq.s32.totalorder %s95, 0
      %p772 = por %p770, %p771
      %p773 = scmp.ne.s32.totalorder %s761, %s762
      %p774 = scmp.eq.s32.totalorder %s96, 3
      %p775 = por %p773, %p774
      %p777 = scmp.ne.s32.totalorder %s762, %s776
      %p778 = scmp.eq.s32.totalorder %s96, 0
      %p779 = por %p777, %p778
      %s781 = sadd.s32 %s780, 1
      %p784 = scmp.eq.s32.totalorder %s90, 3
      %p785 = scmp.ne.s32.totalorder %s780, %s782
      %p786 = scmp.eq.s32.totalorder %s90, 0
      %p787 = por %p785, %p786
      %p788 = scmp.ne.s32.totalorder %s780, %s782
      %p789 = scmp.eq.s32.totalorder %s95, 3
      %p790 = por %p788, %p789
      %p791 = scmp.ne.s32.totalorder %s782, %s783
      %p792 = scmp.eq.s32.totalorder %s95, 0
      %p793 = por %p791, %p792
      %p794 = scmp.ne.s32.totalorder %s782, %s783
      %p795 = scmp.eq.s32.totalorder %s96, 3
      %p796 = por %p794, %p795
      %p798 = scmp.ne.s32.totalorder %s783, %s797
      %p799 = scmp.eq.s32.totalorder %s96, 0
      %p800 = por %p798, %p799
      %s802 = sadd.s32 %s801, 1
      %p805 = scmp.eq.s32.totalorder %s90, 3
      %p806 = scmp.ne.s32.totalorder %s801, %s803
      %p807 = scmp.eq.s32.totalorder %s90, 0
      %p808 = por %p806, %p807
      %p809 = scmp.ne.s32.totalorder %s801, %s803
      %p810 = scmp.eq.s32.totalorder %s95, 3
      %p811 = por %p809, %p810
      %p812 = scmp.ne.s32.totalorder %s803, %s804
      %p813 = scmp.eq.s32.totalorder %s95, 0
      %p814 = por %p812, %p813
      %p815 = scmp.ne.s32.totalorder %s803, %s804
      %p816 = scmp.eq.s32.totalorder %s96, 3
      %p817 = por %p815, %p816
      %p819 = scmp.ne.s32.totalorder %s804, %s818
      %p820 = scmp.eq.s32.totalorder %s96, 0
      %p821 = por %p819, %p820
      %s823 = sadd.s32 %s822, 1
      %p826 = scmp.eq.s32.totalorder %s90, 3
      %p827 = scmp.ne.s32.totalorder %s822, %s824
      %p828 = scmp.eq.s32.totalorder %s90, 0
      %p829 = por %p827, %p828
      %p830 = scmp.ne.s32.totalorder %s822, %s824
      %p831 = scmp.eq.s32.totalorder %s95, 3
      %p832 = por %p830, %p831
      %p833 = scmp.ne.s32.totalorder %s824, %s825
      %p834 = scmp.eq.s32.totalorder %s95, 0
      %p835 = por %p833, %p834
      %p836 = scmp.ne.s32.totalorder %s824, %s825
      %p837 = scmp.eq.s32.totalorder %s96, 3
      %p838 = por %p836, %p837
      %p840 = scmp.ne.s32.totalorder %s825, %s839
      %p841 = scmp.eq.s32.totalorder %s96, 0
      %p842 = por %p840, %p841
      %s844 = sadd.s32 %s843, 1
      %p847 = scmp.eq.s32.totalorder %s90, 3
      %p848 = scmp.ne.s32.totalorder %s843, %s845
      %p849 = scmp.eq.s32.totalorder %s90, 0
      %p850 = por %p848, %p849
      %p851 = scmp.ne.s32.totalorder %s843, %s845
      %p852 = scmp.eq.s32.totalorder %s95, 3
      %p853 = por %p851, %p852
      %p854 = scmp.ne.s32.totalorder %s845, %s846
      %p855 = scmp.eq.s32.totalorder %s95, 0
      %p856 = por %p854, %p855
      %p857 = scmp.ne.s32.totalorder %s845, %s846
      %p858 = scmp.eq.s32.totalorder %s96, 3
      %p859 = por %p857, %p858
      %p861 = scmp.ne.s32.totalorder %s846, %s860
      %p862 = scmp.eq.s32.totalorder %s96, 0
      %p863 = por %p861, %p862
      %s864 = ssub.s32 %s90, %s97
      %p865 = scmp.eq.s32.totalorder %s864, 0
      %s867 = sadd.s32 %s866, 1
      %s868 = scalar_select %p865, %s866, %s867
      %p871 = pneg %p865
      %p872 = scmp.eq.s32.totalorder %s90, 3
      %p873 = por %p871, %p872
      %p874 = scmp.ne.s32.totalorder %s866, %s869
      %p875 = scmp.eq.s32.totalorder %s90, 0
      %p876 = por %p874, %p875
      %p877 = scmp.ne.s32.totalorder %s866, %s869
      %p878 = scmp.eq.s32.totalorder %s95, 3
      %p879 = por %p877, %p878
      %p880 = scmp.ne.s32.totalorder %s869, %s870
      %p881 = scmp.eq.s32.totalorder %s95, 0
      %p882 = por %p880, %p881
      %p883 = scmp.ne.s32.totalorder %s869, %s870
      %p884 = scmp.eq.s32.totalorder %s96, 3
      %p885 = por %p883, %p884
      %p887 = scmp.ne.s32.totalorder %s870, %s886
      %p888 = scmp.eq.s32.totalorder %s96, 0
      %p889 = por %p887, %p888
      %s890 = ssub.s32 %s90, %s97
      %p891 = scmp.eq.s32.totalorder %s890, 0
      %s893 = sadd.s32 %s892, 1
      %s894 = scalar_select %p891, %s892, %s893
      %p897 = pneg %p891
      %p898 = scmp.eq.s32.totalorder %s90, 3
      %p899 = por %p897, %p898
      %p900 = scmp.ne.s32.totalorder %s892, %s895
      %p901 = scmp.eq.s32.totalorder %s90, 0
      %p902 = por %p900, %p901
      %p903 = scmp.ne.s32.totalorder %s892, %s895
      %p904 = scmp.eq.s32.totalorder %s95, 3
      %p905 = por %p903, %p904
      %p906 = scmp.ne.s32.totalorder %s895, %s896
      %p907 = scmp.eq.s32.totalorder %s95, 0
      %p908 = por %p906, %p907
      %p909 = scmp.ne.s32.totalorder %s895, %s896
      %p910 = scmp.eq.s32.totalorder %s96, 3
      %p911 = por %p909, %p910
      %p913 = scmp.ne.s32.totalorder %s896, %s912
      %p914 = scmp.eq.s32.totalorder %s96, 0
      %p915 = por %p913, %p914
      %s916 = ssub.s32 %s90, %s97
      %p917 = scmp.eq.s32.totalorder %s916, 0
      %s919 = sadd.s32 %s918, 1
      %s920 = scalar_select %p917, %s918, %s919
      %p923 = pneg %p917
      %p924 = scmp.eq.s32.totalorder %s90, 3
      %p925 = por %p923, %p924
      %p926 = scmp.ne.s32.totalorder %s918, %s921
      %p927 = scmp.eq.s32.totalorder %s90, 0
      %p928 = por %p926, %p927
      %p929 = scmp.ne.s32.totalorder %s918, %s921
      %p930 = scmp.eq.s32.totalorder %s95, 3
      %p931 = por %p929, %p930
      %p932 = scmp.ne.s32.totalorder %s921, %s922
      %p933 = scmp.eq.s32.totalorder %s95, 0
      %p934 = por %p932, %p933
      %p935 = scmp.ne.s32.totalorder %s921, %s922
      %p936 = scmp.eq.s32.totalorder %s96, 3
      %p937 = por %p935, %p936
      %p939 = scmp.ne.s32.totalorder %s922, %s938
      %p940 = scmp.eq.s32.totalorder %s96, 0
      %p941 = por %p939, %p940
      %p942 = scmp.le.s32.totalorder 1, %s90
      %p943 = scmp.lt.s32.totalorder %s90, 5
      %p944 = pnand %p942, %p943
      %p945 = pneg %p944
      // Predicated region
      $region9: #{vae_forward.1} parent=5 // pred_check
        _
      $region10: #{vae_forward.1} parent=5 // pred_check_branch
        %947 = sbr.rel (%p944) target = $region12
      $region11: #{vae_forward.1} parent=5 // pred_region
        %s948 = ssub.s32 %s90, 1
        // Predicated region
        $region13: #{vae_forward.1} parent=11 // pred_check
          %p949 = pneg %p163
        $region14: #{vae_forward.1} parent=11 // pred_check_branch
          %951 = sbr.rel (%p949) target = $region16
        $region15: #{vae_forward.1} parent=11 // pred_region
          _
        $region16: #{vae_forward.1} parent=11 // pred_fallthru
          _
        // Predicated region
        $region17: #{vae_forward.1} parent=11 // pred_check
          %p952 = pneg %p184
        $region18: #{vae_forward.1} parent=11 // pred_check_branch
          %954 = sbr.rel (%p952) target = $region20
        $region19: #{vae_forward.1} parent=11 // pred_region
          _
        $region20: #{vae_forward.1} parent=11 // pred_fallthru
          _
        // Predicated region
        $region21: #{vae_forward.1} parent=11 // pred_check
          %p955 = pneg %p205
        $region22: #{vae_forward.1} parent=11 // pred_check_branch
          %957 = sbr.rel (%p955) target = $region24
        $region23: #{vae_forward.1} parent=11 // pred_region
          _
        $region24: #{vae_forward.1} parent=11 // pred_fallthru
          _
        // Predicated region
        $region25: #{vae_forward.1} parent=11 // pred_check
          %p958 = pneg %p226
        $region26: #{vae_forward.1} parent=11 // pred_check_branch
          %960 = sbr.rel (%p958) target = $region28
        $region27: #{vae_forward.1} parent=11 // pred_region
          _
        $region28: #{vae_forward.1} parent=11 // pred_fallthru
          _
        // Predicated region
        $region29: #{vae_forward.1} parent=11 // pred_check
          %p961 = pneg %p247
        $region30: #{vae_forward.1} parent=11 // pred_check_branch
          %963 = sbr.rel (%p961) target = $region32
        $region31: #{vae_forward.1} parent=11 // pred_region
          _
        $region32: #{vae_forward.1} parent=11 // pred_fallthru
          _
        // Predicated region
        $region33: #{vae_forward.1} parent=11 // pred_check
          %p964 = pneg %p268
        $region34: #{vae_forward.1} parent=11 // pred_check_branch
          %966 = sbr.rel (%p964) target = $region36
        $region35: #{vae_forward.1} parent=11 // pred_region
          _
        $region36: #{vae_forward.1} parent=11 // pred_fallthru
          _
        // Predicated region
        $region37: #{vae_forward.1} parent=11 // pred_check
          %p967 = pneg %p289
        $region38: #{vae_forward.1} parent=11 // pred_check_branch
          %969 = sbr.rel (%p967) target = $region40
        $region39: #{vae_forward.1} parent=11 // pred_region
          _
        $region40: #{vae_forward.1} parent=11 // pred_fallthru
          _
        // Predicated region
        $region41: #{vae_forward.1} parent=11 // pred_check
          %p970 = pneg %p310
        $region42: #{vae_forward.1} parent=11 // pred_check_branch
          %972 = sbr.rel (%p970) target = $region44
        $region43: #{vae_forward.1} parent=11 // pred_region
          _
        $region44: #{vae_forward.1} parent=11 // pred_fallthru
          _
        // Predicated region
        $region45: #{vae_forward.1} parent=11 // pred_check
          %p973 = pneg %p331
        $region46: #{vae_forward.1} parent=11 // pred_check_branch
          %975 = sbr.rel (%p973) target = $region48
        $region47: #{vae_forward.1} parent=11 // pred_region
          _
        $region48: #{vae_forward.1} parent=11 // pred_fallthru
          _
        // Predicated region
        $region49: #{vae_forward.1} parent=11 // pred_check
          %p976 = pneg %p352
        $region50: #{vae_forward.1} parent=11 // pred_check_branch
          %978 = sbr.rel (%p976) target = $region52
        $region51: #{vae_forward.1} parent=11 // pred_region
          _
        $region52: #{vae_forward.1} parent=11 // pred_fallthru
          _
        // Predicated region
        $region53: #{vae_forward.1} parent=11 // pred_check
          %p979 = pneg %p373
        $region54: #{vae_forward.1} parent=11 // pred_check_branch
          %981 = sbr.rel (%p979) target = $region56
        $region55: #{vae_forward.1} parent=11 // pred_region
          _
        $region56: #{vae_forward.1} parent=11 // pred_fallthru
          _
        // Predicated region
        $region57: #{vae_forward.1} parent=11 // pred_check
          %p982 = pneg %p394
        $region58: #{vae_forward.1} parent=11 // pred_check_branch
          %984 = sbr.rel (%p982) target = $region60
        $region59: #{vae_forward.1} parent=11 // pred_region
          _
        $region60: #{vae_forward.1} parent=11 // pred_fallthru
          _
        // Predicated region
        $region61: #{vae_forward.1} parent=11 // pred_check
          %p985 = pneg %p415
        $region62: #{vae_forward.1} parent=11 // pred_check_branch
          %987 = sbr.rel (%p985) target = $region64
        $region63: #{vae_forward.1} parent=11 // pred_region
          _
        $region64: #{vae_forward.1} parent=11 // pred_fallthru
          _
        // Predicated region
        $region65: #{vae_forward.1} parent=11 // pred_check
          %p988 = pneg %p436
        $region66: #{vae_forward.1} parent=11 // pred_check_branch
          %990 = sbr.rel (%p988) target = $region68
        $region67: #{vae_forward.1} parent=11 // pred_region
          _
        $region68: #{vae_forward.1} parent=11 // pred_fallthru
          _
        // Predicated region
        $region69: #{vae_forward.1} parent=11 // pred_check
          %p991 = pneg %p457
        $region70: #{vae_forward.1} parent=11 // pred_check_branch
          %993 = sbr.rel (%p991) target = $region72
        $region71: #{vae_forward.1} parent=11 // pred_region
          _
        $region72: #{vae_forward.1} parent=11 // pred_fallthru
          _
        // Predicated region
        $region73: #{vae_forward.1} parent=11 // pred_check
          %p994 = pneg %p478
        $region74: #{vae_forward.1} parent=11 // pred_check_branch
          %996 = sbr.rel (%p994) target = $region76
        $region75: #{vae_forward.1} parent=11 // pred_region
          _
        $region76: #{vae_forward.1} parent=11 // pred_fallthru
          _
        // Predicated region
        $region77: #{vae_forward.1} parent=11 // pred_check
          %p997 = pneg %p499
        $region78: #{vae_forward.1} parent=11 // pred_check_branch
          %999 = sbr.rel (%p997) target = $region80
        $region79: #{vae_forward.1} parent=11 // pred_region
          _
        $region80: #{vae_forward.1} parent=11 // pred_fallthru
          _
        // Predicated region
        $region81: #{vae_forward.1} parent=11 // pred_check
          %p1000 = pneg %p520
        $region82: #{vae_forward.1} parent=11 // pred_check_branch
          %1002 = sbr.rel (%p1000) target = $region84
        $region83: #{vae_forward.1} parent=11 // pred_region
          _
        $region84: #{vae_forward.1} parent=11 // pred_fallthru
          _
        // Predicated region
        $region85: #{vae_forward.1} parent=11 // pred_check
          %p1003 = pneg %p541
        $region86: #{vae_forward.1} parent=11 // pred_check_branch
          %1005 = sbr.rel (%p1003) target = $region88
        $region87: #{vae_forward.1} parent=11 // pred_region
          _
        $region88: #{vae_forward.1} parent=11 // pred_fallthru
          _
        // Predicated region
        $region89: #{vae_forward.1} parent=11 // pred_check
          %p1006 = pneg %p562
        $region90: #{vae_forward.1} parent=11 // pred_check_branch
          %1008 = sbr.rel (%p1006) target = $region92
        $region91: #{vae_forward.1} parent=11 // pred_region
          _
        $region92: #{vae_forward.1} parent=11 // pred_fallthru
          _
        // Predicated region
        $region93: #{vae_forward.1} parent=11 // pred_check
          %p1009 = pneg %p583
        $region94: #{vae_forward.1} parent=11 // pred_check_branch
          %1011 = sbr.rel (%p1009) target = $region96
        $region95: #{vae_forward.1} parent=11 // pred_region
          _
        $region96: #{vae_forward.1} parent=11 // pred_fallthru
          _
        // Predicated region
        $region97: #{vae_forward.1} parent=11 // pred_check
          %p1012 = pneg %p604
        $region98: #{vae_forward.1} parent=11 // pred_check_branch
          %1014 = sbr.rel (%p1012) target = $region100
        $region99: #{vae_forward.1} parent=11 // pred_region
          _
        $region100: #{vae_forward.1} parent=11 // pred_fallthru
          _
        // Predicated region
        $region101: #{vae_forward.1} parent=11 // pred_check
          %p1015 = pneg %p625
        $region102: #{vae_forward.1} parent=11 // pred_check_branch
          %1017 = sbr.rel (%p1015) target = $region104
        $region103: #{vae_forward.1} parent=11 // pred_region
          _
        $region104: #{vae_forward.1} parent=11 // pred_fallthru
          _
        // Predicated region
        $region105: #{vae_forward.1} parent=11 // pred_check
          %p1018 = pneg %p646
        $region106: #{vae_forward.1} parent=11 // pred_check_branch
          %1020 = sbr.rel (%p1018) target = $region108
        $region107: #{vae_forward.1} parent=11 // pred_region
          _
        $region108: #{vae_forward.1} parent=11 // pred_fallthru
          _
        // Predicated region
        $region109: #{vae_forward.1} parent=11 // pred_check
          %p1021 = pneg %p667
        $region110: #{vae_forward.1} parent=11 // pred_check_branch
          %1023 = sbr.rel (%p1021) target = $region112
        $region111: #{vae_forward.1} parent=11 // pred_region
          _
        $region112: #{vae_forward.1} parent=11 // pred_fallthru
          _
        // Predicated region
        $region113: #{vae_forward.1} parent=11 // pred_check
          %p1024 = pneg %p688
        $region114: #{vae_forward.1} parent=11 // pred_check_branch
          %1026 = sbr.rel (%p1024) target = $region116
        $region115: #{vae_forward.1} parent=11 // pred_region
          _
        $region116: #{vae_forward.1} parent=11 // pred_fallthru
          _
        // Predicated region
        $region117: #{vae_forward.1} parent=11 // pred_check
          %p1027 = pneg %p709
        $region118: #{vae_forward.1} parent=11 // pred_check_branch
          %1029 = sbr.rel (%p1027) target = $region120
        $region119: #{vae_forward.1} parent=11 // pred_region
          _
        $region120: #{vae_forward.1} parent=11 // pred_fallthru
          _
        // Predicated region
        $region121: #{vae_forward.1} parent=11 // pred_check
          %p1030 = pneg %p730
        $region122: #{vae_forward.1} parent=11 // pred_check_branch
          %1032 = sbr.rel (%p1030) target = $region124
        $region123: #{vae_forward.1} parent=11 // pred_region
          _
        $region124: #{vae_forward.1} parent=11 // pred_fallthru
          _
        // Predicated region
        $region125: #{vae_forward.1} parent=11 // pred_check
          %p1033 = pneg %p751
        $region126: #{vae_forward.1} parent=11 // pred_check_branch
          %1035 = sbr.rel (%p1033) target = $region128
        $region127: #{vae_forward.1} parent=11 // pred_region
          _
        $region128: #{vae_forward.1} parent=11 // pred_fallthru
          _
        // Predicated region
        $region129: #{vae_forward.1} parent=11 // pred_check
          %p1036 = pneg %p772
        $region130: #{vae_forward.1} parent=11 // pred_check_branch
          %1038 = sbr.rel (%p1036) target = $region132
        $region131: #{vae_forward.1} parent=11 // pred_region
          _
        $region132: #{vae_forward.1} parent=11 // pred_fallthru
          _
        // Predicated region
        $region133: #{vae_forward.1} parent=11 // pred_check
          %p1039 = pneg %p793
        $region134: #{vae_forward.1} parent=11 // pred_check_branch
          %1041 = sbr.rel (%p1039) target = $region136
        $region135: #{vae_forward.1} parent=11 // pred_region
          _
        $region136: #{vae_forward.1} parent=11 // pred_fallthru
          _
        // Predicated region
        $region137: #{vae_forward.1} parent=11 // pred_check
          %p1042 = pneg %p814
        $region138: #{vae_forward.1} parent=11 // pred_check_branch
          %1044 = sbr.rel (%p1042) target = $region140
        $region139: #{vae_forward.1} parent=11 // pred_region
          _
        $region140: #{vae_forward.1} parent=11 // pred_fallthru
          _
        // Predicated region
        $region141: #{vae_forward.1} parent=11 // pred_check
          %p1045 = pneg %p835
        $region142: #{vae_forward.1} parent=11 // pred_check_branch
          %1047 = sbr.rel (%p1045) target = $region144
        $region143: #{vae_forward.1} parent=11 // pred_region
          _
        $region144: #{vae_forward.1} parent=11 // pred_fallthru
          _
        // Predicated region
        $region145: #{vae_forward.1} parent=11 // pred_check
          %p1048 = pneg %p856
        $region146: #{vae_forward.1} parent=11 // pred_check_branch
          %1050 = sbr.rel (%p1048) target = $region148
        $region147: #{vae_forward.1} parent=11 // pred_region
          _
        $region148: #{vae_forward.1} parent=11 // pred_fallthru
          _
      $region12: #{vae_forward.1} parent=5 // pred_fallthru
        _
      %p1051 = scmp.lt.s32.totalorder %s90, 4
      // Predicated region
      $region149: #{vae_forward.1} parent=5 // pred_check
        %p1052 = pneg %p1051
      $region150: #{vae_forward.1} parent=5 // pred_check_branch
        %1054 = sbr.rel (%p1052) target = $region152
      $region151: #{vae_forward.1} parent=5 // pred_region
        // Predicated region
        $region153: #{vae_forward.1} parent=151 // pred_check
          %p1055 = pneg %p110
        $region154: #{vae_forward.1} parent=151 // pred_check_branch
          %1057 = sbr.rel (%p1055) target = $region156
        $region155: #{vae_forward.1} parent=151 // pred_region
          %p1058 = scmp.lt.s32.totalorder %s90, 3
          %s1059 = scalar_select %p1058, %s90, 3
          %s1060 = smul.addr %s1059, 5
          %s1061 = smul.addr %s1060, 8
          %s1062 = scalar_lea.vmem %s1, %s1061
        $region156: #{vae_forward.1} parent=151 // pred_fallthru
          _
        // Predicated region
        $region157: #{vae_forward.1} parent=151 // pred_check
          %p1063 = pneg %p136
        $region158: #{vae_forward.1} parent=151 // pred_check_branch
          %1065 = sbr.rel (%p1063) target = $region160
        $region159: #{vae_forward.1} parent=151 // pred_region
          %p1066 = scmp.lt.s32.totalorder %s90, 3
          %s1067 = scalar_select %p1066, %s90, 3
          %s1068 = smul.addr %s1067, 8
          %s1069 = scalar_lea.vmem %s3, %s1068
        $region160: #{vae_forward.1} parent=151 // pred_fallthru
          _
      $region152: #{vae_forward.1} parent=5 // pred_fallthru
        _
      %p1070 = scmp.le.s32.totalorder 1, %s90
      %p1071 = scmp.lt.s32.totalorder %s90, 5
      %p1072 = pnand %p1070, %p1071
      %p1073 = pneg %p1072
      // Predicated region
      $region161: #{vae_forward.1} parent=5 // pred_check
        _
      $region162: #{vae_forward.1} parent=5 // pred_check_branch
        %1075 = sbr.rel (%p1072) target = $region164
      $region163: #{vae_forward.1} parent=5 // pred_region
        %s1076 = ssub.s32 %s90, 1
        %p1077 = scmp.lt.s32.totalorder %s95, 3
        %s1078 = scalar_select %p1077, %s95, 3
        %s1079 = smul.addr %s1078, 5
        %s1080 = smul.addr %s1079, 8
        %s1081 = scalar_lea.vmem %s1, %s1080
        %p1082 = pneg %p116
        %p1083 = pneg %p113
        %p1084 = scmp.lt.s32.totalorder %s95, 3
        %s1085 = scalar_select %p1084, %s95, 3
        %s1086 = smul.addr %s1085, 8
        %s1087 = scalar_lea.vmem %s3, %s1086
        %p1088 = pneg %p142
        %p1089 = pneg %p139
        %p1090 = pneg %p163
        %p1091 = pneg %p160
        %p1092 = pneg %p184
        %p1093 = pneg %p181
        %p1094 = pneg %p205
        %p1095 = pneg %p202
        %p1096 = pneg %p226
        %p1097 = pneg %p223
        %p1098 = pneg %p247
        %p1099 = pneg %p244
        %p1100 = pneg %p268
        %p1101 = pneg %p265
        %p1102 = pneg %p289
        %p1103 = pneg %p286
        %p1104 = pneg %p310
        %p1105 = pneg %p307
        %p1106 = pneg %p331
        %p1107 = pneg %p328
        %p1108 = pneg %p352
        %p1109 = pneg %p349
        %p1110 = pneg %p373
        %p1111 = pneg %p370
        %p1112 = pneg %p394
        %p1113 = pneg %p391
        %p1114 = pneg %p415
        %p1115 = pneg %p412
        %p1116 = pneg %p436
        %p1117 = pneg %p433
        %p1118 = pneg %p457
        %p1119 = pneg %p454
        %p1120 = pneg %p478
        %p1121 = pneg %p475
        %p1122 = pneg %p499
        %p1123 = pneg %p496
        %p1124 = pneg %p520
        %p1125 = pneg %p517
        %p1126 = pneg %p541
        %p1127 = pneg %p538
        %p1128 = pneg %p562
        %p1129 = pneg %p559
        %p1130 = pneg %p583
        %p1131 = pneg %p580
        %p1132 = pneg %p604
        %p1133 = pneg %p601
        %p1134 = pneg %p625
        %p1135 = pneg %p622
        %p1136 = pneg %p646
        %p1137 = pneg %p643
        %p1138 = pneg %p667
        %p1139 = pneg %p664
        %p1140 = pneg %p688
        %p1141 = pneg %p685
        %p1142 = pneg %p709
        %p1143 = pneg %p706
        %p1144 = pneg %p730
        %p1145 = pneg %p727
        %p1146 = pneg %p751
        %p1147 = pneg %p748
        %p1148 = pneg %p772
        %p1149 = pneg %p769
        %p1150 = pneg %p793
        %p1151 = pneg %p790
        %p1152 = pneg %p814
        %p1153 = pneg %p811
        %p1154 = pneg %p835
        %p1155 = pneg %p832
        %p1156 = pneg %p856
        %p1157 = pneg %p853
        %p1158 = pneg %p882
        %p1159 = pneg %p879
        %p1160 = scmp.lt.s32.totalorder %s95, 3
        %s1161 = scalar_select %p1160, %s95, 3
        %s1162 = smul.addr %s1161, 8
        %s1163 = scalar_lea.vmem %s73, %s1162
        %p1164 = pneg %p908
        %p1165 = pneg %p905
        %s1166 = sand.u32 %s895, 1
        %s1167 = scalar_lea.sflag [#allocation3], %s1166
        %s1168 = sand.u32 %s895, 1
        %s1169 = smul.addr %s1168, 8
        %s1170 = scalar_lea.vmem [#allocation2], %s1169
        %p1171 = pneg %p934
        %p1172 = pneg %p931
        %s1173 = sand.u32 %s921, 1
        %s1174 = scalar_lea.sflag [#allocation5], %s1173
        %s1175 = sand.u32 %s921, 1
        %s1176 = smul.addr %s1175, 40
        %s1177 = scalar_lea.vmem [#allocation4], %s1176
        %p1178 = scmp.lt.s32.totalorder %s95, 3
        %s1179 = scalar_select %p1178, %s95, 3
        %s1180 = smul.addr %s1179, 5
        %s1181 = smul.addr %s1180, 8
        %s1182 = scalar_lea.vmem %s1, %s1181
        %p1183 = scmp.lt.s32.totalorder %s95, 3
        %s1184 = scalar_select %p1183, %s95, 3
        %s1185 = smul.addr %s1184, 8
        %s1186 = scalar_lea.vmem %s3, %s1185
        %p1187 = scmp.lt.s32.totalorder %s95, 3
        %s1188 = scalar_select %p1187, %s95, 3
        %s1189 = smul.addr %s1188, 8
        %s1190 = scalar_lea.vmem %s73, %s1189
        %v1191 = vld [vmem:[%s1182] sm:$0xff]
        %v1192 = vld [vmem:[%s1182 + $0x8] sm:$0xff]
        %v1193 = vld [vmem:[%s1182 + $0x10] sm:$0xff]
        %v1194 = vld [vmem:[%s1182 + $0x18] sm:$0xff]
        %v1195 = vld [vmem:[%s1182 + $0x20] sm:$0xff]
        %v1196 = vld [vmem:[%s1186] sm:$0xff]
        %v1197 = vpack.c.bf16 %v1191, %v1191
        %v1198 = vpack.c.bf16 %v1192, %v1192
        %v1199 = vpack.c.bf16 %v1193, %v1193
        %v1200 = vpack.c.bf16 %v1194, %v1194
        %v1201 = vpack.c.bf16 %v1195, %v1195
        %v1202 = vld [vmem:[%s5] sm:$0xf]
        %v1203 = vld [vmem:[%s5 + $0x4] sm:$0xf]
        %v1204 = vld [vmem:[%s5 + $0x8] sm:$0xf]
        %v1205 = vld [vmem:[%s5 + $0xc] sm:$0xf]
        %v1206 = vld [vmem:[%s5 + $0x10] sm:$0xf]
        %v1207 = vld [vmem:[%s5 + $0x14] sm:$0xf]
        %v1208 = vld [vmem:[%s5 + $0x18] sm:$0xf]
        %v1209 = vld [vmem:[%s5 + $0x1c] sm:$0xf]
        %v1210 = vld [vmem:[%s5 + $0x20] sm:$0xf]
        %v1211 = vld [vmem:[%s5 + $0x24] sm:$0xf]
        %v1212 = vld [vmem:[%s5 + $0x28] sm:$0xf]
        %v1213 = vld [vmem:[%s5 + $0x2c] sm:$0xf]
        %v1214 = vld [vmem:[%s5 + $0x30] sm:$0xf]
        %v1215 = vld [vmem:[%s5 + $0x34] sm:$0xf]
        %v1216 = vld [vmem:[%s5 + $0x38] sm:$0xf]
        %v1217 = vld [vmem:[%s5 + $0x3c] sm:$0xf]
        %v1218 = vld [vmem:[%s5 + $0x40] sm:$0xf]
        %v1219 = vld [vmem:[%s5 + $0x44] sm:$0xf]
        %v1220 = vld [vmem:[%s5 + $0x48] sm:$0xf]
        %v1221 = vld [vmem:[%s5 + $0x4c] sm:$0xf]
        %v1222 = vld [vmem:[%s5 + $0x50] sm:$0xf]
        %v1223 = vld [vmem:[%s5 + $0x54] sm:$0xf]
        %v1224 = vld [vmem:[%s5 + $0x58] sm:$0xf]
        %v1225 = vld [vmem:[%s5 + $0x5c] sm:$0xf]
        %v1226 = vld [vmem:[%s5 + $0x60] sm:$0xf]
        %v1227 = vld [vmem:[%s5 + $0x64] sm:$0xf]
        %v1228 = vld [vmem:[%s5 + $0x68] sm:$0xf]
        %v1229 = vld [vmem:[%s5 + $0x6c] sm:$0xf]
        %v1230 = vld [vmem:[%s5 + $0x70] sm:$0xf]
        %v1231 = vld [vmem:[%s5 + $0x74] sm:$0xf]
        %v1232 = vld [vmem:[%s5 + $0x78] sm:$0xf]
        %v1233 = vld [vmem:[%s5 + $0x7c] sm:$0xf]
        %v1234 = vld [vmem:[%s5 + $0x80] sm:$0xf]
        %v1235 = vld [vmem:[%s5 + $0x84] sm:$0xf]
        %v1236 = vld [vmem:[%s5 + $0x88] sm:$0xf]
        %v1237 = vld [vmem:[%s5 + $0x8c] sm:$0xf]
        %v1238 = vld [vmem:[%s5 + $0x90] sm:$0xf]
        %v1239 = vld [vmem:[%s5 + $0x94] sm:$0xf]
        %v1240 = vld [vmem:[%s5 + $0x98] sm:$0xf]
        %v1241 = vld [vmem:[%s5 + $0x9c] sm:$0xf]
        %v1242 = vld [vmem:[%s5 + $0xa0] sm:$0xf]
        %v1243 = vld [vmem:[%s5 + $0xa4] sm:$0xf]
        %v1244 = vld [vmem:[%s5 + $0xa8] sm:$0xf]
        %v1245 = vld [vmem:[%s5 + $0xac] sm:$0xf]
        %v1246 = vld [vmem:[%s5 + $0xb0] sm:$0xf]
        %v1247 = vld [vmem:[%s5 + $0xb4] sm:$0xf]
        %v1248 = vld [vmem:[%s5 + $0xb8] sm:$0xf]
        %v1249 = vld [vmem:[%s5 + $0xbc] sm:$0xf]
        %v1250 = vld [vmem:[%s5 + $0xc0] sm:$0xf]
        %v1251 = vld [vmem:[%s5 + $0xc4] sm:$0xf]
        %v1252 = vld [vmem:[%s5 + $0xc8] sm:$0xf]
        %v1253 = vld [vmem:[%s5 + $0xcc] sm:$0xf]
        %v1254 = vld [vmem:[%s5 + $0xd0] sm:$0xf]
        %v1255 = vld [vmem:[%s5 + $0xd4] sm:$0xf]
        %v1256 = vld [vmem:[%s5 + $0xd8] sm:$0xf]
        %v1257 = vld [vmem:[%s5 + $0xdc] sm:$0xf]
        %v1258 = vld [vmem:[%s5 + $0xe0] sm:$0xf]
        %v1259 = vld [vmem:[%s5 + $0xe4] sm:$0xf]
        %v1260 = vld [vmem:[%s5 + $0xe8] sm:$0xf]
        %v1261 = vld [vmem:[%s5 + $0xec] sm:$0xf]
        %v1262 = vld [vmem:[%s5 + $0xf0] sm:$0xf]
        %v1263 = vld [vmem:[%s5 + $0xf4] sm:$0xf]
        %v1264 = vld [vmem:[%s5 + $0xf8] sm:$0xf]
        %v1265 = vld [vmem:[%s5 + $0xfc] sm:$0xf]
        %v1266 = vld [vmem:[%s5 + $0x100] sm:$0xf]
        %v1267 = vld [vmem:[%s5 + $0x104] sm:$0xf]
        %v1268 = vld [vmem:[%s5 + $0x108] sm:$0xf]
        %v1269 = vld [vmem:[%s5 + $0x10c] sm:$0xf]
        %v1270 = vld [vmem:[%s5 + $0x110] sm:$0xf]
        %v1271 = vld [vmem:[%s5 + $0x114] sm:$0xf]
        %v1272 = vld [vmem:[%s5 + $0x118] sm:$0xf]
        %v1273 = vld [vmem:[%s5 + $0x11c] sm:$0xf]
        %v1274 = vld [vmem:[%s5 + $0x120] sm:$0xf]
        %v1275 = vld [vmem:[%s5 + $0x124] sm:$0xf]
        %v1276 = vld [vmem:[%s5 + $0x128] sm:$0xf]
        %v1277 = vld [vmem:[%s5 + $0x12c] sm:$0xf]
        %v1278 = vld [vmem:[%s5 + $0x130] sm:$0xf]
        %v1279 = vld [vmem:[%s5 + $0x134] sm:$0xf]
        %v1280 = vld [vmem:[%s5 + $0x138] sm:$0xf]
        %v1281 = vld [vmem:[%s5 + $0x13c] sm:$0xf]
        %v1282 = vld [vmem:[%s7] sm:$0x1]
        %v1284 = vperm.slane %v1282, 0
        %v1366 = vunpack.c.l.b16 %v1202
        %v1367 = vunpack.c.l.b16 %v1203
        %v1368 = vunpack.c.l.b16 %v1204
        %v1369 = vunpack.c.l.b16 %v1205
        %v1370 = vunpack.c.l.b16 %v1206
        %v1371 = vunpack.c.l.b16 %v1207
        %v1372 = vunpack.c.l.b16 %v1208
        %v1373 = vunpack.c.l.b16 %v1209
        %v1374 = vunpack.c.l.b16 %v1210
        %v1375 = vunpack.c.l.b16 %v1211
        %v1376 = vunpack.c.l.b16 %v1212
        %v1377 = vunpack.c.l.b16 %v1213
        %v1378 = vunpack.c.l.b16 %v1214
        %v1379 = vunpack.c.l.b16 %v1215
        %v1380 = vunpack.c.l.b16 %v1216
        %v1381 = vunpack.c.l.b16 %v1217
        %v1382 = vunpack.c.l.b16 %v1218
        %v1383 = vunpack.c.l.b16 %v1219
        %v1384 = vunpack.c.l.b16 %v1220
        %v1385 = vunpack.c.l.b16 %v1221
        %v1386 = vunpack.c.l.b16 %v1222
        %v1387 = vunpack.c.l.b16 %v1223
        %v1388 = vunpack.c.l.b16 %v1224
        %v1389 = vunpack.c.l.b16 %v1225
        %v1390 = vunpack.c.l.b16 %v1226
        %v1391 = vunpack.c.l.b16 %v1227
        %v1392 = vunpack.c.l.b16 %v1228
        %v1393 = vunpack.c.l.b16 %v1229
        %v1394 = vunpack.c.l.b16 %v1230
        %v1395 = vunpack.c.l.b16 %v1231
        %v1396 = vunpack.c.l.b16 %v1232
        %v1397 = vunpack.c.l.b16 %v1233
        %v1398 = vunpack.c.l.b16 %v1234
        %v1399 = vunpack.c.l.b16 %v1235
        %v1400 = vunpack.c.l.b16 %v1236
        %v1401 = vunpack.c.l.b16 %v1237
        %v1402 = vunpack.c.l.b16 %v1238
        %v1403 = vunpack.c.l.b16 %v1239
        %v1404 = vunpack.c.l.b16 %v1240
        %v1405 = vunpack.c.l.b16 %v1241
        %v1406 = vunpack.c.l.b16 %v1242
        %v1407 = vunpack.c.l.b16 %v1243
        %v1408 = vunpack.c.l.b16 %v1244
        %v1409 = vunpack.c.l.b16 %v1245
        %v1410 = vunpack.c.l.b16 %v1246
        %v1411 = vunpack.c.l.b16 %v1247
        %v1412 = vunpack.c.l.b16 %v1248
        %v1413 = vunpack.c.l.b16 %v1249
        %v1414 = vunpack.c.l.b16 %v1250
        %v1415 = vunpack.c.l.b16 %v1251
        %v1416 = vunpack.c.l.b16 %v1252
        %v1417 = vunpack.c.l.b16 %v1253
        %v1418 = vunpack.c.l.b16 %v1254
        %v1419 = vunpack.c.l.b16 %v1255
        %v1420 = vunpack.c.l.b16 %v1256
        %v1421 = vunpack.c.l.b16 %v1257
        %v1422 = vunpack.c.l.b16 %v1258
        %v1423 = vunpack.c.l.b16 %v1259
        %v1424 = vunpack.c.l.b16 %v1260
        %v1425 = vunpack.c.l.b16 %v1261
        %v1426 = vunpack.c.l.b16 %v1262
        %v1427 = vunpack.c.l.b16 %v1263
        %v1428 = vunpack.c.l.b16 %v1264
        %v1429 = vunpack.c.l.b16 %v1265
        %v1430 = vunpack.c.l.b16 %v1266
        %v1431 = vunpack.c.l.b16 %v1267
        %v1432 = vunpack.c.l.b16 %v1268
        %v1433 = vunpack.c.l.b16 %v1269
        %v1434 = vunpack.c.l.b16 %v1270
        %v1435 = vunpack.c.l.b16 %v1271
        %v1436 = vunpack.c.l.b16 %v1272
        %v1437 = vunpack.c.l.b16 %v1273
        %v1438 = vunpack.c.l.b16 %v1274
        %v1439 = vunpack.c.l.b16 %v1275
        %v1440 = vunpack.c.l.b16 %v1276
        %v1441 = vunpack.c.l.b16 %v1277
        %v1442 = vunpack.c.l.b16 %v1278
        %v1443 = vunpack.c.l.b16 %v1279
        %v1444 = vunpack.c.l.b16 %v1280
        %v1445 = vunpack.c.l.b16 %v1281
        %v1446 = vpack.c.b16 %v1367, %v1366
        %v1447 = vpack.c.b16 %v1369, %v1368
        %v1448 = vpack.c.b16 %v1371, %v1370
        %v1449 = vpack.c.b16 %v1373, %v1372
        %v1450 = vpack.c.b16 %v1375, %v1374
        %v1451 = vpack.c.b16 %v1377, %v1376
        %v1452 = vpack.c.b16 %v1379, %v1378
        %v1453 = vpack.c.b16 %v1381, %v1380
        %v1454 = vpack.c.b16 %v1383, %v1382
        %v1455 = vpack.c.b16 %v1385, %v1384
        %v1456 = vpack.c.b16 %v1387, %v1386
        %v1457 = vpack.c.b16 %v1389, %v1388
        %v1458 = vpack.c.b16 %v1391, %v1390
        %v1459 = vpack.c.b16 %v1393, %v1392
        %v1460 = vpack.c.b16 %v1395, %v1394
        %v1461 = vpack.c.b16 %v1397, %v1396
        %v1462 = vpack.c.b16 %v1399, %v1398
        %v1463 = vpack.c.b16 %v1401, %v1400
        %v1464 = vpack.c.b16 %v1403, %v1402
        %v1465 = vpack.c.b16 %v1405, %v1404
        %v1466 = vpack.c.b16 %v1407, %v1406
        %v1467 = vpack.c.b16 %v1409, %v1408
        %v1468 = vpack.c.b16 %v1411, %v1410
        %v1469 = vpack.c.b16 %v1413, %v1412
        %v1470 = vpack.c.b16 %v1415, %v1414
        %v1471 = vpack.c.b16 %v1417, %v1416
        %v1472 = vpack.c.b16 %v1419, %v1418
        %v1473 = vpack.c.b16 %v1421, %v1420
        %v1474 = vpack.c.b16 %v1423, %v1422
        %v1475 = vpack.c.b16 %v1425, %v1424
        %v1476 = vpack.c.b16 %v1427, %v1426
        %v1477 = vpack.c.b16 %v1429, %v1428
        %v1478 = vpack.c.b16 %v1431, %v1430
        %v1479 = vpack.c.b16 %v1433, %v1432
        %v1480 = vpack.c.b16 %v1435, %v1434
        %v1481 = vpack.c.b16 %v1437, %v1436
        %v1482 = vpack.c.b16 %v1439, %v1438
        %v1483 = vpack.c.b16 %v1441, %v1440
        %v1484 = vpack.c.b16 %v1443, %v1442
        %v1485 = vpack.c.b16 %v1445, %v1444
        %1526 = vmatpush.bf16.msra.mxu0 %v1453
        %1527 = vmatpush.bf16.msra.mxu0 %v1452
        %1528 = vmatpush.bf16.msra.mxu0 %v1451
        %1529 = vmatpush.bf16.msra.mxu0 %v1450
        %1530 = vmatpush.bf16.msra.mxu0 %v1449
        %1531 = vmatpush.bf16.msra.mxu0 %v1448
        %1532 = vmatpush.bf16.msra.mxu0 %v1447
        %1533 = vmatpush.bf16.msra.mxu0 %v1446
        %1534 = vmatmul.bf16.gmra.mxu0 %v1197
        %v1535 = vpop.f32.mrf.mxu0
        %v1536 = vadd.f32 %v1284, %v1535
        %v1537 = vpop.f32.mrf.mxu0
        %1538 = vdwg.mxu0
        %1539 = vmatpush.bf16.msra.mxu0 %v1461
        %1540 = vmatpush.bf16.msra.mxu0 %v1460
        %1541 = vmatpush.bf16.msra.mxu0 %v1459
        %1542 = vmatpush.bf16.msra.mxu0 %v1458
        %1543 = vmatpush.bf16.msra.mxu0 %v1457
        %1544 = vmatpush.bf16.msra.mxu0 %v1456
        %1545 = vmatpush.bf16.msra.mxu0 %v1455
        %1546 = vmatpush.bf16.msra.mxu0 %v1454
        %1547 = vmatmul.bf16.gmra.mxu0 %v1198
        %v1548 = vpop.f32.mrf.mxu0
        %v1549 = vadd.f32 %v1536, %v1548
        %v1550 = vpop.f32.mrf.mxu0
        %1551 = vdwg.mxu0
        %1552 = vmatpush.bf16.msra.mxu0 %v1469
        %1553 = vmatpush.bf16.msra.mxu0 %v1468
        %1554 = vmatpush.bf16.msra.mxu0 %v1467
        %1555 = vmatpush.bf16.msra.mxu0 %v1466
        %1556 = vmatpush.bf16.msra.mxu0 %v1465
        %1557 = vmatpush.bf16.msra.mxu0 %v1464
        %1558 = vmatpush.bf16.msra.mxu0 %v1463
        %1559 = vmatpush.bf16.msra.mxu0 %v1462
        %1560 = vmatmul.bf16.gmra.mxu0 %v1199
        %v1561 = vpop.f32.mrf.mxu0
        %v1562 = vadd.f32 %v1549, %v1561
        %v1563 = vpop.f32.mrf.mxu0
        %1564 = vdwg.mxu0
        %1565 = vmatpush.bf16.msra.mxu0 %v1477
        %1566 = vmatpush.bf16.msra.mxu0 %v1476
        %1567 = vmatpush.bf16.msra.mxu0 %v1475
        %1568 = vmatpush.bf16.msra.mxu0 %v1474
        %1569 = vmatpush.bf16.msra.mxu0 %v1473
        %1570 = vmatpush.bf16.msra.mxu0 %v1472
        %1571 = vmatpush.bf16.msra.mxu0 %v1471
        %1572 = vmatpush.bf16.msra.mxu0 %v1470
        %1573 = vmatmul.bf16.gmra.mxu0 %v1200
        %v1574 = vpop.f32.mrf.mxu0
        %v1575 = vadd.f32 %v1562, %v1574
        %v1576 = vpop.f32.mrf.mxu0
        %1577 = vdwg.mxu0
        %1578 = vmatpush.bf16.msra.mxu0 %v1485
        %1579 = vmatpush.bf16.msra.mxu0 %v1484
        %1580 = vmatpush.bf16.msra.mxu0 %v1483
        %1581 = vmatpush.bf16.msra.mxu0 %v1482
        %1582 = vmatpush.bf16.msra.mxu0 %v1481
        %1583 = vmatpush.bf16.msra.mxu0 %v1480
        %1584 = vmatpush.bf16.msra.mxu0 %v1479
        %1585 = vmatpush.bf16.msra.mxu0 %v1478
        %1586 = vmatmul.bf16.gmra.mxu0 %v1201
        %v1587 = vpop.f32.mrf.mxu0
        %v1588 = vadd.f32 %v1575, %v1587
        %v1589 = vpop.f32.mrf.mxu0
        %1590 = vdwg.mxu0
        %v1591 = vrot.slane %v1588, 4
        %v1592 = vadd.f32 %v1588, %v1591
        %v1593 = vrot.slane %v1592, 2
        %v1594 = vadd.f32 %v1592, %v1593
        %v1595 = vrot.slane %v1594, 1
        %v1596 = vadd.f32 %v1594, %v1595
        %v1597 = vmul.f32 %v1588, %v1588
        %v1598 = vrot.slane %v1597, 4
        %v1599 = vadd.f32 %v1597, %v1598
        %v1600 = vrot.slane %v1599, 2
        %v1601 = vadd.f32 %v1599, %v1600
        %v1602 = vrot.slane %v1601, 1
        %v1603 = vadd.f32 %v1601, %v1602
        %v1604 = vmul.f32 %v1596, 0.125
        %v1605 = vmul.f32 %v1603, 0.125
        %v1606 = vmul.f32 %v1604, %v1604
        %v1607 = vsub.f32 %v1605, %v1606
        %v1608 = vld [vmem:[%s9] sm:$0x1]
        %v1609 = vadd.f32 %v1607, 1e-05
        %v1610 = vrsqrt.pop %v1609
        %v1611 = vmul.f32 %v1610, %v1609
        %v1612 = vmul.f32 %v1611, %v1610
        %v1613 = vmul.f32 0.5, %v1612
        %v1614 = vsub.f32 1.5, %v1613
        %v1615 = vmul.f32 %v1610, %v1614
        %vm1616 = vweird.f32 %v1609
        %vm1617 = vweird.f32 %v1610
        %vm1618 = vmor %vm1616, %vm1617
        %v1619 = vsel %vm1618, %v1610, %v1615
        %v1620 = vmul.f32 %v1608, %v1619
        %v1621 = vld [vmem:[%s11] sm:$0x1]
        %v1622 = vmul.f32 %v1604, %v1620
        %v1623 = vsub.f32 %v1621, %v1622
        %v1625 = vperm.slane %v1620, 0
        %v1627 = vmul.f32 %v1588, %v1625
        %v1629 = vperm.slane %v1623, 0
        %v1631 = vadd.f32 %v1627, %v1629
        %v1632 = vmax.f32 %v1631, 0.0
        %v1633 = vpack.c.bf16 %v1632, %v1632
        %v1634 = vld [vmem:[%s13] sm:$0xf]
        %v1635 = vld [vmem:[%s13 + $0x4] sm:$0xf]
        %v1636 = vld [vmem:[%s13 + $0x8] sm:$0xf]
        %v1637 = vld [vmem:[%s13 + $0xc] sm:$0xf]
        %v1638 = vld [vmem:[%s13 + $0x10] sm:$0xf]
        %v1639 = vld [vmem:[%s13 + $0x14] sm:$0xf]
        %v1640 = vld [vmem:[%s13 + $0x18] sm:$0xf]
        %v1641 = vld [vmem:[%s13 + $0x1c] sm:$0xf]
        %v1642 = vld [vmem:[%s13 + $0x20] sm:$0xf]
        %v1643 = vld [vmem:[%s13 + $0x24] sm:$0xf]
        %v1644 = vld [vmem:[%s13 + $0x28] sm:$0xf]
        %v1645 = vld [vmem:[%s13 + $0x2c] sm:$0xf]
        %v1646 = vld [vmem:[%s13 + $0x30] sm:$0xf]
        %v1647 = vld [vmem:[%s13 + $0x34] sm:$0xf]
        %v1648 = vld [vmem:[%s13 + $0x38] sm:$0xf]
        %v1649 = vld [vmem:[%s13 + $0x3c] sm:$0xf]
        %v1650 = vld [vmem:[%s15] sm:$0x1]
        %v1652 = vperm.slane %v1650, 0
        %v1670 = vunpack.c.l.b16 %v1634
        %v1671 = vunpack.c.l.b16 %v1635
        %v1672 = vunpack.c.l.b16 %v1636
        %v1673 = vunpack.c.l.b16 %v1637
        %v1674 = vunpack.c.l.b16 %v1638
        %v1675 = vunpack.c.l.b16 %v1639
        %v1676 = vunpack.c.l.b16 %v1640
        %v1677 = vunpack.c.l.b16 %v1641
        %v1678 = vunpack.c.l.b16 %v1642
        %v1679 = vunpack.c.l.b16 %v1643
        %v1680 = vunpack.c.l.b16 %v1644
        %v1681 = vunpack.c.l.b16 %v1645
        %v1682 = vunpack.c.l.b16 %v1646
        %v1683 = vunpack.c.l.b16 %v1647
        %v1684 = vunpack.c.l.b16 %v1648
        %v1685 = vunpack.c.l.b16 %v1649
        %v1686 = vpack.c.b16 %v1671, %v1670
        %v1687 = vpack.c.b16 %v1673, %v1672
        %v1688 = vpack.c.b16 %v1675, %v1674
        %v1689 = vpack.c.b16 %v1677, %v1676
        %v1690 = vpack.c.b16 %v1679, %v1678
        %v1691 = vpack.c.b16 %v1681, %v1680
        %v1692 = vpack.c.b16 %v1683, %v1682
        %v1693 = vpack.c.b16 %v1685, %v1684
        %1702 = vmatpush.bf16.msra.mxu0 %v1693
        %1703 = vmatpush.bf16.msra.mxu0 %v1692
        %1704 = vmatpush.bf16.msra.mxu0 %v1691
        %1705 = vmatpush.bf16.msra.mxu0 %v1690
        %1706 = vmatpush.bf16.msra.mxu0 %v1689
        %1707 = vmatpush.bf16.msra.mxu0 %v1688
        %1708 = vmatpush.bf16.msra.mxu0 %v1687
        %1709 = vmatpush.bf16.msra.mxu0 %v1686
        %1710 = vmatmul.bf16.gmra.mxu0 %v1633
        %v1711 = vpop.f32.mrf.mxu0
        %v1712 = vadd.f32 %v1652, %v1711
        %v1713 = vpop.f32.mrf.mxu0
        %1714 = vdwg.mxu0
        %v1715 = vrot.slane %v1712, 4
        %v1716 = vadd.f32 %v1712, %v1715
        %v1717 = vrot.slane %v1716, 2
        %v1718 = vadd.f32 %v1716, %v1717
        %v1719 = vrot.slane %v1718, 1
        %v1720 = vadd.f32 %v1718, %v1719
        %v1721 = vmul.f32 %v1712, %v1712
        %v1722 = vrot.slane %v1721, 4
        %v1723 = vadd.f32 %v1721, %v1722
        %v1724 = vrot.slane %v1723, 2
        %v1725 = vadd.f32 %v1723, %v1724
        %v1726 = vrot.slane %v1725, 1
        %v1727 = vadd.f32 %v1725, %v1726
        %v1728 = vmul.f32 %v1720, 0.125
        %v1729 = vmul.f32 %v1727, 0.125
        %v1730 = vmul.f32 %v1728, %v1728
        %v1731 = vsub.f32 %v1729, %v1730
        %v1732 = vld [vmem:[%s17] sm:$0x1]
        %v1733 = vadd.f32 %v1731, 1e-05
        %v1734 = vrsqrt.pop %v1733
        %v1735 = vmul.f32 %v1734, %v1733
        %v1736 = vmul.f32 %v1735, %v1734
        %v1737 = vmul.f32 0.5, %v1736
        %v1738 = vsub.f32 1.5, %v1737
        %v1739 = vmul.f32 %v1734, %v1738
        %vm1740 = vweird.f32 %v1733
        %vm1741 = vweird.f32 %v1734
        %vm1742 = vmor %vm1740, %vm1741
        %v1743 = vsel %vm1742, %v1734, %v1739
        %v1744 = vmul.f32 %v1732, %v1743
        %v1745 = vld [vmem:[%s19] sm:$0x1]
        %v1746 = vmul.f32 %v1728, %v1744
        %v1747 = vsub.f32 %v1745, %v1746
        %v1749 = vperm.slane %v1744, 0
        %v1751 = vmul.f32 %v1712, %v1749
        %v1753 = vperm.slane %v1747, 0
        %v1755 = vadd.f32 %v1751, %v1753
        %v1756 = vmax.f32 %v1755, 0.0
        %v1757 = vpack.c.bf16 %v1756, %v1756
        %v1758 = vld [vmem:[%s21] sm:$0xf]
        %v1759 = vld [vmem:[%s21 + $0x4] sm:$0xf]
        %v1760 = vld [vmem:[%s21 + $0x8] sm:$0xf]
        %v1761 = vld [vmem:[%s21 + $0xc] sm:$0xf]
        %v1762 = vld [vmem:[%s21 + $0x10] sm:$0xf]
        %v1763 = vld [vmem:[%s21 + $0x14] sm:$0xf]
        %v1764 = vld [vmem:[%s21 + $0x18] sm:$0xf]
        %v1765 = vld [vmem:[%s21 + $0x1c] sm:$0xf]
        %v1766 = vld [vmem:[%s21 + $0x20] sm:$0xf]
        %v1767 = vld [vmem:[%s21 + $0x24] sm:$0xf]
        %v1768 = vld [vmem:[%s21 + $0x28] sm:$0xf]
        %v1769 = vld [vmem:[%s21 + $0x2c] sm:$0xf]
        %v1770 = vld [vmem:[%s21 + $0x30] sm:$0xf]
        %v1771 = vld [vmem:[%s21 + $0x34] sm:$0xf]
        %v1772 = vld [vmem:[%s21 + $0x38] sm:$0xf]
        %v1773 = vld [vmem:[%s21 + $0x3c] sm:$0xf]
        %v1774 = vld [vmem:[%s23] sm:$0x1]
        %v1776 = vperm.slane %v1774, 0
        %v1794 = vunpack.c.l.b16 %v1758
        %v1795 = vunpack.c.l.b16 %v1759
        %v1796 = vunpack.c.l.b16 %v1760
        %v1797 = vunpack.c.l.b16 %v1761
        %v1798 = vunpack.c.l.b16 %v1762
        %v1799 = vunpack.c.l.b16 %v1763
        %v1800 = vunpack.c.l.b16 %v1764
        %v1801 = vunpack.c.l.b16 %v1765
        %v1802 = vunpack.c.l.b16 %v1766
        %v1803 = vunpack.c.l.b16 %v1767
        %v1804 = vunpack.c.l.b16 %v1768
        %v1805 = vunpack.c.l.b16 %v1769
        %v1806 = vunpack.c.l.b16 %v1770
        %v1807 = vunpack.c.l.b16 %v1771
        %v1808 = vunpack.c.l.b16 %v1772
        %v1809 = vunpack.c.l.b16 %v1773
        %v1810 = vpack.c.b16 %v1795, %v1794
        %v1811 = vpack.c.b16 %v1797, %v1796
        %v1812 = vpack.c.b16 %v1799, %v1798
        %v1813 = vpack.c.b16 %v1801, %v1800
        %v1814 = vpack.c.b16 %v1803, %v1802
        %v1815 = vpack.c.b16 %v1805, %v1804
        %v1816 = vpack.c.b16 %v1807, %v1806
        %v1817 = vpack.c.b16 %v1809, %v1808
        %1826 = vmatpush.bf16.msra.mxu0 %v1817
        %1827 = vmatpush.bf16.msra.mxu0 %v1816
        %1828 = vmatpush.bf16.msra.mxu0 %v1815
        %1829 = vmatpush.bf16.msra.mxu0 %v1814
        %1830 = vmatpush.bf16.msra.mxu0 %v1813
        %1831 = vmatpush.bf16.msra.mxu0 %v1812
        %1832 = vmatpush.bf16.msra.mxu0 %v1811
        %1833 = vmatpush.bf16.msra.mxu0 %v1810
        %1834 = vmatmul.bf16.gmra.mxu0 %v1757
        %v1835 = vpop.f32.mrf.mxu0
        %v1836 = vadd.f32 %v1776, %v1835
        %v1837 = vpop.f32.mrf.mxu0
        %1838 = vdwg.mxu0
        %v1839 = vrot.slane %v1836, 4
        %v1840 = vadd.f32 %v1836, %v1839
        %v1841 = vrot.slane %v1840, 2
        %v1842 = vadd.f32 %v1840, %v1841
        %v1843 = vrot.slane %v1842, 1
        %v1844 = vadd.f32 %v1842, %v1843
        %v1845 = vmul.f32 %v1836, %v1836
        %v1846 = vrot.slane %v1845, 4
        %v1847 = vadd.f32 %v1845, %v1846
        %v1848 = vrot.slane %v1847, 2
        %v1849 = vadd.f32 %v1847, %v1848
        %v1850 = vrot.slane %v1849, 1
        %v1851 = vadd.f32 %v1849, %v1850
        %v1852 = vmul.f32 %v1844, 0.125
        %v1853 = vmul.f32 %v1851, 0.125
        %v1854 = vmul.f32 %v1852, %v1852
        %v1855 = vsub.f32 %v1853, %v1854
        %v1856 = vld [vmem:[%s25] sm:$0x1]
        %v1857 = vadd.f32 %v1855, 1e-05
        %v1858 = vrsqrt.pop %v1857
        %v1859 = vmul.f32 %v1858, %v1857
        %v1860 = vmul.f32 %v1859, %v1858
        %v1861 = vmul.f32 0.5, %v1860
        %v1862 = vsub.f32 1.5, %v1861
        %v1863 = vmul.f32 %v1858, %v1862
        %vm1864 = vweird.f32 %v1857
        %vm1865 = vweird.f32 %v1858
        %vm1866 = vmor %vm1864, %vm1865
        %v1867 = vsel %vm1866, %v1858, %v1863
        %v1868 = vmul.f32 %v1856, %v1867
        %v1869 = vld [vmem:[%s27] sm:$0x1]
        %v1870 = vmul.f32 %v1852, %v1868
        %v1871 = vsub.f32 %v1869, %v1870
        %v1873 = vperm.slane %v1868, 0
        %v1875 = vmul.f32 %v1836, %v1873
        %v1877 = vperm.slane %v1871, 0
        %v1879 = vadd.f32 %v1875, %v1877
        %v1880 = vmax.f32 %v1879, 0.0
        %v1881 = vpack.c.bf16 %v1880, %v1880
        %v1882 = vld [vmem:[%s29] sm:$0xf]
        %v1883 = vld [vmem:[%s29 + $0x4] sm:$0xf]
        %v1884 = vld [vmem:[%s29 + $0x8] sm:$0xf]
        %v1885 = vld [vmem:[%s29 + $0xc] sm:$0xf]
        %v1886 = vld [vmem:[%s29 + $0x10] sm:$0xf]
        %v1887 = vld [vmem:[%s29 + $0x14] sm:$0xf]
        %v1888 = vld [vmem:[%s29 + $0x18] sm:$0xf]
        %v1889 = vld [vmem:[%s29 + $0x1c] sm:$0xf]
        %v1890 = vld [vmem:[%s29 + $0x20] sm:$0xf]
        %v1891 = vld [vmem:[%s29 + $0x24] sm:$0xf]
        %v1892 = vld [vmem:[%s29 + $0x28] sm:$0xf]
        %v1893 = vld [vmem:[%s29 + $0x2c] sm:$0xf]
        %v1894 = vld [vmem:[%s29 + $0x30] sm:$0xf]
        %v1895 = vld [vmem:[%s29 + $0x34] sm:$0xf]
        %v1896 = vld [vmem:[%s29 + $0x38] sm:$0xf]
        %v1897 = vld [vmem:[%s29 + $0x3c] sm:$0xf]
        %v1898 = vld [vmem:[%s31] sm:$0x1]
        %v1900 = vperm.slane %v1898, 0
        %v1918 = vunpack.c.l.b16 %v1882
        %v1919 = vunpack.c.l.b16 %v1883
        %v1920 = vunpack.c.l.b16 %v1884
        %v1921 = vunpack.c.l.b16 %v1885
        %v1922 = vunpack.c.l.b16 %v1886
        %v1923 = vunpack.c.l.b16 %v1887
        %v1924 = vunpack.c.l.b16 %v1888
        %v1925 = vunpack.c.l.b16 %v1889
        %v1926 = vunpack.c.l.b16 %v1890
        %v1927 = vunpack.c.l.b16 %v1891
        %v1928 = vunpack.c.l.b16 %v1892
        %v1929 = vunpack.c.l.b16 %v1893
        %v1930 = vunpack.c.l.b16 %v1894
        %v1931 = vunpack.c.l.b16 %v1895
        %v1932 = vunpack.c.l.b16 %v1896
        %v1933 = vunpack.c.l.b16 %v1897
        %v1934 = vpack.c.b16 %v1919, %v1918
        %v1935 = vpack.c.b16 %v1921, %v1920
        %v1936 = vpack.c.b16 %v1923, %v1922
        %v1937 = vpack.c.b16 %v1925, %v1924
        %v1938 = vpack.c.b16 %v1927, %v1926
        %v1939 = vpack.c.b16 %v1929, %v1928
        %v1940 = vpack.c.b16 %v1931, %v1930
        %v1941 = vpack.c.b16 %v1933, %v1932
        %1950 = vmatpush.bf16.msra.mxu0 %v1941
        %1951 = vmatpush.bf16.msra.mxu0 %v1940
        %1952 = vmatpush.bf16.msra.mxu0 %v1939
        %1953 = vmatpush.bf16.msra.mxu0 %v1938
        %1954 = vmatpush.bf16.msra.mxu0 %v1937
        %1955 = vmatpush.bf16.msra.mxu0 %v1936
        %1956 = vmatpush.bf16.msra.mxu0 %v1935
        %1957 = vmatpush.bf16.msra.mxu0 %v1934
        %1958 = vmatmul.bf16.gmra.mxu0 %v1881
        %v1959 = vpop.f32.mrf.mxu0
        %v1960 = vadd.f32 %v1900, %v1959
        %v1961 = vpop.f32.mrf.mxu0
        %1962 = vdwg.mxu0
        %v1963 = vrot.slane %v1960, 4
        %v1964 = vadd.f32 %v1960, %v1963
        %v1965 = vrot.slane %v1964, 2
        %v1966 = vadd.f32 %v1964, %v1965
        %v1967 = vrot.slane %v1966, 1
        %v1968 = vadd.f32 %v1966, %v1967
        %v1969 = vmul.f32 %v1960, %v1960
        %v1970 = vrot.slane %v1969, 4
        %v1971 = vadd.f32 %v1969, %v1970
        %v1972 = vrot.slane %v1971, 2
        %v1973 = vadd.f32 %v1971, %v1972
        %v1974 = vrot.slane %v1973, 1
        %v1975 = vadd.f32 %v1973, %v1974
        %v1976 = vmul.f32 %v1968, 0.125
        %v1977 = vmul.f32 %v1975, 0.125
        %v1978 = vmul.f32 %v1976, %v1976
        %v1979 = vsub.f32 %v1977, %v1978
        %v1980 = vld [vmem:[%s33] sm:$0x1]
        %v1981 = vadd.f32 %v1979, 1e-05
        %v1982 = vrsqrt.pop %v1981
        %v1983 = vmul.f32 %v1982, %v1981
        %v1984 = vmul.f32 %v1983, %v1982
        %v1985 = vmul.f32 0.5, %v1984
        %v1986 = vsub.f32 1.5, %v1985
        %v1987 = vmul.f32 %v1982, %v1986
        %vm1988 = vweird.f32 %v1981
        %vm1989 = vweird.f32 %v1982
        %vm1990 = vmor %vm1988, %vm1989
        %v1991 = vsel %vm1990, %v1982, %v1987
        %v1992 = vmul.f32 %v1980, %v1991
        %v1993 = vld [vmem:[%s35] sm:$0x1]
        %v1994 = vmul.f32 %v1976, %v1992
        %v1995 = vsub.f32 %v1993, %v1994
        %v1997 = vperm.slane %v1992, 0
        %v1999 = vmul.f32 %v1960, %v1997
        %v2001 = vperm.slane %v1995, 0
        %v2003 = vadd.f32 %v1999, %v2001
        %v2004 = vmax.f32 %v2003, 0.0
        %v2005 = vpack.c.bf16 %v2004, %v2004
        %v2006 = vld [vmem:[%s37] sm:$0xff]
        %v2007 = vld [vmem:[%s37 + $0x8] sm:$0xff]
        %v2008 = vld [vmem:[%s37 + $0x10] sm:$0xff]
        %v2009 = vld [vmem:[%s37 + $0x18] sm:$0xff]
        %v2010 = vld [vmem:[%s37 + $0x20] sm:$0xff]
        %v2011 = vld [vmem:[%s37 + $0x28] sm:$0xff]
        %v2012 = vld [vmem:[%s37 + $0x30] sm:$0xff]
        %v2013 = vld [vmem:[%s37 + $0x38] sm:$0xff]
        %v2014 = vld [vmem:[%s37 + $0x40] sm:$0xff]
        %v2015 = vld [vmem:[%s37 + $0x48] sm:$0xff]
        %v2016 = vld [vmem:[%s37 + $0x50] sm:$0xff]
        %v2017 = vld [vmem:[%s37 + $0x58] sm:$0xff]
        %v2018 = vld [vmem:[%s37 + $0x60] sm:$0xff]
        %v2019 = vld [vmem:[%s37 + $0x68] sm:$0xff]
        %v2020 = vld [vmem:[%s37 + $0x70] sm:$0xff]
        %v2021 = vld [vmem:[%s37 + $0x78] sm:$0xff]
        %v2022 = vld [vmem:[%s39] sm:$0x3]
        %v2024 = vperm.slane %v2022, 0
        %v2025 = vperm.slane %v2022, 1
        %v2044 = vunpack.c.l.b16 %v2006
        %v2045 = vunpack.c.h.b16 %v2006
        %v2046 = vunpack.c.l.b16 %v2007
        %v2047 = vunpack.c.h.b16 %v2007
        %v2048 = vunpack.c.l.b16 %v2008
        %v2049 = vunpack.c.h.b16 %v2008
        %v2050 = vunpack.c.l.b16 %v2009
        %v2051 = vunpack.c.h.b16 %v2009
        %v2052 = vunpack.c.l.b16 %v2010
        %v2053 = vunpack.c.h.b16 %v2010
        %v2054 = vunpack.c.l.b16 %v2011
        %v2055 = vunpack.c.h.b16 %v2011
        %v2056 = vunpack.c.l.b16 %v2012
        %v2057 = vunpack.c.h.b16 %v2012
        %v2058 = vunpack.c.l.b16 %v2013
        %v2059 = vunpack.c.h.b16 %v2013
        %v2060 = vunpack.c.l.b16 %v2014
        %v2061 = vunpack.c.h.b16 %v2014
        %v2062 = vunpack.c.l.b16 %v2015
        %v2063 = vunpack.c.h.b16 %v2015
        %v2064 = vunpack.c.l.b16 %v2016
        %v2065 = vunpack.c.h.b16 %v2016
        %v2066 = vunpack.c.l.b16 %v2017
        %v2067 = vunpack.c.h.b16 %v2017
        %v2068 = vunpack.c.l.b16 %v2018
        %v2069 = vunpack.c.h.b16 %v2018
        %v2070 = vunpack.c.l.b16 %v2019
        %v2071 = vunpack.c.h.b16 %v2019
        %v2072 = vunpack.c.l.b16 %v2020
        %v2073 = vunpack.c.h.b16 %v2020
        %v2074 = vunpack.c.l.b16 %v2021
        %v2075 = vunpack.c.h.b16 %v2021
        %v2076 = vpack.c.b16 %v2046, %v2044
        %v2077 = vpack.c.b16 %v2047, %v2045
        %v2078 = vpack.c.b16 %v2050, %v2048
        %v2079 = vpack.c.b16 %v2051, %v2049
        %v2080 = vpack.c.b16 %v2054, %v2052
        %v2081 = vpack.c.b16 %v2055, %v2053
        %v2082 = vpack.c.b16 %v2058, %v2056
        %v2083 = vpack.c.b16 %v2059, %v2057
        %v2084 = vpack.c.b16 %v2062, %v2060
        %v2085 = vpack.c.b16 %v2063, %v2061
        %v2086 = vpack.c.b16 %v2066, %v2064
        %v2087 = vpack.c.b16 %v2067, %v2065
        %v2088 = vpack.c.b16 %v2070, %v2068
        %v2089 = vpack.c.b16 %v2071, %v2069
        %v2090 = vpack.c.b16 %v2074, %v2072
        %v2091 = vpack.c.b16 %v2075, %v2073
        %2108 = vmatpush.bf16.msra.mxu0 %v2090
        %2109 = vmatpush.bf16.msra.mxu0 %v2088
        %2110 = vmatpush.bf16.msra.mxu0 %v2086
        %2111 = vmatpush.bf16.msra.mxu0 %v2084
        %2112 = vmatpush.bf16.msra.mxu0 %v2082
        %2113 = vmatpush.bf16.msra.mxu0 %v2080
        %2114 = vmatpush.bf16.msra.mxu0 %v2078
        %2115 = vmatpush.bf16.msra.mxu0 %v2076
        %2116 = vmatmul.bf16.gmra.mxu0 %v2005
        %v2117 = vpop.f32.mrf.mxu0
        %v2118 = vadd.f32 %v2024, %v2117
        %v2119 = vpop.f32.mrf.mxu0
        %2120 = vdwg.mxu0
        %2121 = vmatpush.bf16.msra.mxu0 %v2091
        %2122 = vmatpush.bf16.msra.mxu0 %v2089
        %2123 = vmatpush.bf16.msra.mxu0 %v2087
        %2124 = vmatpush.bf16.msra.mxu0 %v2085
        %2125 = vmatpush.bf16.msra.mxu0 %v2083
        %2126 = vmatpush.bf16.msra.mxu0 %v2081
        %2127 = vmatpush.bf16.msra.mxu0 %v2079
        %2128 = vmatpush.bf16.msra.mxu0 %v2077
        %2129 = vmatmul.bf16.gmra.mxu0 %v2005
        %v2130 = vpop.f32.mrf.mxu0
        %v2131 = vadd.f32 %v2025, %v2130
        %v2132 = vpop.f32.mrf.mxu0
        %2133 = vdwg.mxu0
        %v2134 = vlaneseq
        %v2135 = vand.u32 %v2134, 127
        %vm2136 = vcmp.lt.s32.totalorder %v2135, 10
        %v2137 = vadd.f32 %v2131, 1.0
        %v2138 = vmul.f32 %v2118, %v2118
        %v2139 = vsub.f32 %v2137, %v2138
        %v2140 = vadd.f32 %v2131, 1e-08
        %v2141 = vmul.f32 %v2140, 1.442695
        %v2142 = vpow.pop %v2141
        %v2143 = vsub.f32 %v2139, %v2142
        %v2144 = vsel %vm2136, %v2143, 0.0
        %2145 = vadd.xlane.f32.xlu0 %v2144
        %v2146 = vpop.xlane.xlu0 %2145
        %v2147 = vrot.slane %v2146, 4
        %v2148 = vadd.f32 %v2146, %v2147
        %v2149 = vrot.slane %v2148, 2
        %v2150 = vadd.f32 %v2148, %v2149
        %v2151 = vrot.slane %v2150, 1
        %v2152 = vadd.f32 %v2150, %v2151
        %s2153 = vtos %v2152
        %s2154 = smul.f32 %s2153, 0.5
        %v2155 = vmul.f32 %v2131, 0.5
        %v2156 = vadd.f32 %v2155, 1e-08
        %v2157 = vmul.f32 %v2156, 1.442695
        %v2158 = vpow.pop %v2157
        %v2159 = vmul.f32 %v1196, %v2158
        %v2160 = vadd.f32 %v2118, %v2159
        %v2161 = vsel %vm2136, %v2160, 0.0
        %v2162 = vpack.c.bf16 %v2161, %v2161
        %v2163 = vld [vmem:[%s41] sm:$0xf]
        %v2164 = vld [vmem:[%s41 + $0x4] sm:$0xf]
        %v2165 = vld [vmem:[%s41 + $0x8] sm:$0xf]
        %v2166 = vld [vmem:[%s41 + $0xc] sm:$0xf]
        %v2167 = vld [vmem:[%s41 + $0x10] sm:$0xf]
        %v2168 = vld [vmem:[%s41 + $0x14] sm:$0xf]
        %v2169 = vld [vmem:[%s41 + $0x18] sm:$0xf]
        %v2170 = vld [vmem:[%s41 + $0x1c] sm:$0xf]
        %v2171 = vld [vmem:[%s41 + $0x20] sm:$0xf]
        %v2172 = vld [vmem:[%s41 + $0x24] sm:$0xf]
        %v2173 = vld [vmem:[%s41 + $0x28] sm:$0xf]
        %v2174 = vld [vmem:[%s41 + $0x2c] sm:$0xf]
        %v2175 = vld [vmem:[%s41 + $0x30] sm:$0xf]
        %v2176 = vld [vmem:[%s41 + $0x34] sm:$0xf]
        %v2177 = vld [vmem:[%s41 + $0x38] sm:$0xf]
        %v2178 = vld [vmem:[%s41 + $0x3c] sm:$0xf]
        %v2179 = vld [vmem:[%s43] sm:$0x1]
        %v2181 = vperm.slane %v2179, 0
        %v2199 = vunpack.c.l.b16 %v2163
        %v2200 = vunpack.c.l.b16 %v2164
        %v2201 = vunpack.c.l.b16 %v2165
        %v2202 = vunpack.c.l.b16 %v2166
        %v2203 = vunpack.c.l.b16 %v2167
        %v2204 = vunpack.c.l.b16 %v2168
        %v2205 = vunpack.c.l.b16 %v2169
        %v2206 = vunpack.c.l.b16 %v2170
        %v2207 = vunpack.c.l.b16 %v2171
        %v2208 = vunpack.c.l.b16 %v2172
        %v2209 = vunpack.c.l.b16 %v2173
        %v2210 = vunpack.c.l.b16 %v2174
        %v2211 = vunpack.c.l.b16 %v2175
        %v2212 = vunpack.c.l.b16 %v2176
        %v2213 = vunpack.c.l.b16 %v2177
        %v2214 = vunpack.c.l.b16 %v2178
        %v2215 = vpack.c.b16 %v2200, %v2199
        %v2216 = vpack.c.b16 %v2202, %v2201
        %v2217 = vpack.c.b16 %v2204, %v2203
        %v2218 = vpack.c.b16 %v2206, %v2205
        %v2219 = vpack.c.b16 %v2208, %v2207
        %v2220 = vpack.c.b16 %v2210, %v2209
        %v2221 = vpack.c.b16 %v2212, %v2211
        %v2222 = vpack.c.b16 %v2214, %v2213
        %2231 = vmatpush.bf16.msra.mxu0 %v2222
        %2232 = vmatpush.bf16.msra.mxu0 %v2221
        %2233 = vmatpush.bf16.msra.mxu0 %v2220
        %2234 = vmatpush.bf16.msra.mxu0 %v2219
        %2235 = vmatpush.bf16.msra.mxu0 %v2218
        %2236 = vmatpush.bf16.msra.mxu0 %v2217
        %2237 = vmatpush.bf16.msra.mxu0 %v2216
        %2238 = vmatpush.bf16.msra.mxu0 %v2215
        %2239 = vmatmul.bf16.gmra.mxu0 %v2162
        %v2240 = vpop.f32.mrf.mxu0
        %v2241 = vadd.f32 %v2181, %v2240
        %v2242 = vpop.f32.mrf.mxu0
        %2243 = vdwg.mxu0
        %v2244 = vmax.f32 %v2241, 0.0
        %v2245 = vpack.c.bf16 %v2244, %v2244
        %v2246 = vld [vmem:[%s45] sm:$0xf]
        %v2247 = vld [vmem:[%s45 + $0x4] sm:$0xf]
        %v2248 = vld [vmem:[%s45 + $0x8] sm:$0xf]
        %v2249 = vld [vmem:[%s45 + $0xc] sm:$0xf]
        %v2250 = vld [vmem:[%s45 + $0x10] sm:$0xf]
        %v2251 = vld [vmem:[%s45 + $0x14] sm:$0xf]
        %v2252 = vld [vmem:[%s45 + $0x18] sm:$0xf]
        %v2253 = vld [vmem:[%s45 + $0x1c] sm:$0xf]
        %v2254 = vld [vmem:[%s45 + $0x20] sm:$0xf]
        %v2255 = vld [vmem:[%s45 + $0x24] sm:$0xf]
        %v2256 = vld [vmem:[%s45 + $0x28] sm:$0xf]
        %v2257 = vld [vmem:[%s45 + $0x2c] sm:$0xf]
        %v2258 = vld [vmem:[%s45 + $0x30] sm:$0xf]
        %v2259 = vld [vmem:[%s45 + $0x34] sm:$0xf]
        %v2260 = vld [vmem:[%s45 + $0x38] sm:$0xf]
        %v2261 = vld [vmem:[%s45 + $0x3c] sm:$0xf]
        %v2262 = vld [vmem:[%s47] sm:$0x1]
        %v2264 = vperm.slane %v2262, 0
        %v2282 = vunpack.c.l.b16 %v2246
        %v2283 = vunpack.c.l.b16 %v2247
        %v2284 = vunpack.c.l.b16 %v2248
        %v2285 = vunpack.c.l.b16 %v2249
        %v2286 = vunpack.c.l.b16 %v2250
        %v2287 = vunpack.c.l.b16 %v2251
        %v2288 = vunpack.c.l.b16 %v2252
        %v2289 = vunpack.c.l.b16 %v2253
        %v2290 = vunpack.c.l.b16 %v2254
        %v2291 = vunpack.c.l.b16 %v2255
        %v2292 = vunpack.c.l.b16 %v2256
        %v2293 = vunpack.c.l.b16 %v2257
        %v2294 = vunpack.c.l.b16 %v2258
        %v2295 = vunpack.c.l.b16 %v2259
        %v2296 = vunpack.c.l.b16 %v2260
        %v2297 = vunpack.c.l.b16 %v2261
        %v2298 = vpack.c.b16 %v2283, %v2282
        %v2299 = vpack.c.b16 %v2285, %v2284
        %v2300 = vpack.c.b16 %v2287, %v2286
        %v2301 = vpack.c.b16 %v2289, %v2288
        %v2302 = vpack.c.b16 %v2291, %v2290
        %v2303 = vpack.c.b16 %v2293, %v2292
        %v2304 = vpack.c.b16 %v2295, %v2294
        %v2305 = vpack.c.b16 %v2297, %v2296
        %2314 = vmatpush.bf16.msra.mxu0 %v2305
        %2315 = vmatpush.bf16.msra.mxu0 %v2304
        %2316 = vmatpush.bf16.msra.mxu0 %v2303
        %2317 = vmatpush.bf16.msra.mxu0 %v2302
        %2318 = vmatpush.bf16.msra.mxu0 %v2301
        %2319 = vmatpush.bf16.msra.mxu0 %v2300
        %2320 = vmatpush.bf16.msra.mxu0 %v2299
        %2321 = vmatpush.bf16.msra.mxu0 %v2298
        %2322 = vmatmul.bf16.gmra.mxu0 %v2245
        %v2323 = vpop.f32.mrf.mxu0
        %v2324 = vadd.f32 %v2264, %v2323
        %v2325 = vpop.f32.mrf.mxu0
        %2326 = vdwg.mxu0
        %v2327 = vrot.slane %v2324, 4
        %v2328 = vadd.f32 %v2324, %v2327
        %v2329 = vrot.slane %v2328, 2
        %v2330 = vadd.f32 %v2328, %v2329
        %v2331 = vrot.slane %v2330, 1
        %v2332 = vadd.f32 %v2330, %v2331
        %v2333 = vmul.f32 %v2324, %v2324
        %v2334 = vrot.slane %v2333, 4
        %v2335 = vadd.f32 %v2333, %v2334
        %v2336 = vrot.slane %v2335, 2
        %v2337 = vadd.f32 %v2335, %v2336
        %v2338 = vrot.slane %v2337, 1
        %v2339 = vadd.f32 %v2337, %v2338
        %v2340 = vmul.f32 %v2332, 0.125
        %v2341 = vmul.f32 %v2339, 0.125
        %v2342 = vmul.f32 %v2340, %v2340
        %v2343 = vsub.f32 %v2341, %v2342
        %v2344 = vld [vmem:[%s49] sm:$0x1]
        %v2345 = vadd.f32 %v2343, 1e-05
        %v2346 = vrsqrt.pop %v2345
        %v2347 = vmul.f32 %v2346, %v2345
        %v2348 = vmul.f32 %v2347, %v2346
        %v2349 = vmul.f32 0.5, %v2348
        %v2350 = vsub.f32 1.5, %v2349
        %v2351 = vmul.f32 %v2346, %v2350
        %vm2352 = vweird.f32 %v2345
        %vm2353 = vweird.f32 %v2346
        %vm2354 = vmor %vm2352, %vm2353
        %v2355 = vsel %vm2354, %v2346, %v2351
        %v2356 = vmul.f32 %v2344, %v2355
        %v2357 = vld [vmem:[%s51] sm:$0x1]
        %v2358 = vmul.f32 %v2340, %v2356
        %v2359 = vsub.f32 %v2357, %v2358
        %v2361 = vperm.slane %v2356, 0
        %v2363 = vmul.f32 %v2324, %v2361
        %v2365 = vperm.slane %v2359, 0
        %v2367 = vadd.f32 %v2363, %v2365
        %v2368 = vmax.f32 %v2367, 0.0
        %v2369 = vpack.c.bf16 %v2368, %v2368
        %v2370 = vld [vmem:[%s53] sm:$0xf]
        %v2371 = vld [vmem:[%s53 + $0x4] sm:$0xf]
        %v2372 = vld [vmem:[%s53 + $0x8] sm:$0xf]
        %v2373 = vld [vmem:[%s53 + $0xc] sm:$0xf]
        %v2374 = vld [vmem:[%s53 + $0x10] sm:$0xf]
        %v2375 = vld [vmem:[%s53 + $0x14] sm:$0xf]
        %v2376 = vld [vmem:[%s53 + $0x18] sm:$0xf]
        %v2377 = vld [vmem:[%s53 + $0x1c] sm:$0xf]
        %v2378 = vld [vmem:[%s53 + $0x20] sm:$0xf]
        %v2379 = vld [vmem:[%s53 + $0x24] sm:$0xf]
        %v2380 = vld [vmem:[%s53 + $0x28] sm:$0xf]
        %v2381 = vld [vmem:[%s53 + $0x2c] sm:$0xf]
        %v2382 = vld [vmem:[%s53 + $0x30] sm:$0xf]
        %v2383 = vld [vmem:[%s53 + $0x34] sm:$0xf]
        %v2384 = vld [vmem:[%s53 + $0x38] sm:$0xf]
        %v2385 = vld [vmem:[%s53 + $0x3c] sm:$0xf]
        %v2386 = vld [vmem:[%s55] sm:$0x1]
        %v2388 = vperm.slane %v2386, 0
        %v2406 = vunpack.c.l.b16 %v2370
        %v2407 = vunpack.c.l.b16 %v2371
        %v2408 = vunpack.c.l.b16 %v2372
        %v2409 = vunpack.c.l.b16 %v2373
        %v2410 = vunpack.c.l.b16 %v2374
        %v2411 = vunpack.c.l.b16 %v2375
        %v2412 = vunpack.c.l.b16 %v2376
        %v2413 = vunpack.c.l.b16 %v2377
        %v2414 = vunpack.c.l.b16 %v2378
        %v2415 = vunpack.c.l.b16 %v2379
        %v2416 = vunpack.c.l.b16 %v2380
        %v2417 = vunpack.c.l.b16 %v2381
        %v2418 = vunpack.c.l.b16 %v2382
        %v2419 = vunpack.c.l.b16 %v2383
        %v2420 = vunpack.c.l.b16 %v2384
        %v2421 = vunpack.c.l.b16 %v2385
        %v2422 = vpack.c.b16 %v2407, %v2406
        %v2423 = vpack.c.b16 %v2409, %v2408
        %v2424 = vpack.c.b16 %v2411, %v2410
        %v2425 = vpack.c.b16 %v2413, %v2412
        %v2426 = vpack.c.b16 %v2415, %v2414
        %v2427 = vpack.c.b16 %v2417, %v2416
        %v2428 = vpack.c.b16 %v2419, %v2418
        %v2429 = vpack.c.b16 %v2421, %v2420
        %2438 = vmatpush.bf16.msra.mxu0 %v2429
        %2439 = vmatpush.bf16.msra.mxu0 %v2428
        %2440 = vmatpush.bf16.msra.mxu0 %v2427
        %2441 = vmatpush.bf16.msra.mxu0 %v2426
        %2442 = vmatpush.bf16.msra.mxu0 %v2425
        %2443 = vmatpush.bf16.msra.mxu0 %v2424
        %2444 = vmatpush.bf16.msra.mxu0 %v2423
        %2445 = vmatpush.bf16.msra.mxu0 %v2422
        %2446 = vmatmul.bf16.gmra.mxu0 %v2369
        %v2447 = vpop.f32.mrf.mxu0
        %v2448 = vadd.f32 %v2388, %v2447
        %v2449 = vpop.f32.mrf.mxu0
        %2450 = vdwg.mxu0
        %v2451 = vrot.slane %v2448, 4
        %v2452 = vadd.f32 %v2448, %v2451
        %v2453 = vrot.slane %v2452, 2
        %v2454 = vadd.f32 %v2452, %v2453
        %v2455 = vrot.slane %v2454, 1
        %v2456 = vadd.f32 %v2454, %v2455
        %v2457 = vmul.f32 %v2448, %v2448
        %v2458 = vrot.slane %v2457, 4
        %v2459 = vadd.f32 %v2457, %v2458
        %v2460 = vrot.slane %v2459, 2
        %v2461 = vadd.f32 %v2459, %v2460
        %v2462 = vrot.slane %v2461, 1
        %v2463 = vadd.f32 %v2461, %v2462
        %v2464 = vmul.f32 %v2456, 0.125
        %v2465 = vmul.f32 %v2463, 0.125
        %v2466 = vmul.f32 %v2464, %v2464
        %v2467 = vsub.f32 %v2465, %v2466
        %v2468 = vld [vmem:[%s57] sm:$0x1]
        %v2469 = vadd.f32 %v2467, 1e-05
        %v2470 = vrsqrt.pop %v2469
        %v2471 = vmul.f32 %v2470, %v2469
        %v2472 = vmul.f32 %v2471, %v2470
        %v2473 = vmul.f32 0.5, %v2472
        %v2474 = vsub.f32 1.5, %v2473
        %v2475 = vmul.f32 %v2470, %v2474
        %vm2476 = vweird.f32 %v2469
        %vm2477 = vweird.f32 %v2470
        %vm2478 = vmor %vm2476, %vm2477
        %v2479 = vsel %vm2478, %v2470, %v2475
        %v2480 = vmul.f32 %v2468, %v2479
        %v2481 = vld [vmem:[%s59] sm:$0x1]
        %v2482 = vmul.f32 %v2464, %v2480
        %v2483 = vsub.f32 %v2481, %v2482
        %v2485 = vperm.slane %v2480, 0
        %v2487 = vmul.f32 %v2448, %v2485
        %v2489 = vperm.slane %v2483, 0
        %v2491 = vadd.f32 %v2487, %v2489
        %v2492 = vmax.f32 %v2491, 0.0
        %v2493 = vpack.c.bf16 %v2492, %v2492
        %v2494 = vld [vmem:[%s61] sm:$0xf]
        %v2495 = vld [vmem:[%s61 + $0x4] sm:$0xf]
        %v2496 = vld [vmem:[%s61 + $0x8] sm:$0xf]
        %v2497 = vld [vmem:[%s61 + $0xc] sm:$0xf]
        %v2498 = vld [vmem:[%s61 + $0x10] sm:$0xf]
        %v2499 = vld [vmem:[%s61 + $0x14] sm:$0xf]
        %v2500 = vld [vmem:[%s61 + $0x18] sm:$0xf]
        %v2501 = vld [vmem:[%s61 + $0x1c] sm:$0xf]
        %v2502 = vld [vmem:[%s61 + $0x20] sm:$0xf]
        %v2503 = vld [vmem:[%s61 + $0x24] sm:$0xf]
        %v2504 = vld [vmem:[%s61 + $0x28] sm:$0xf]
        %v2505 = vld [vmem:[%s61 + $0x2c] sm:$0xf]
        %v2506 = vld [vmem:[%s61 + $0x30] sm:$0xf]
        %v2507 = vld [vmem:[%s61 + $0x34] sm:$0xf]
        %v2508 = vld [vmem:[%s61 + $0x38] sm:$0xf]
        %v2509 = vld [vmem:[%s61 + $0x3c] sm:$0xf]
        %v2510 = vld [vmem:[%s63] sm:$0x1]
        %v2512 = vperm.slane %v2510, 0
        %v2530 = vunpack.c.l.b16 %v2494
        %v2531 = vunpack.c.l.b16 %v2495
        %v2532 = vunpack.c.l.b16 %v2496
        %v2533 = vunpack.c.l.b16 %v2497
        %v2534 = vunpack.c.l.b16 %v2498
        %v2535 = vunpack.c.l.b16 %v2499
        %v2536 = vunpack.c.l.b16 %v2500
        %v2537 = vunpack.c.l.b16 %v2501
        %v2538 = vunpack.c.l.b16 %v2502
        %v2539 = vunpack.c.l.b16 %v2503
        %v2540 = vunpack.c.l.b16 %v2504
        %v2541 = vunpack.c.l.b16 %v2505
        %v2542 = vunpack.c.l.b16 %v2506
        %v2543 = vunpack.c.l.b16 %v2507
        %v2544 = vunpack.c.l.b16 %v2508
        %v2545 = vunpack.c.l.b16 %v2509
        %v2546 = vpack.c.b16 %v2531, %v2530
        %v2547 = vpack.c.b16 %v2533, %v2532
        %v2548 = vpack.c.b16 %v2535, %v2534
        %v2549 = vpack.c.b16 %v2537, %v2536
        %v2550 = vpack.c.b16 %v2539, %v2538
        %v2551 = vpack.c.b16 %v2541, %v2540
        %v2552 = vpack.c.b16 %v2543, %v2542
        %v2553 = vpack.c.b16 %v2545, %v2544
        %2562 = vmatpush.bf16.msra.mxu0 %v2553
        %2563 = vmatpush.bf16.msra.mxu0 %v2552
        %2564 = vmatpush.bf16.msra.mxu0 %v2551
        %2565 = vmatpush.bf16.msra.mxu0 %v2550
        %2566 = vmatpush.bf16.msra.mxu0 %v2549
        %2567 = vmatpush.bf16.msra.mxu0 %v2548
        %2568 = vmatpush.bf16.msra.mxu0 %v2547
        %2569 = vmatpush.bf16.msra.mxu0 %v2546
        %2570 = vmatmul.bf16.gmra.mxu0 %v2493
        %v2571 = vpop.f32.mrf.mxu0
        %v2572 = vadd.f32 %v2512, %v2571
        %v2573 = vpop.f32.mrf.mxu0
        %2574 = vdwg.mxu0
        %v2575 = vrot.slane %v2572, 4
        %v2576 = vadd.f32 %v2572, %v2575
        %v2577 = vrot.slane %v2576, 2
        %v2578 = vadd.f32 %v2576, %v2577
        %v2579 = vrot.slane %v2578, 1
        %v2580 = vadd.f32 %v2578, %v2579
        %v2581 = vmul.f32 %v2572, %v2572
        %v2582 = vrot.slane %v2581, 4
        %v2583 = vadd.f32 %v2581, %v2582
        %v2584 = vrot.slane %v2583, 2
        %v2585 = vadd.f32 %v2583, %v2584
        %v2586 = vrot.slane %v2585, 1
        %v2587 = vadd.f32 %v2585, %v2586
        %v2588 = vmul.f32 %v2580, 0.125
        %v2589 = vmul.f32 %v2587, 0.125
        %v2590 = vmul.f32 %v2588, %v2588
        %v2591 = vsub.f32 %v2589, %v2590
        %v2592 = vld [vmem:[%s65] sm:$0x1]
        %v2593 = vadd.f32 %v2591, 1e-05
        %v2594 = vrsqrt.pop %v2593
        %v2595 = vmul.f32 %v2594, %v2593
        %v2596 = vmul.f32 %v2595, %v2594
        %v2597 = vmul.f32 0.5, %v2596
        %v2598 = vsub.f32 1.5, %v2597
        %v2599 = vmul.f32 %v2594, %v2598
        %vm2600 = vweird.f32 %v2593
        %vm2601 = vweird.f32 %v2594
        %vm2602 = vmor %vm2600, %vm2601
        %v2603 = vsel %vm2602, %v2594, %v2599
        %v2604 = vmul.f32 %v2592, %v2603
        %v2605 = vld [vmem:[%s67] sm:$0x1]
        %v2606 = vmul.f32 %v2588, %v2604
        %v2607 = vsub.f32 %v2605, %v2606
        %v2609 = vperm.slane %v2604, 0
        %v2611 = vmul.f32 %v2572, %v2609
        %v2613 = vperm.slane %v2607, 0
        %v2615 = vadd.f32 %v2611, %v2613
        %v2616 = vmax.f32 %v2615, 0.0
        %v2617 = vpack.c.bf16 %v2616, %v2616
        %v2618 = vld [vmem:[%s69] sm:$0xff]
        %v2619 = vld [vmem:[%s69 + $0x8] sm:$0xff]
        %v2620 = vld [vmem:[%s69 + $0x10] sm:$0xf]
        %v2621 = vld [vmem:[%s69 + $0x14] sm:$0xff]
        %v2622 = vld [vmem:[%s69 + $0x1c] sm:$0xff]
        %v2623 = vld [vmem:[%s69 + $0x24] sm:$0xf]
        %v2624 = vld [vmem:[%s69 + $0x28] sm:$0xff]
        %v2625 = vld [vmem:[%s69 + $0x30] sm:$0xff]
        %v2626 = vld [vmem:[%s69 + $0x38] sm:$0xf]
        %v2627 = vld [vmem:[%s69 + $0x3c] sm:$0xff]
        %v2628 = vld [vmem:[%s69 + $0x44] sm:$0xff]
        %v2629 = vld [vmem:[%s69 + $0x4c] sm:$0xf]
        %v2630 = vld [vmem:[%s69 + $0x50] sm:$0xff]
        %v2631 = vld [vmem:[%s69 + $0x58] sm:$0xff]
        %v2632 = vld [vmem:[%s69 + $0x60] sm:$0xf]
        %v2633 = vld [vmem:[%s69 + $0x64] sm:$0xff]
        %v2634 = vld [vmem:[%s69 + $0x6c] sm:$0xff]
        %v2635 = vld [vmem:[%s69 + $0x74] sm:$0xf]
        %v2636 = vld [vmem:[%s69 + $0x78] sm:$0xff]
        %v2637 = vld [vmem:[%s69 + $0x80] sm:$0xff]
        %v2638 = vld [vmem:[%s69 + $0x88] sm:$0xf]
        %v2639 = vld [vmem:[%s69 + $0x8c] sm:$0xff]
        %v2640 = vld [vmem:[%s69 + $0x94] sm:$0xff]
        %v2641 = vld [vmem:[%s69 + $0x9c] sm:$0xf]
        %v2642 = vld [vmem:[%s69 + $0xa0] sm:$0xff]
        %v2643 = vld [vmem:[%s69 + $0xa8] sm:$0xff]
        %v2644 = vld [vmem:[%s69 + $0xb0] sm:$0xf]
        %v2645 = vld [vmem:[%s69 + $0xb4] sm:$0xff]
        %v2646 = vld [vmem:[%s69 + $0xbc] sm:$0xff]
        %v2647 = vld [vmem:[%s69 + $0xc4] sm:$0xf]
        %v2648 = vld [vmem:[%s69 + $0xc8] sm:$0xff]
        %v2649 = vld [vmem:[%s69 + $0xd0] sm:$0xff]
        %v2650 = vld [vmem:[%s69 + $0xd8] sm:$0xf]
        %v2651 = vld [vmem:[%s69 + $0xdc] sm:$0xff]
        %v2652 = vld [vmem:[%s69 + $0xe4] sm:$0xff]
        %v2653 = vld [vmem:[%s69 + $0xec] sm:$0xf]
        %v2654 = vld [vmem:[%s69 + $0xf0] sm:$0xff]
        %v2655 = vld [vmem:[%s69 + $0xf8] sm:$0xff]
        %v2656 = vld [vmem:[%s69 + $0x100] sm:$0xf]
        %v2657 = vld [vmem:[%s69 + $0x104] sm:$0xff]
        %v2658 = vld [vmem:[%s69 + $0x10c] sm:$0xff]
        %v2659 = vld [vmem:[%s69 + $0x114] sm:$0xf]
        %v2660 = vld [vmem:[%s69 + $0x118] sm:$0xff]
        %v2661 = vld [vmem:[%s69 + $0x120] sm:$0xff]
        %v2662 = vld [vmem:[%s69 + $0x128] sm:$0xf]
        %v2663 = vld [vmem:[%s69 + $0x12c] sm:$0xff]
        %v2664 = vld [vmem:[%s69 + $0x134] sm:$0xff]
        %v2665 = vld [vmem:[%s69 + $0x13c] sm:$0xf]
        %v2666 = vld [vmem:[%s71] sm:$0x1f]
        %v2668 = vperm.slane %v2666, 0
        %v2669 = vperm.slane %v2666, 1
        %v2670 = vperm.slane %v2666, 2
        %v2671 = vperm.slane %v2666, 3
        %v2672 = vperm.slane %v2666, 4
        %v2726 = vunpack.c.l.b16 %v2618
        %v2727 = vunpack.c.h.b16 %v2618
        %v2728 = vunpack.c.l.b16 %v2619
        %v2729 = vunpack.c.h.b16 %v2619
        %v2730 = vunpack.c.l.b16 %v2620
        %v2731 = vunpack.c.l.b16 %v2621
        %v2732 = vunpack.c.h.b16 %v2621
        %v2733 = vunpack.c.l.b16 %v2622
        %v2734 = vunpack.c.h.b16 %v2622
        %v2735 = vunpack.c.l.b16 %v2623
        %v2736 = vunpack.c.l.b16 %v2624
        %v2737 = vunpack.c.h.b16 %v2624
        %v2738 = vunpack.c.l.b16 %v2625
        %v2739 = vunpack.c.h.b16 %v2625
        %v2740 = vunpack.c.l.b16 %v2626
        %v2741 = vunpack.c.l.b16 %v2627
        %v2742 = vunpack.c.h.b16 %v2627
        %v2743 = vunpack.c.l.b16 %v2628
        %v2744 = vunpack.c.h.b16 %v2628
        %v2745 = vunpack.c.l.b16 %v2629
        %v2746 = vunpack.c.l.b16 %v2630
        %v2747 = vunpack.c.h.b16 %v2630
        %v2748 = vunpack.c.l.b16 %v2631
        %v2749 = vunpack.c.h.b16 %v2631
        %v2750 = vunpack.c.l.b16 %v2632
        %v2751 = vunpack.c.l.b16 %v2633
        %v2752 = vunpack.c.h.b16 %v2633
        %v2753 = vunpack.c.l.b16 %v2634
        %v2754 = vunpack.c.h.b16 %v2634
        %v2755 = vunpack.c.l.b16 %v2635
        %v2756 = vunpack.c.l.b16 %v2636
        %v2757 = vunpack.c.h.b16 %v2636
        %v2758 = vunpack.c.l.b16 %v2637
        %v2759 = vunpack.c.h.b16 %v2637
        %v2760 = vunpack.c.l.b16 %v2638
        %v2761 = vunpack.c.l.b16 %v2639
        %v2762 = vunpack.c.h.b16 %v2639
        %v2763 = vunpack.c.l.b16 %v2640
        %v2764 = vunpack.c.h.b16 %v2640
        %v2765 = vunpack.c.l.b16 %v2641
        %v2766 = vunpack.c.l.b16 %v2642
        %v2767 = vunpack.c.h.b16 %v2642
        %v2768 = vunpack.c.l.b16 %v2643
        %v2769 = vunpack.c.h.b16 %v2643
        %v2770 = vunpack.c.l.b16 %v2644
        %v2771 = vunpack.c.l.b16 %v2645
        %v2772 = vunpack.c.h.b16 %v2645
        %v2773 = vunpack.c.l.b16 %v2646
        %v2774 = vunpack.c.h.b16 %v2646
        %v2775 = vunpack.c.l.b16 %v2647
        %v2776 = vunpack.c.l.b16 %v2648
        %v2777 = vunpack.c.h.b16 %v2648
        %v2778 = vunpack.c.l.b16 %v2649
        %v2779 = vunpack.c.h.b16 %v2649
        %v2780 = vunpack.c.l.b16 %v2650
        %v2781 = vunpack.c.l.b16 %v2651
        %v2782 = vunpack.c.h.b16 %v2651
        %v2783 = vunpack.c.l.b16 %v2652
        %v2784 = vunpack.c.h.b16 %v2652
        %v2785 = vunpack.c.l.b16 %v2653
        %v2786 = vunpack.c.l.b16 %v2654
        %v2787 = vunpack.c.h.b16 %v2654
        %v2788 = vunpack.c.l.b16 %v2655
        %v2789 = vunpack.c.h.b16 %v2655
        %v2790 = vunpack.c.l.b16 %v2656
        %v2791 = vunpack.c.l.b16 %v2657
        %v2792 = vunpack.c.h.b16 %v2657
        %v2793 = vunpack.c.l.b16 %v2658
        %v2794 = vunpack.c.h.b16 %v2658
        %v2795 = vunpack.c.l.b16 %v2659
        %v2796 = vunpack.c.l.b16 %v2660
        %v2797 = vunpack.c.h.b16 %v2660
        %v2798 = vunpack.c.l.b16 %v2661
        %v2799 = vunpack.c.h.b16 %v2661
        %v2800 = vunpack.c.l.b16 %v2662
        %v2801 = vunpack.c.l.b16 %v2663
        %v2802 = vunpack.c.h.b16 %v2663
        %v2803 = vunpack.c.l.b16 %v2664
        %v2804 = vunpack.c.h.b16 %v2664
        %v2805 = vunpack.c.l.b16 %v2665
        %v2806 = vpack.c.b16 %v2731, %v2726
        %v2807 = vpack.c.b16 %v2732, %v2727
        %v2808 = vpack.c.b16 %v2733, %v2728
        %v2809 = vpack.c.b16 %v2734, %v2729
        %v2810 = vpack.c.b16 %v2735, %v2730
        %v2811 = vpack.c.b16 %v2741, %v2736
        %v2812 = vpack.c.b16 %v2742, %v2737
        %v2813 = vpack.c.b16 %v2743, %v2738
        %v2814 = vpack.c.b16 %v2744, %v2739
        %v2815 = vpack.c.b16 %v2745, %v2740
        %v2816 = vpack.c.b16 %v2751, %v2746
        %v2817 = vpack.c.b16 %v2752, %v2747
        %v2818 = vpack.c.b16 %v2753, %v2748
        %v2819 = vpack.c.b16 %v2754, %v2749
        %v2820 = vpack.c.b16 %v2755, %v2750
        %v2821 = vpack.c.b16 %v2761, %v2756
        %v2822 = vpack.c.b16 %v2762, %v2757
        %v2823 = vpack.c.b16 %v2763, %v2758
        %v2824 = vpack.c.b16 %v2764, %v2759
        %v2825 = vpack.c.b16 %v2765, %v2760
        %v2826 = vpack.c.b16 %v2771, %v2766
        %v2827 = vpack.c.b16 %v2772, %v2767
        %v2828 = vpack.c.b16 %v2773, %v2768
        %v2829 = vpack.c.b16 %v2774, %v2769
        %v2830 = vpack.c.b16 %v2775, %v2770
        %v2831 = vpack.c.b16 %v2781, %v2776
        %v2832 = vpack.c.b16 %v2782, %v2777
        %v2833 = vpack.c.b16 %v2783, %v2778
        %v2834 = vpack.c.b16 %v2784, %v2779
        %v2835 = vpack.c.b16 %v2785, %v2780
        %v2836 = vpack.c.b16 %v2791, %v2786
        %v2837 = vpack.c.b16 %v2792, %v2787
        %v2838 = vpack.c.b16 %v2793, %v2788
        %v2839 = vpack.c.b16 %v2794, %v2789
        %v2840 = vpack.c.b16 %v2795, %v2790
        %v2841 = vpack.c.b16 %v2801, %v2796
        %v2842 = vpack.c.b16 %v2802, %v2797
        %v2843 = vpack.c.b16 %v2803, %v2798
        %v2844 = vpack.c.b16 %v2804, %v2799
        %v2845 = vpack.c.b16 %v2805, %v2800
        %2886 = vmatpush.bf16.msra.mxu0 %v2841
        %2887 = vmatpush.bf16.msra.mxu0 %v2836
        %2888 = vmatpush.bf16.msra.mxu0 %v2831
        %2889 = vmatpush.bf16.msra.mxu0 %v2826
        %2890 = vmatpush.bf16.msra.mxu0 %v2821
        %2891 = vmatpush.bf16.msra.mxu0 %v2816
        %2892 = vmatpush.bf16.msra.mxu0 %v2811
        %2893 = vmatpush.bf16.msra.mxu0 %v2806
        %2894 = vmatmul.bf16.gmra.mxu0 %v2617
        %v2895 = vpop.f32.mrf.mxu0
        %v2896 = vadd.f32 %v2668, %v2895
        %v2897 = vpop.f32.mrf.mxu0
        %2898 = vdwg.mxu0
        %2899 = vmatpush.bf16.msra.mxu0 %v2842
        %2900 = vmatpush.bf16.msra.mxu0 %v2837
        %2901 = vmatpush.bf16.msra.mxu0 %v2832
        %2902 = vmatpush.bf16.msra.mxu0 %v2827
        %2903 = vmatpush.bf16.msra.mxu0 %v2822
        %2904 = vmatpush.bf16.msra.mxu0 %v2817
        %2905 = vmatpush.bf16.msra.mxu0 %v2812
        %2906 = vmatpush.bf16.msra.mxu0 %v2807
        %2907 = vmatmul.bf16.gmra.mxu0 %v2617
        %v2908 = vpop.f32.mrf.mxu0
        %v2909 = vadd.f32 %v2669, %v2908
        %v2910 = vpop.f32.mrf.mxu0
        %2911 = vdwg.mxu0
        %2912 = vmatpush.bf16.msra.mxu0 %v2843
        %2913 = vmatpush.bf16.msra.mxu0 %v2838
        %2914 = vmatpush.bf16.msra.mxu0 %v2833
        %2915 = vmatpush.bf16.msra.mxu0 %v2828
        %2916 = vmatpush.bf16.msra.mxu0 %v2823
        %2917 = vmatpush.bf16.msra.mxu0 %v2818
        %2918 = vmatpush.bf16.msra.mxu0 %v2813
        %2919 = vmatpush.bf16.msra.mxu0 %v2808
        %2920 = vmatmul.bf16.gmra.mxu0 %v2617
        %v2921 = vpop.f32.mrf.mxu0
        %v2922 = vadd.f32 %v2670, %v2921
        %v2923 = vpop.f32.mrf.mxu0
        %2924 = vdwg.mxu0
        %2925 = vmatpush.bf16.msra.mxu0 %v2844
        %2926 = vmatpush.bf16.msra.mxu0 %v2839
        %2927 = vmatpush.bf16.msra.mxu0 %v2834
        %2928 = vmatpush.bf16.msra.mxu0 %v2829
        %2929 = vmatpush.bf16.msra.mxu0 %v2824
        %2930 = vmatpush.bf16.msra.mxu0 %v2819
        %2931 = vmatpush.bf16.msra.mxu0 %v2814
        %2932 = vmatpush.bf16.msra.mxu0 %v2809
        %2933 = vmatmul.bf16.gmra.mxu0 %v2617
        %v2934 = vpop.f32.mrf.mxu0
        %v2935 = vadd.f32 %v2671, %v2934
        %v2936 = vpop.f32.mrf.mxu0
        %2937 = vdwg.mxu0
        %2938 = vmatpush.bf16.msra.mxu0 %v2845
        %2939 = vmatpush.bf16.msra.mxu0 %v2840
        %2940 = vmatpush.bf16.msra.mxu0 %v2835
        %2941 = vmatpush.bf16.msra.mxu0 %v2830
        %2942 = vmatpush.bf16.msra.mxu0 %v2825
        %2943 = vmatpush.bf16.msra.mxu0 %v2820
        %2944 = vmatpush.bf16.msra.mxu0 %v2815
        %2945 = vmatpush.bf16.msra.mxu0 %v2810
        %2946 = vmatmul.bf16.gmra.mxu0 %v2617
        %v2947 = vpop.f32.mrf.mxu0
        %v2948 = vadd.f32 %v2672, %v2947
        %v2949 = vpop.f32.mrf.mxu0
        %2950 = vdwg.mxu0
        %v2951 = vsub.f32 %v2896, %v1191
        %v2952 = vsub.f32 %v2909, %v1192
        %v2953 = vsub.f32 %v2922, %v1193
        %v2954 = vsub.f32 %v2935, %v1194
        %v2955 = vsub.f32 %v2948, %v1195
        %v2956 = vmul.f32 %v2951, %v2951
        %v2957 = vmul.f32 %v2952, %v2952
        %v2958 = vmul.f32 %v2953, %v2953
        %v2959 = vmul.f32 %v2954, %v2954
        %v2960 = vmul.f32 %v2955, %v2955
        %v2961 = vadd.f32 %v2956, %v2957
        %v2962 = vadd.f32 %v2961, %v2958
        %v2963 = vadd.f32 %v2962, %v2959
        %v2964 = vadd.f32 %v2963, %v2960
        %2965 = vadd.xlane.f32.xlu0 %v2964
        %v2966 = vpop.xlane.xlu0 %2965
        %v2967 = vrot.slane %v2966, 4
        %v2968 = vadd.f32 %v2966, %v2967
        %v2969 = vrot.slane %v2968, 2
        %v2970 = vadd.f32 %v2968, %v2969
        %v2971 = vrot.slane %v2970, 1
        %v2972 = vadd.f32 %v2970, %v2971
        %s2973 = vtos %v2972
        %v2974 = vrcp.pop 5120.0
        %v2975 = vmul.f32 5120.0, %v2974
        %v2976 = vsub.f32 1.0, %v2975
        %v2977 = vmul.f32 %v2974, %v2976
        %v2978 = vadd.f32 %v2974, %v2977
        %vm2979 = vweird.f32 %v2974
        %v2980 = vsel %vm2979, %v2974, %v2978
        %s2981 = vtos %v2980
        %s2982 = smul.f32 %s2973, %s2981
        %s2983 = ssub.f32 %s2982, %s2154
        %2984 = vst [vmem:[%s1177] sm:$0xff] %v2896
        %2985 = vst [vmem:[%s1177 + $0x8] sm:$0xff] %v2909
        %2986 = vst [vmem:[%s1177 + $0x10] sm:$0xff] %v2922
        %2987 = vst [vmem:[%s1177 + $0x18] sm:$0xff] %v2935
        %2988 = vst [vmem:[%s1177 + $0x20] sm:$0xff] %v2948
        %2989 = vst [vmem:[%s1170] sm:$0xff] %v2161
        %v2990 = vlaneseq
        %v2991 = vshrl.u32 %v2990, 7
        %vm2992 = vcmp.eq.s32.totalorder %v2991, 0
        %vm2993 = vcmp.eq.s32.totalorder %v2135, 0
        %vm2994 = vmand %vm2992, %vm2993
        %vm2995 = vcmp.eq.s32.totalorder %v2135, 1
        %vm2996 = vmand %vm2992, %vm2995
        %vm2997 = vcmp.eq.s32.totalorder %v2135, 2
        %vm2998 = vmand %vm2992, %vm2997
        %v2999 = vstv %s2982
        %v3000 = vsel %vm2998, %v2999, 0.0
        %v3001 = vstv %s2154
        %v3002 = vsel %vm2996, %v3001, %v3000
        %v3003 = vstv %s2983
        %v3004 = vsel %vm2994, %v3003, %v3002
        %3005 = vst [vmem:[%s1190] sm:$0xff] %v3004
        %p3006 = scmp.lt.s32.totalorder %s95, 3
        %s3007 = scalar_select %p3006, %s95, 3
        %s3008 = smul.addr %s3007, 8
        %s3009 = scalar_lea.vmem %s73, %s3008
        %s3010 = sand.u32 %s895, 1
        %s3011 = scalar_lea.sflag [#allocation3], %s3010
        %s3012 = sand.u32 %s895, 1
        %s3013 = smul.addr %s3012, 8
        %s3014 = scalar_lea.vmem [#allocation2], %s3013
        %s3015 = sand.u32 %s921, 1
        %s3016 = scalar_lea.sflag [#allocation5], %s3015
        %s3017 = sand.u32 %s921, 1
        %s3018 = smul.addr %s3017, 40
        %s3019 = scalar_lea.vmem [#allocation4], %s3018
        // Predicated region
        $region165: #{vae_forward.1} parent=163 // pred_check
          %p3020 = pneg %p879
        $region166: #{vae_forward.1} parent=163 // pred_check_branch
          %3022 = sbr.rel (%p3020) target = $region168
        $region167: #{vae_forward.1} parent=163 // pred_region
          _
        $region168: #{vae_forward.1} parent=163 // pred_fallthru
          _
        // Predicated region
        $region169: #{vae_forward.1} parent=163 // pred_check
          %p3023 = pneg %p905
        $region170: #{vae_forward.1} parent=163 // pred_check_branch
          %3025 = sbr.rel (%p3023) target = $region172
        $region171: #{vae_forward.1} parent=163 // pred_region
          %3027 = vsyncadd %s3011, 0
          %s3028 = smul.addr %s95, 8
          %s3029 = scalar_lea.hbm %s75, %s3028
          %s3031 = sshll.u32 %s3014, 4
          %s3032 = int_to_ptr.vmem [resolvable:$true] %s3031
          %s3033 = sshll.u32 %s3029, 4
          %s3034 = int_to_ptr.hbm [resolvable:$true] %s3033
          %3036 = dma.vmem_to_hbm [thread:$0]  %s3032, 128, %s3034, %s3011
        $region172: #{vae_forward.1} parent=163 // pred_fallthru
          _
        // Predicated region
        $region173: #{vae_forward.1} parent=163 // pred_check
          %p3037 = pneg %p931
        $region174: #{vae_forward.1} parent=163 // pred_check_branch
          %3039 = sbr.rel (%p3037) target = $region176
        $region175: #{vae_forward.1} parent=163 // pred_region
          %3041 = vsyncadd %s3016, 0
          %s3042 = smul.addr %s95, 5
          %s3043 = smul.addr %s3042, 8
          %s3044 = scalar_lea.hbm %s77, %s3043
          %s3046 = sshll.u32 %s3019, 4
          %s3047 = int_to_ptr.vmem [resolvable:$true] %s3046
          %s3048 = sshll.u32 %s3044, 4
          %s3049 = int_to_ptr.hbm [resolvable:$true] %s3048
          %3051 = dma.vmem_to_hbm [thread:$0]  %s3047, 640, %s3049, %s3016
        $region176: #{vae_forward.1} parent=163 // pred_fallthru
          _
      $region164: #{vae_forward.1} parent=5 // pred_fallthru
        _
      %p3052 = scmp.le.s32.totalorder 2, %s90
      // Predicated region
      $region177: #{vae_forward.1} parent=5 // pred_check
        %p3053 = pneg %p3052
      $region178: #{vae_forward.1} parent=5 // pred_check_branch
        %3055 = sbr.rel (%p3053) target = $region180
      $region179: #{vae_forward.1} parent=5 // pred_region
        %s3056 = ssub.s32 %s90, 2
        // Predicated region
        $region181: #{vae_forward.1} parent=179 // pred_check
          %p3057 = pneg %p885
        $region182: #{vae_forward.1} parent=179 // pred_check_branch
          %3059 = sbr.rel (%p3057) target = $region184
        $region183: #{vae_forward.1} parent=179 // pred_region
          %p3060 = scmp.lt.s32.totalorder %s96, 3
          %s3061 = scalar_select %p3060, %s96, 3
          %s3062 = smul.addr %s3061, 8
          %s3063 = scalar_lea.vmem %s73, %s3062
        $region184: #{vae_forward.1} parent=179 // pred_fallthru
          _
        // Predicated region
        $region185: #{vae_forward.1} parent=179 // pred_check
          %p3064 = pneg %p911
        $region186: #{vae_forward.1} parent=179 // pred_check_branch
          %3066 = sbr.rel (%p3064) target = $region188
        $region187: #{vae_forward.1} parent=179 // pred_region
          %s3067 = sand.u32 %s896, 1
          %s3068 = scalar_lea.sflag [#allocation3], %s3067
          %s3069 = sand.u32 %s896, 1
          %s3070 = smul.addr %s3069, 8
          %s3071 = scalar_lea.vmem [#allocation2], %s3070
          %3073 = dma.done %s3068, 128
        $region188: #{vae_forward.1} parent=179 // pred_fallthru
          _
        // Predicated region
        $region189: #{vae_forward.1} parent=179 // pred_check
          %p3074 = pneg %p937
        $region190: #{vae_forward.1} parent=179 // pred_check_branch
          %3076 = sbr.rel (%p3074) target = $region192
        $region191: #{vae_forward.1} parent=179 // pred_region
          %s3077 = sand.u32 %s922, 1
          %s3078 = scalar_lea.sflag [#allocation5], %s3077
          %s3079 = sand.u32 %s922, 1
          %s3080 = smul.addr %s3079, 40
          %s3081 = scalar_lea.vmem [#allocation4], %s3080
          %3083 = dma.done %s3078, 640
        $region192: #{vae_forward.1} parent=179 // pred_fallthru
          _
      $region180: #{vae_forward.1} parent=5 // pred_fallthru
        _
    $region6: #{vae_forward.1} parent=1 // loop_footer
      %s94 = sadd.s32 1, %s90
    $region7: #{vae_forward.1} parent=1 // loop_footer_branch
      %89 = sbr.rel target = $region3
    $region8: #{vae_forward.1} parent=1 // loop_exit
      _
    %3084 = vsyncpa [#allocation3], 1
    %s3085 = scalar_lea.sflag [#allocation3], 1
    %3086 = vsyncpa %s3085, 1
    %3087 = vsyncpa [#allocation5], 1
    %s3088 = scalar_lea.sflag [#allocation5], 1
    %3089 = vsyncpa %s3088, 1

</llo_original>
